<compile_context>
chip_gen: v7x
topology: tpu7x:2x2x1
jax: 0.10.0
libtpu: 0.0.40
codegen_flags: <defaults>
</compile_context>

<pallas_src>
import jax
import jax.numpy as jnp
from jax.experimental import pallas as pl
from jax.experimental.pallas import tpu as pltpu

LAYER_DIMS = [61, 128, 32, 16, 4, 1]


def mlp_kernel(x_ref,
               w1_ref, b1_ref,
               w2_ref, b2_ref,
               w3t_ref, b3t_ref,
               w4t_ref, b4t_ref,
               w5t_ref, b5t_ref,
               o_ref):
    """Fused 5-layer MLP forward for one (tb, 61) batch tile.

    Layers 1-2 run with batch along sublanes (MXU well filled, N=128/32).
    Layers 3-5 run in transposed orientation (batch along lanes) so the tiny
    output dims, not ceil(tb/8), set the MXU push count, and the final result
    is naturally a lane-dense (1, tb) row.
    Matmul operands are bf16; accumulation, bias-add and ReLU are f32.
    """
    # In-kernel cast: VPU has slack, and it avoids a separate wrapper-side
    # convert pass over x in HBM.
    x = x_ref[...].astype(jnp.bfloat16)

    # ---- layers 1-2: normal orientation -------------------------------------
    h = jnp.dot(x, w1_ref[...], preferred_element_type=jnp.float32) + b1_ref[...]
    h = jnp.maximum(h, 0.0)                                   # (tb, 128) f32
    h = jnp.dot(h.astype(jnp.bfloat16), w2_ref[...],
                preferred_element_type=jnp.float32) + b2_ref[...]
    h = jnp.maximum(h, 0.0)                                   # (tb, 32) f32

    # ---- layers 3-5: transposed orientation (batch along lanes) -------------
    ht = h.T.astype(jnp.bfloat16)                             # (32, tb) one XLU transpose
    ht = jnp.dot(w3t_ref[...], ht,
                 preferred_element_type=jnp.float32) + b3t_ref[...]
    ht = jnp.maximum(ht, 0.0)                                 # (16, tb) f32
    ht = jnp.dot(w4t_ref[...], ht.astype(jnp.bfloat16),
                 preferred_element_type=jnp.float32) + b4t_ref[...]
    ht = jnp.maximum(ht, 0.0)                                 # (4, tb) f32
    out = jnp.dot(w5t_ref[...], ht.astype(jnp.bfloat16),
                  preferred_element_type=jnp.float32) + b5t_ref[...]  # (1, tb)

    o_ref[...] = out.astype(o_ref.dtype)


def prepare_params(params):
    """One-time conversion of (W, b) pairs into kernel-resident layouts.

    Layers 1-2: W (in, out) bf16, b (1, out) f32.
    Layers 3-5: W^T (out, in) bf16, b (out, 1) f32 (transposed orientation).
    Call once and reuse; keeps per-call convert kernels out of the hot path.
    """
    (w1, b1), (w2, b2), (w3, b3), (w4, b4), (w5, b5) = params
    return (
        w1.astype(jnp.bfloat16), b1.reshape(1, -1).astype(jnp.float32),
        w2.astype(jnp.bfloat16), b2.reshape(1, -1).astype(jnp.float32),
        w3.T.astype(jnp.bfloat16), b3.reshape(-1, 1).astype(jnp.float32),
        w4.T.astype(jnp.bfloat16), b4.reshape(-1, 1).astype(jnp.float32),
        w5.T.astype(jnp.bfloat16), b5.reshape(-1, 1).astype(jnp.float32),
    )


def mlp_forward(x, prepared, tb=2048):
    """x: (B, 61) f32; prepared: output of prepare_params(). Returns (B, 1) f32.

    Ragged batches are handled by Pallas' masked partial last block (no
    wrapper-side pad pass); for peak throughput choose B a multiple of tb.
    """
    B, d_in = x.shape
    tb = min(tb, B)                      # never use a block taller than the batch
    n_blocks = pl.cdiv(B, tb)

    in_specs = [pl.BlockSpec((tb, d_in), lambda i: (i, 0))]
    # Constant index maps -> weights/biases are DMA'd once and stay VMEM-resident.
    in_specs += [pl.BlockSpec(p.shape, lambda i: (0, 0)) for p in prepared]

    dims = LAYER_DIMS
    flops = 2 * B * sum(dims[i] * dims[i + 1] for i in range(len(dims) - 1))
    weight_bytes = sum(di * do * 2 + do * 4 for di, do in zip(dims[:-1], dims[1:]))
    bytes_accessed = B * dims[0] * 4 + B * dims[-1] * 4 + weight_bytes

    out_p = pl.pallas_call(
        mlp_kernel,
        grid=(n_blocks,),
        in_specs=in_specs,
        # Lane-dense output: one (1, tb) row block per grid step.
        out_specs=pl.BlockSpec((1, tb), lambda i: (0, i)),
        out_shape=jax.ShapeDtypeStruct((1, B), jnp.float32),
        compiler_params=pltpu.CompilerParams(
            dimension_semantics=("parallel",)),
        cost_estimate=pl.CostEstimate(
            flops=flops, transcendentals=0, bytes_accessed=bytes_accessed),
    )(x, *prepared)

    return out_p.reshape(B, 1)           # free row-major reshape


def init_params(key):
    """Deterministic init mimicking nn.Linear's U(-1/sqrt(fan_in), 1/sqrt(fan_in))."""
    params = []
    for i in range(len(LAYER_DIMS) - 1):
        fan_in, fan_out = LAYER_DIMS[i], LAYER_DIMS[i + 1]
        key, kw, kb = jax.random.split(key, 3)
        bound = 1.0 / (fan_in ** 0.5)
        w = jax.random.uniform(kw, (fan_in, fan_out), jnp.float32, -bound, bound)
        b = jax.random.uniform(kb, (1, fan_out), jnp.float32, -bound, bound)
        params.append((w, b))
    return params


def reference_forward(x, params):
    """Pure-JAX reference mirroring the kernel's bf16-operand / f32-accumulate math."""
    h = x
    n = len(params)
    for i, (w, b) in enumerate(params):
        a = h.astype(jnp.bfloat16).astype(jnp.float32)
        wf = w.astype(jnp.bfloat16).astype(jnp.float32)
        h = jnp.dot(a, wf, preferred_element_type=jnp.float32) + b
        if i < n - 1:
            h = jnp.maximum(h, 0.0)
    return h


if __name__ == "__main__":
    key = jax.random.PRNGKey(0)
    key, kx = jax.random.split(key)
    params = init_params(key)
    prepared = prepare_params(params)    # one-time cast/transpose, off the hot path

    # Case 1: batch a multiple of tb -> 2 full grid steps (megacore-splittable).
    B = 4096
    x = jax.random.normal(kx, (B, LAYER_DIMS[0]), jnp.float32)
    out = jax.block_until_ready(mlp_forward(x, prepared, tb=2048))
    ref = reference_forward(x, params)
    assert out.shape == (B, 1), out.shape
    assert jnp.allclose(out, ref, atol=1e-2, rtol=1e-2), "mismatch vs reference (full blocks)"

    # Case 2: ragged batch -> masked partial last block, no wrapper-side pad.
    B2 = 3000
    x2 = jax.random.normal(jax.random.PRNGKey(1), (B2, LAYER_DIMS[0]), jnp.float32)
    out2 = jax.block_until_ready(mlp_forward(x2, prepared, tb=2048))
    ref2 = reference_forward(x2, params)
    assert out2.shape == (B2, 1), out2.shape
    assert jnp.allclose(out2, ref2, atol=1e-2, rtol=1e-2), "mismatch vs reference (ragged)"

    print("KERNEL_OK")
</pallas_src>

<mosaic_0001>
module attributes {stable_mosaic.version = 11 : i64} {
  func.func @mlp_kernel(%arg0: i32, %arg1: memref<2048x61xf32, #tpu.memory_space<vmem>>, %arg2: memref<61x128xbf16, #tpu.memory_space<vmem>>, %arg3: memref<1x128xf32, #tpu.memory_space<vmem>>, %arg4: memref<128x32xbf16, #tpu.memory_space<vmem>>, %arg5: memref<1x32xf32, #tpu.memory_space<vmem>>, %arg6: memref<16x32xbf16, #tpu.memory_space<vmem>>, %arg7: memref<16x1xf32, #tpu.memory_space<vmem>>, %arg8: memref<4x16xbf16, #tpu.memory_space<vmem>>, %arg9: memref<4x1xf32, #tpu.memory_space<vmem>>, %arg10: memref<1x4xbf16, #tpu.memory_space<vmem>>, %arg11: memref<1x1xf32, #tpu.memory_space<vmem>>, %arg12: memref<1x2048xf32, #tpu.memory_space<vmem>>) attributes {dimension_semantics = [#tpu.dimension_semantics<parallel>], iteration_bounds = array<i64: 2>, scalar_prefetch = 0 : i64, scratch_operands = 0 : i64, tpu.core_type = #tpu.core_type<tc>, window_params = [{transform_indices = @transform_0, window_bounds = array<i64: 2048, 61>}, {pipeline_mode = #tpu.pipeline_mode<synchronous>, transform_indices = @transform_1, window_bounds = array<i64: 61, 128>}, {pipeline_mode = #tpu.pipeline_mode<synchronous>, transform_indices = @transform_2, window_bounds = array<i64: 1, 128>}, {pipeline_mode = #tpu.pipeline_mode<synchronous>, transform_indices = @transform_3, window_bounds = array<i64: 128, 32>}, {pipeline_mode = #tpu.pipeline_mode<synchronous>, transform_indices = @transform_4, window_bounds = array<i64: 1, 32>}, {pipeline_mode = #tpu.pipeline_mode<synchronous>, transform_indices = @transform_5, window_bounds = array<i64: 16, 32>}, {pipeline_mode = #tpu.pipeline_mode<synchronous>, transform_indices = @transform_6, window_bounds = array<i64: 16, 1>}, {pipeline_mode = #tpu.pipeline_mode<synchronous>, transform_indices = @transform_7, window_bounds = array<i64: 4, 16>}, {pipeline_mode = #tpu.pipeline_mode<synchronous>, transform_indices = @transform_8, window_bounds = array<i64: 4, 1>}, {pipeline_mode = #tpu.pipeline_mode<synchronous>, transform_indices = @transform_9, window_bounds = array<i64: 1, 4>}, {pipeline_mode = #tpu.pipeline_mode<synchronous>, transform_indices = @transform_10, window_bounds = array<i64: 1, 1>}, {transform_indices = @transform_11, window_bounds = array<i64: 1, 2048>}]} {
    %c0 = arith.constant 0 : index
    %c0_0 = arith.constant 0 : index
    %0 = vector.load %arg1[%c0, %c0_0] : memref<2048x61xf32, #tpu.memory_space<vmem>>, vector<2048x61xf32>
    %1 = arith.truncf %0 : vector<2048x61xf32> to vector<2048x61xbf16>
    %c0_1 = arith.constant 0 : index
    %c0_2 = arith.constant 0 : index
    %2 = vector.load %arg2[%c0_1, %c0_2] : memref<61x128xbf16, #tpu.memory_space<vmem>>, vector<61x128xbf16>
    %cst = arith.constant dense<0.000000e+00> : vector<2048x128xf32>
    %3 = tpu.matmul %1, %2, %cst {dimension_numbers = #tpu.dot_dimension_numbers<[1], [0], [0], [1], [0, 0, 1, 1], [], []>} : vector<2048x61xbf16>, vector<61x128xbf16>, vector<2048x128xf32> -> vector<2048x128xf32>
    %c0_3 = arith.constant 0 : index
    %c0_4 = arith.constant 0 : index
    %4 = vector.load %arg3[%c0_3, %c0_4] : memref<1x128xf32, #tpu.memory_space<vmem>>, vector<1x128xf32>
    %5 = vector.broadcast %4 : vector<1x128xf32> to vector<2048x128xf32>
    %6 = arith.addf %3, %5 : vector<2048x128xf32>
    %cst_5 = arith.constant 0.000000e+00 : f32
    %7 = vector.broadcast %cst_5 : f32 to vector<2048x128xf32>
    %8 = arith.maximumf %6, %7 : vector<2048x128xf32>
    %9 = arith.truncf %8 : vector<2048x128xf32> to vector<2048x128xbf16>
    %c0_6 = arith.constant 0 : index
    %c0_7 = arith.constant 0 : index
    %10 = vector.load %arg4[%c0_6, %c0_7] : memref<128x32xbf16, #tpu.memory_space<vmem>>, vector<128x32xbf16>
    %cst_8 = arith.constant dense<0.000000e+00> : vector<2048x32xf32>
    %11 = tpu.matmul %9, %10, %cst_8 {dimension_numbers = #tpu.dot_dimension_numbers<[1], [0], [0], [1], [0, 0, 1, 1], [], []>} : vector<2048x128xbf16>, vector<128x32xbf16>, vector<2048x32xf32> -> vector<2048x32xf32>
    %c0_9 = arith.constant 0 : index
    %c0_10 = arith.constant 0 : index
    %12 = vector.load %arg5[%c0_9, %c0_10] : memref<1x32xf32, #tpu.memory_space<vmem>>, vector<1x32xf32>
    %13 = vector.broadcast %12 : vector<1x32xf32> to vector<2048x32xf32>
    %14 = arith.addf %11, %13 : vector<2048x32xf32>
    %cst_11 = arith.constant 0.000000e+00 : f32
    %15 = vector.broadcast %cst_11 : f32 to vector<2048x32xf32>
    %16 = arith.maximumf %14, %15 : vector<2048x32xf32>
    %17 = tpu.transpose %16, [1, 0] : vector<2048x32xf32> -> vector<32x2048xf32>
    %18 = arith.truncf %17 : vector<32x2048xf32> to vector<32x2048xbf16>
    %c0_12 = arith.constant 0 : index
    %c0_13 = arith.constant 0 : index
    %19 = vector.load %arg6[%c0_12, %c0_13] : memref<16x32xbf16, #tpu.memory_space<vmem>>, vector<16x32xbf16>
    %cst_14 = arith.constant dense<0.000000e+00> : vector<16x2048xf32>
    %20 = tpu.matmul %19, %18, %cst_14 {dimension_numbers = #tpu.dot_dimension_numbers<[1], [0], [0], [1], [0, 0, 1, 1], [], []>} : vector<16x32xbf16>, vector<32x2048xbf16>, vector<16x2048xf32> -> vector<16x2048xf32>
    %c0_15 = arith.constant 0 : index
    %c0_16 = arith.constant 0 : index
    %21 = vector.load %arg7[%c0_15, %c0_16] : memref<16x1xf32, #tpu.memory_space<vmem>>, vector<16x1xf32>
    %22 = vector.broadcast %21 : vector<16x1xf32> to vector<16x2048xf32>
    %23 = arith.addf %20, %22 : vector<16x2048xf32>
    %cst_17 = arith.constant 0.000000e+00 : f32
    %24 = vector.broadcast %cst_17 : f32 to vector<16x2048xf32>
    %25 = arith.maximumf %23, %24 : vector<16x2048xf32>
    %c0_18 = arith.constant 0 : index
    %c0_19 = arith.constant 0 : index
    %26 = vector.load %arg8[%c0_18, %c0_19] : memref<4x16xbf16, #tpu.memory_space<vmem>>, vector<4x16xbf16>
    %27 = arith.truncf %25 : vector<16x2048xf32> to vector<16x2048xbf16>
    %cst_20 = arith.constant dense<0.000000e+00> : vector<4x2048xf32>
    %28 = tpu.matmul %26, %27, %cst_20 {dimension_numbers = #tpu.dot_dimension_numbers<[1], [0], [0], [1], [0, 0, 1, 1], [], []>} : vector<4x16xbf16>, vector<16x2048xbf16>, vector<4x2048xf32> -> vector<4x2048xf32>
    %c0_21 = arith.constant 0 : index
    %c0_22 = arith.constant 0 : index
    %29 = vector.load %arg9[%c0_21, %c0_22] : memref<4x1xf32, #tpu.memory_space<vmem>>, vector<4x1xf32>
    %30 = vector.broadcast %29 : vector<4x1xf32> to vector<4x2048xf32>
    %31 = arith.addf %28, %30 : vector<4x2048xf32>
    %cst_23 = arith.constant 0.000000e+00 : f32
    %32 = vector.broadcast %cst_23 : f32 to vector<4x2048xf32>
    %33 = arith.maximumf %31, %32 : vector<4x2048xf32>
    %c0_24 = arith.constant 0 : index
    %c0_25 = arith.constant 0 : index
    %34 = vector.load %arg10[%c0_24, %c0_25] : memref<1x4xbf16, #tpu.memory_space<vmem>>, vector<1x4xbf16>
    %35 = arith.truncf %33 : vector<4x2048xf32> to vector<4x2048xbf16>
    %cst_26 = arith.constant dense<0.000000e+00> : vector<1x2048xf32>
    %36 = tpu.matmul %34, %35, %cst_26 {dimension_numbers = #tpu.dot_dimension_numbers<[1], [0], [0], [1], [0, 0, 1, 1], [], []>} : vector<1x4xbf16>, vector<4x2048xbf16>, vector<1x2048xf32> -> vector<1x2048xf32>
    %c0_27 = arith.constant 0 : index
    %c0_28 = arith.constant 0 : index
    %37 = vector.load %arg11[%c0_27, %c0_28] : memref<1x1xf32, #tpu.memory_space<vmem>>, vector<1x1xf32>
    %38 = vector.broadcast %37 : vector<1x1xf32> to vector<1x2048xf32>
    %39 = arith.addf %36, %38 : vector<1x2048xf32>
    %c0_29 = arith.constant 0 : index
    %c0_30 = arith.constant 0 : index
    %40 = vector.load %arg12[%c0_29, %c0_30] : memref<1x2048xf32, #tpu.memory_space<vmem>>, vector<1x2048xf32>
    tpu.vector_store %arg12[%c0_29, %c0_30], %39 {strides = array<i32>} : memref<1x2048xf32, #tpu.memory_space<vmem>>, vector<1x2048xf32>,
    return
  }
  func.func @transform_0(%arg0: i32) -> (i32, i32) {
    %c0_i32 = arith.constant 0 : i32
    %c0_i32_0 = arith.constant 0 : i32
    return %arg0, %c0_i32 : i32, i32
  }
  func.func @transform_1(%arg0: i32) -> (i32, i32) {
    %c0_i32 = arith.constant 0 : i32
    %c0_i32_0 = arith.constant 0 : i32
    %c0_i32_1 = arith.constant 0 : i32
    return %c0_i32, %c0_i32_0 : i32, i32
  }
  func.func @transform_2(%arg0: i32) -> (i32, i32) {
    %c0_i32 = arith.constant 0 : i32
    %c0_i32_0 = arith.constant 0 : i32
    %c0_i32_1 = arith.constant 0 : i32
    return %c0_i32, %c0_i32_0 : i32, i32
  }
  func.func @transform_3(%arg0: i32) -> (i32, i32) {
    %c0_i32 = arith.constant 0 : i32
    %c0_i32_0 = arith.constant 0 : i32
    %c0_i32_1 = arith.constant 0 : i32
    return %c0_i32, %c0_i32_0 : i32, i32
  }
  func.func @transform_4(%arg0: i32) -> (i32, i32) {
    %c0_i32 = arith.constant 0 : i32
    %c0_i32_0 = arith.constant 0 : i32
    %c0_i32_1 = arith.constant 0 : i32
    return %c0_i32, %c0_i32_0 : i32, i32
  }
  func.func @transform_5(%arg0: i32) -> (i32, i32) {
    %c0_i32 = arith.constant 0 : i32
    %c0_i32_0 = arith.constant 0 : i32
    %c0_i32_1 = arith.constant 0 : i32
    return %c0_i32, %c0_i32_0 : i32, i32
  }
  func.func @transform_6(%arg0: i32) -> (i32, i32) {
    %c0_i32 = arith.constant 0 : i32
    %c0_i32_0 = arith.constant 0 : i32
    %c0_i32_1 = arith.constant 0 : i32
    return %c0_i32, %c0_i32_0 : i32, i32
  }
  func.func @transform_7(%arg0: i32) -> (i32, i32) {
    %c0_i32 = arith.constant 0 : i32
    %c0_i32_0 = arith.constant 0 : i32
    %c0_i32_1 = arith.constant 0 : i32
    return %c0_i32, %c0_i32_0 : i32, i32
  }
  func.func @transform_8(%arg0: i32) -> (i32, i32) {
    %c0_i32 = arith.constant 0 : i32
    %c0_i32_0 = arith.constant 0 : i32
    %c0_i32_1 = arith.constant 0 : i32
    return %c0_i32, %c0_i32_0 : i32, i32
  }
  func.func @transform_9(%arg0: i32) -> (i32, i32) {
    %c0_i32 = arith.constant 0 : i32
    %c0_i32_0 = arith.constant 0 : i32
    %c0_i32_1 = arith.constant 0 : i32
    return %c0_i32, %c0_i32_0 : i32, i32
  }
  func.func @transform_10(%arg0: i32) -> (i32, i32) {
    %c0_i32 = arith.constant 0 : i32
    %c0_i32_0 = arith.constant 0 : i32
    %c0_i32_1 = arith.constant 0 : i32
    return %c0_i32, %c0_i32_0 : i32, i32
  }
  func.func @transform_11(%arg0: i32) -> (i32, i32) {
    %c0_i32 = arith.constant 0 : i32
    %c0_i32_0 = arith.constant 0 : i32
    return %c0_i32, %arg0 : i32, i32
  }
}

</mosaic_0001>

<llo_original>
// kernel: tpu_custom_call.1
$region0: #{tpu_custom_call.1}
  #allocation0 [shape = 'u32[]', space=smem, size = 0x4, offset = 0x4, fixed_abs, tag = 'smem constant byte address 0x4 - core index']
  #allocation1 [shape = 'u32[144,128]{1,0:T(1,128)}', space=vmem, size = 0x12000, scoped, tag = 'internal scratch']
  #allocation2 [shape = 'f32[1,1]{1,0:T(1,128)S(1)}', space=vmem, size = 0x200, scoped, tag = 'scoped memory for tpu_custom_call.1']
  %s0 = inlined_call_operand.vmem [shape: f32[4096,61], index: 0, kind: input, shape index: {}]
  %s1 = inlined_call_operand.vmem [shape: bf16[61,128], index: 1, kind: input, shape index: {}]
  %s2 = inlined_call_operand.vmem [shape: f32[1,128], index: 2, kind: input, shape index: {}]
  %s3 = inlined_call_operand.vmem [shape: bf16[128,32], index: 3, kind: input, shape index: {}]
  %s4 = inlined_call_operand.vmem [shape: f32[1,32], index: 4, kind: input, shape index: {}]
  %s5 = inlined_call_operand.vmem [shape: bf16[16,32], index: 5, kind: input, shape index: {}]
  %s6 = inlined_call_operand.vmem [shape: f32[16,1], index: 6, kind: input, shape index: {}]
  %s7 = inlined_call_operand.vmem [shape: bf16[4,16], index: 7, kind: input, shape index: {}]
  %s8 = inlined_call_operand.vmem [shape: f32[4,1], index: 8, kind: input, shape index: {}]
  %s9 = inlined_call_operand.vmem [shape: bf16[1,4], index: 9, kind: input, shape index: {}]
  %s10 = inlined_call_operand.<no memory space> [shape: f32[1,1], index: 10, kind: input, shape index: {}]
  %s11 = inlined_call_operand.hbm [shape: f32[1,4096], index: 11, kind: output, shape index: {}]
  %s12 = sld [smem:[#allocation0]]
  $region77: #{tpu_custom_call.1} parent=0
    _
  %s14 = ssub.s32 1, %s12
  %s15 = scalar_select 0, %s14, %s12
  %v16 = vstv %s10
  %17 = vst [vmem:[#allocation2] sm:$0x1] %v16
  $region1: #{tpu_custom_call.1} parent=0
    #allocation3 [shape = 'u8[16384]{0}', space=vmem, size = 0x4000, scoped, tag = 'output window, operand 0']
    #allocation4 [shape = 's32[2]{0}', space=sflag, size = 0x8, scoped, tag = 'scoped memory for tpu_custom_call.1']
    %18 = vsyncpa [#allocation4], 0
    %s19 = scalar_lea.sflag [#allocation4], 1
    %20 = vsyncpa %s19, 0
    loop: start=0, step=1, limit=4
    $region2: #{tpu_custom_call.1} parent=1 // loop_pre_header
      _
    $region3: #{tpu_custom_call.1} parent=1 // loop_header
      %s22 = sphi 0, %s26
      %p23 = scmp.ge.s32.totalorder %s22, 4
      %s32 = sphi 0, %s34
      %s35 = sphi 0, %s32
      %s36 = sphi 0, %s35
      %s52 = sphi 0, %s36
      %s56 = sphi 0, %s56
      %s58 = sphi 0, %s56
      %s59 = sphi 0, %s58
      %s73 = sphi 0, %s59
      %s77 = sphi 0, %s77
      %s79 = sphi 0, %s77
      %s80 = sphi 0, %s79
      %s94 = sphi 0, %s80
      %s98 = sphi 0, %s98
      %s100 = sphi 0, %s98
      %s101 = sphi 0, %s100
      %s115 = sphi 0, %s101
      %s119 = sphi 0, %s119
      %s121 = sphi 0, %s119
      %s122 = sphi 0, %s121
      %s136 = sphi 0, %s122
      %s140 = sphi 0, %s140
      %s142 = sphi 0, %s140
      %s143 = sphi 0, %s142
      %s157 = sphi 0, %s143
      %s161 = sphi 0, %s161
      %s163 = sphi 0, %s161
      %s164 = sphi 0, %s163
      %s178 = sphi 0, %s164
      %s182 = sphi 0, %s182
      %s184 = sphi 0, %s182
      %s185 = sphi 0, %s184
      %s199 = sphi 0, %s185
      %s203 = sphi 0, %s203
      %s205 = sphi 0, %s203
      %s206 = sphi 0, %s205
      %s220 = sphi 0, %s206
      %s224 = sphi 0, %s224
      %s226 = sphi 0, %s224
      %s227 = sphi 0, %s226
      %s241 = sphi 0, %s227
      %s245 = sphi 0, %s245
      %s247 = sphi 0, %s245
      %s248 = sphi 0, %s247
      %s262 = sphi 0, %s248
      %s268 = sphi 0, %s270
      %s271 = sphi 0, %s268
      %s272 = sphi 0, %s271
      %s288 = sphi 0, %s272
    $region4: #{tpu_custom_call.1} parent=1 // loop_header_branch
      %25 = sbr.rel (%p23) target = $region8
    $region5: #{tpu_custom_call.1} parent=1 // loop_body
      %s27 = ssub.s32 %s22, 1
      %s28 = ssub.s32 %s22, 2
      %s29 = sadd.s32 %s22, 1
      %s30 = ssub.s32 %s22, %s29
      %p31 = scmp.eq.s32.totalorder %s30, 0
      %s33 = sadd.s32 %s32, 1
      %s34 = scalar_select %p31, %s32, %s33
      %p37 = pneg %p31
      %p38 = scmp.eq.s32.totalorder %s22, 1
      %p39 = por %p37, %p38
      %p40 = scmp.ne.s32.totalorder %s32, %s35
      %p41 = scmp.eq.s32.totalorder %s22, 0
      %p42 = por %p40, %p41
      %p43 = scmp.ne.s32.totalorder %s32, %s35
      %p44 = scmp.eq.s32.totalorder %s27, 1
      %p45 = por %p43, %p44
      %p46 = scmp.ne.s32.totalorder %s35, %s36
      %p47 = scmp.eq.s32.totalorder %s27, 0
      %p48 = por %p46, %p47
      %p49 = scmp.ne.s32.totalorder %s35, %s36
      %p50 = scmp.eq.s32.totalorder %s28, 1
      %p51 = por %p49, %p50
      %p53 = scmp.ne.s32.totalorder %s36, %s52
      %p54 = scmp.eq.s32.totalorder %s28, 0
      %p55 = por %p53, %p54
      %s57 = sadd.s32 %s56, 1
      %p60 = scmp.eq.s32.totalorder %s22, 1
      %p61 = scmp.ne.s32.totalorder %s56, %s58
      %p62 = scmp.eq.s32.totalorder %s22, 0
      %p63 = por %p61, %p62
      %p64 = scmp.ne.s32.totalorder %s56, %s58
      %p65 = scmp.eq.s32.totalorder %s27, 1
      %p66 = por %p64, %p65
      %p67 = scmp.ne.s32.totalorder %s58, %s59
      %p68 = scmp.eq.s32.totalorder %s27, 0
      %p69 = por %p67, %p68
      %p70 = scmp.ne.s32.totalorder %s58, %s59
      %p71 = scmp.eq.s32.totalorder %s28, 1
      %p72 = por %p70, %p71
      %p74 = scmp.ne.s32.totalorder %s59, %s73
      %p75 = scmp.eq.s32.totalorder %s28, 0
      %p76 = por %p74, %p75
      %s78 = sadd.s32 %s77, 1
      %p81 = scmp.eq.s32.totalorder %s22, 1
      %p82 = scmp.ne.s32.totalorder %s77, %s79
      %p83 = scmp.eq.s32.totalorder %s22, 0
      %p84 = por %p82, %p83
      %p85 = scmp.ne.s32.totalorder %s77, %s79
      %p86 = scmp.eq.s32.totalorder %s27, 1
      %p87 = por %p85, %p86
      %p88 = scmp.ne.s32.totalorder %s79, %s80
      %p89 = scmp.eq.s32.totalorder %s27, 0
      %p90 = por %p88, %p89
      %p91 = scmp.ne.s32.totalorder %s79, %s80
      %p92 = scmp.eq.s32.totalorder %s28, 1
      %p93 = por %p91, %p92
      %p95 = scmp.ne.s32.totalorder %s80, %s94
      %p96 = scmp.eq.s32.totalorder %s28, 0
      %p97 = por %p95, %p96
      %s99 = sadd.s32 %s98, 1
      %p102 = scmp.eq.s32.totalorder %s22, 1
      %p103 = scmp.ne.s32.totalorder %s98, %s100
      %p104 = scmp.eq.s32.totalorder %s22, 0
      %p105 = por %p103, %p104
      %p106 = scmp.ne.s32.totalorder %s98, %s100
      %p107 = scmp.eq.s32.totalorder %s27, 1
      %p108 = por %p106, %p107
      %p109 = scmp.ne.s32.totalorder %s100, %s101
      %p110 = scmp.eq.s32.totalorder %s27, 0
      %p111 = por %p109, %p110
      %p112 = scmp.ne.s32.totalorder %s100, %s101
      %p113 = scmp.eq.s32.totalorder %s28, 1
      %p114 = por %p112, %p113
      %p116 = scmp.ne.s32.totalorder %s101, %s115
      %p117 = scmp.eq.s32.totalorder %s28, 0
      %p118 = por %p116, %p117
      %s120 = sadd.s32 %s119, 1
      %p123 = scmp.eq.s32.totalorder %s22, 1
      %p124 = scmp.ne.s32.totalorder %s119, %s121
      %p125 = scmp.eq.s32.totalorder %s22, 0
      %p126 = por %p124, %p125
      %p127 = scmp.ne.s32.totalorder %s119, %s121
      %p128 = scmp.eq.s32.totalorder %s27, 1
      %p129 = por %p127, %p128
      %p130 = scmp.ne.s32.totalorder %s121, %s122
      %p131 = scmp.eq.s32.totalorder %s27, 0
      %p132 = por %p130, %p131
      %p133 = scmp.ne.s32.totalorder %s121, %s122
      %p134 = scmp.eq.s32.totalorder %s28, 1
      %p135 = por %p133, %p134
      %p137 = scmp.ne.s32.totalorder %s122, %s136
      %p138 = scmp.eq.s32.totalorder %s28, 0
      %p139 = por %p137, %p138
      %s141 = sadd.s32 %s140, 1
      %p144 = scmp.eq.s32.totalorder %s22, 1
      %p145 = scmp.ne.s32.totalorder %s140, %s142
      %p146 = scmp.eq.s32.totalorder %s22, 0
      %p147 = por %p145, %p146
      %p148 = scmp.ne.s32.totalorder %s140, %s142
      %p149 = scmp.eq.s32.totalorder %s27, 1
      %p150 = por %p148, %p149
      %p151 = scmp.ne.s32.totalorder %s142, %s143
      %p152 = scmp.eq.s32.totalorder %s27, 0
      %p153 = por %p151, %p152
      %p154 = scmp.ne.s32.totalorder %s142, %s143
      %p155 = scmp.eq.s32.totalorder %s28, 1
      %p156 = por %p154, %p155
      %p158 = scmp.ne.s32.totalorder %s143, %s157
      %p159 = scmp.eq.s32.totalorder %s28, 0
      %p160 = por %p158, %p159
      %s162 = sadd.s32 %s161, 1
      %p165 = scmp.eq.s32.totalorder %s22, 1
      %p166 = scmp.ne.s32.totalorder %s161, %s163
      %p167 = scmp.eq.s32.totalorder %s22, 0
      %p168 = por %p166, %p167
      %p169 = scmp.ne.s32.totalorder %s161, %s163
      %p170 = scmp.eq.s32.totalorder %s27, 1
      %p171 = por %p169, %p170
      %p172 = scmp.ne.s32.totalorder %s163, %s164
      %p173 = scmp.eq.s32.totalorder %s27, 0
      %p174 = por %p172, %p173
      %p175 = scmp.ne.s32.totalorder %s163, %s164
      %p176 = scmp.eq.s32.totalorder %s28, 1
      %p177 = por %p175, %p176
      %p179 = scmp.ne.s32.totalorder %s164, %s178
      %p180 = scmp.eq.s32.totalorder %s28, 0
      %p181 = por %p179, %p180
      %s183 = sadd.s32 %s182, 1
      %p186 = scmp.eq.s32.totalorder %s22, 1
      %p187 = scmp.ne.s32.totalorder %s182, %s184
      %p188 = scmp.eq.s32.totalorder %s22, 0
      %p189 = por %p187, %p188
      %p190 = scmp.ne.s32.totalorder %s182, %s184
      %p191 = scmp.eq.s32.totalorder %s27, 1
      %p192 = por %p190, %p191
      %p193 = scmp.ne.s32.totalorder %s184, %s185
      %p194 = scmp.eq.s32.totalorder %s27, 0
      %p195 = por %p193, %p194
      %p196 = scmp.ne.s32.totalorder %s184, %s185
      %p197 = scmp.eq.s32.totalorder %s28, 1
      %p198 = por %p196, %p197
      %p200 = scmp.ne.s32.totalorder %s185, %s199
      %p201 = scmp.eq.s32.totalorder %s28, 0
      %p202 = por %p200, %p201
      %s204 = sadd.s32 %s203, 1
      %p207 = scmp.eq.s32.totalorder %s22, 1
      %p208 = scmp.ne.s32.totalorder %s203, %s205
      %p209 = scmp.eq.s32.totalorder %s22, 0
      %p210 = por %p208, %p209
      %p211 = scmp.ne.s32.totalorder %s203, %s205
      %p212 = scmp.eq.s32.totalorder %s27, 1
      %p213 = por %p211, %p212
      %p214 = scmp.ne.s32.totalorder %s205, %s206
      %p215 = scmp.eq.s32.totalorder %s27, 0
      %p216 = por %p214, %p215
      %p217 = scmp.ne.s32.totalorder %s205, %s206
      %p218 = scmp.eq.s32.totalorder %s28, 1
      %p219 = por %p217, %p218
      %p221 = scmp.ne.s32.totalorder %s206, %s220
      %p222 = scmp.eq.s32.totalorder %s28, 0
      %p223 = por %p221, %p222
      %s225 = sadd.s32 %s224, 1
      %p228 = scmp.eq.s32.totalorder %s22, 1
      %p229 = scmp.ne.s32.totalorder %s224, %s226
      %p230 = scmp.eq.s32.totalorder %s22, 0
      %p231 = por %p229, %p230
      %p232 = scmp.ne.s32.totalorder %s224, %s226
      %p233 = scmp.eq.s32.totalorder %s27, 1
      %p234 = por %p232, %p233
      %p235 = scmp.ne.s32.totalorder %s226, %s227
      %p236 = scmp.eq.s32.totalorder %s27, 0
      %p237 = por %p235, %p236
      %p238 = scmp.ne.s32.totalorder %s226, %s227
      %p239 = scmp.eq.s32.totalorder %s28, 1
      %p240 = por %p238, %p239
      %p242 = scmp.ne.s32.totalorder %s227, %s241
      %p243 = scmp.eq.s32.totalorder %s28, 0
      %p244 = por %p242, %p243
      %s246 = sadd.s32 %s245, 1
      %p249 = scmp.eq.s32.totalorder %s22, 1
      %p250 = scmp.ne.s32.totalorder %s245, %s247
      %p251 = scmp.eq.s32.totalorder %s22, 0
      %p252 = por %p250, %p251
      %p253 = scmp.ne.s32.totalorder %s245, %s247
      %p254 = scmp.eq.s32.totalorder %s27, 1
      %p255 = por %p253, %p254
      %p256 = scmp.ne.s32.totalorder %s247, %s248
      %p257 = scmp.eq.s32.totalorder %s27, 0
      %p258 = por %p256, %p257
      %p259 = scmp.ne.s32.totalorder %s247, %s248
      %p260 = scmp.eq.s32.totalorder %s28, 1
      %p261 = por %p259, %p260
      %p263 = scmp.ne.s32.totalorder %s248, %s262
      %p264 = scmp.eq.s32.totalorder %s28, 0
      %p265 = por %p263, %p264
      %s266 = ssub.s32 %s22, %s29
      %p267 = scmp.eq.s32.totalorder %s266, 0
      %s269 = sadd.s32 %s268, 1
      %s270 = scalar_select %p267, %s268, %s269
      %p273 = pneg %p267
      %p274 = scmp.eq.s32.totalorder %s22, 1
      %p275 = por %p273, %p274
      %p276 = scmp.ne.s32.totalorder %s268, %s271
      %p277 = scmp.eq.s32.totalorder %s22, 0
      %p278 = por %p276, %p277
      %p279 = scmp.ne.s32.totalorder %s268, %s271
      %p280 = scmp.eq.s32.totalorder %s27, 1
      %p281 = por %p279, %p280
      %p282 = scmp.ne.s32.totalorder %s271, %s272
      %p283 = scmp.eq.s32.totalorder %s27, 0
      %p284 = por %p282, %p283
      %p285 = scmp.ne.s32.totalorder %s271, %s272
      %p286 = scmp.eq.s32.totalorder %s28, 1
      %p287 = por %p285, %p286
      %p289 = scmp.ne.s32.totalorder %s272, %s288
      %p290 = scmp.eq.s32.totalorder %s28, 0
      %p291 = por %p289, %p290
      %p292 = scmp.le.s32.totalorder 1, %s22
      %p293 = scmp.lt.s32.totalorder %s22, 3
      %p294 = pnand %p292, %p293
      %p295 = pneg %p294
      // Predicated region
      $region9: #{tpu_custom_call.1} parent=5 // pred_check
        _
      $region10: #{tpu_custom_call.1} parent=5 // pred_check_branch
        %297 = sbr.rel (%p294) target = $region12
      $region11: #{tpu_custom_call.1} parent=5 // pred_region
        %s298 = ssub.s32 %s22, 1
        // Predicated region
        $region13: #{tpu_custom_call.1} parent=11 // pred_check
          %p299 = pneg %p69
        $region14: #{tpu_custom_call.1} parent=11 // pred_check_branch
          %301 = sbr.rel (%p299) target = $region16
        $region15: #{tpu_custom_call.1} parent=11 // pred_region
          _
        $region16: #{tpu_custom_call.1} parent=11 // pred_fallthru
          _
        // Predicated region
        $region17: #{tpu_custom_call.1} parent=11 // pred_check
          %p302 = pneg %p90
        $region18: #{tpu_custom_call.1} parent=11 // pred_check_branch
          %304 = sbr.rel (%p302) target = $region20
        $region19: #{tpu_custom_call.1} parent=11 // pred_region
          _
        $region20: #{tpu_custom_call.1} parent=11 // pred_fallthru
          _
        // Predicated region
        $region21: #{tpu_custom_call.1} parent=11 // pred_check
          %p305 = pneg %p111
        $region22: #{tpu_custom_call.1} parent=11 // pred_check_branch
          %307 = sbr.rel (%p305) target = $region24
        $region23: #{tpu_custom_call.1} parent=11 // pred_region
          _
        $region24: #{tpu_custom_call.1} parent=11 // pred_fallthru
          _
        // Predicated region
        $region25: #{tpu_custom_call.1} parent=11 // pred_check
          %p308 = pneg %p132
        $region26: #{tpu_custom_call.1} parent=11 // pred_check_branch
          %310 = sbr.rel (%p308) target = $region28
        $region27: #{tpu_custom_call.1} parent=11 // pred_region
          _
        $region28: #{tpu_custom_call.1} parent=11 // pred_fallthru
          _
        // Predicated region
        $region29: #{tpu_custom_call.1} parent=11 // pred_check
          %p311 = pneg %p153
        $region30: #{tpu_custom_call.1} parent=11 // pred_check_branch
          %313 = sbr.rel (%p311) target = $region32
        $region31: #{tpu_custom_call.1} parent=11 // pred_region
          _
        $region32: #{tpu_custom_call.1} parent=11 // pred_fallthru
          _
        // Predicated region
        $region33: #{tpu_custom_call.1} parent=11 // pred_check
          %p314 = pneg %p174
        $region34: #{tpu_custom_call.1} parent=11 // pred_check_branch
          %316 = sbr.rel (%p314) target = $region36
        $region35: #{tpu_custom_call.1} parent=11 // pred_region
          _
        $region36: #{tpu_custom_call.1} parent=11 // pred_fallthru
          _
        // Predicated region
        $region37: #{tpu_custom_call.1} parent=11 // pred_check
          %p317 = pneg %p195
        $region38: #{tpu_custom_call.1} parent=11 // pred_check_branch
          %319 = sbr.rel (%p317) target = $region40
        $region39: #{tpu_custom_call.1} parent=11 // pred_region
          _
        $region40: #{tpu_custom_call.1} parent=11 // pred_fallthru
          _
        // Predicated region
        $region41: #{tpu_custom_call.1} parent=11 // pred_check
          %p320 = pneg %p216
        $region42: #{tpu_custom_call.1} parent=11 // pred_check_branch
          %322 = sbr.rel (%p320) target = $region44
        $region43: #{tpu_custom_call.1} parent=11 // pred_region
          _
        $region44: #{tpu_custom_call.1} parent=11 // pred_fallthru
          _
        // Predicated region
        $region45: #{tpu_custom_call.1} parent=11 // pred_check
          %p323 = pneg %p237
        $region46: #{tpu_custom_call.1} parent=11 // pred_check_branch
          %325 = sbr.rel (%p323) target = $region48
        $region47: #{tpu_custom_call.1} parent=11 // pred_region
          _
        $region48: #{tpu_custom_call.1} parent=11 // pred_fallthru
          _
        // Predicated region
        $region49: #{tpu_custom_call.1} parent=11 // pred_check
          %p326 = pneg %p258
        $region50: #{tpu_custom_call.1} parent=11 // pred_check_branch
          %328 = sbr.rel (%p326) target = $region52
        $region51: #{tpu_custom_call.1} parent=11 // pred_region
          _
        $region52: #{tpu_custom_call.1} parent=11 // pred_fallthru
          _
      $region12: #{tpu_custom_call.1} parent=5 // pred_fallthru
        _
      %p329 = scmp.lt.s32.totalorder %s22, 2
      // Predicated region
      $region53: #{tpu_custom_call.1} parent=5 // pred_check
        %p330 = pneg %p329
      $region54: #{tpu_custom_call.1} parent=5 // pred_check_branch
        %332 = sbr.rel (%p330) target = $region56
      $region55: #{tpu_custom_call.1} parent=5 // pred_region
        // Predicated region
        $region57: #{tpu_custom_call.1} parent=55 // pred_check
          %p333 = pneg %p42
        $region58: #{tpu_custom_call.1} parent=55 // pred_check_branch
          %335 = sbr.rel (%p333) target = $region60
        $region59: #{tpu_custom_call.1} parent=55 // pred_region
          %s336 = smul.u32 256, %s22
          %p337 = scmp.lt.s32.totalorder %s336, 511
          %s338 = scalar_select %p337, %s336, 511
          %s339 = smul.addr %s338, 8
          %s340 = scalar_lea.vmem %s0, %s339
          %s341 = smul.u32 256, %s22
        $region60: #{tpu_custom_call.1} parent=55 // pred_fallthru
          _
      $region56: #{tpu_custom_call.1} parent=5 // pred_fallthru
        _
      %p342 = scmp.le.s32.totalorder 1, %s22
      %p343 = scmp.lt.s32.totalorder %s22, 3
      %p344 = pnand %p342, %p343
      %p345 = pneg %p344
      // Predicated region
      $region61: #{tpu_custom_call.1} parent=5 // pred_check
        _
      $region62: #{tpu_custom_call.1} parent=5 // pred_check_branch
        %347 = sbr.rel (%p344) target = $region64
      $region63: #{tpu_custom_call.1} parent=5 // pred_region
        %s348 = ssub.s32 %s22, 1
        %s349 = smul.u32 256, %s27
        %p350 = scmp.lt.s32.totalorder %s349, 511
        %s351 = scalar_select %p350, %s349, 511
        %s352 = smul.addr %s351, 8
        %s353 = scalar_lea.vmem %s0, %s352
        %p354 = pneg %p48
        %p355 = pneg %p45
        %p356 = pneg %p69
        %p357 = pneg %p66
        %p358 = pneg %p90
        %p359 = pneg %p87
        %p360 = pneg %p111
        %p361 = pneg %p108
        %p362 = pneg %p132
        %p363 = pneg %p129
        %p364 = pneg %p153
        %p365 = pneg %p150
        %p366 = pneg %p174
        %p367 = pneg %p171
        %p368 = pneg %p195
        %p369 = pneg %p192
        %p370 = pneg %p216
        %p371 = pneg %p213
        %p372 = pneg %p237
        %p373 = pneg %p234
        %p374 = pneg %p258
        %p375 = pneg %p255
        %p376 = pneg %p284
        %p377 = pneg %p281
        %s378 = sand.u32 %s271, 1
        %s379 = scalar_lea.sflag [#allocation4], %s378
        %s380 = sand.u32 %s271, 1
        %s381 = smul.addr %s380, 16
        %s382 = scalar_lea.vmem [#allocation3], %s381
        %s383 = smul.u32 256, %s27
        %p384 = scmp.lt.s32.totalorder %s383, 511
        %s385 = scalar_select %p384, %s383, 511
        %s386 = smul.addr %s385, 8
        %s387 = scalar_lea.vmem %s0, %s386
        %s388 = smul.u32 256, %s27
        %s389 = smul.u32 16, %s27
        %v391 = vld [vmem:[%s387] sm:$0xff]
        %v392 = vld [vmem:[%s387 + $0x8] sm:$0xff]
        %v393 = vld [vmem:[%s387 + $0x10] sm:$0xff]
        %v394 = vld [vmem:[%s387 + $0x18] sm:$0xff]
        %v395 = vld [vmem:[%s387 + $0x20] sm:$0xff]
        %v396 = vld [vmem:[%s387 + $0x28] sm:$0xff]
        %v397 = vld [vmem:[%s387 + $0x30] sm:$0xff]
        %v398 = vld [vmem:[%s387 + $0x38] sm:$0xff]
        %v399 = vld [vmem:[%s387 + $0x40] sm:$0xff]
        %v400 = vld [vmem:[%s387 + $0x48] sm:$0xff]
        %v401 = vld [vmem:[%s387 + $0x50] sm:$0xff]
        %v402 = vld [vmem:[%s387 + $0x58] sm:$0xff]
        %v403 = vld [vmem:[%s387 + $0x60] sm:$0xff]
        %v404 = vld [vmem:[%s387 + $0x68] sm:$0xff]
        %v405 = vld [vmem:[%s387 + $0x70] sm:$0xff]
        %v406 = vld [vmem:[%s387 + $0x78] sm:$0xff]
        %v407 = vld [vmem:[%s387 + $0x80] sm:$0xff]
        %v408 = vld [vmem:[%s387 + $0x88] sm:$0xff]
        %v409 = vld [vmem:[%s387 + $0x90] sm:$0xff]
        %v410 = vld [vmem:[%s387 + $0x98] sm:$0xff]
        %v411 = vld [vmem:[%s387 + $0xa0] sm:$0xff]
        %v412 = vld [vmem:[%s387 + $0xa8] sm:$0xff]
        %v413 = vld [vmem:[%s387 + $0xb0] sm:$0xff]
        %v414 = vld [vmem:[%s387 + $0xb8] sm:$0xff]
        %v415 = vld [vmem:[%s387 + $0xc0] sm:$0xff]
        %v416 = vld [vmem:[%s387 + $0xc8] sm:$0xff]
        %v417 = vld [vmem:[%s387 + $0xd0] sm:$0xff]
        %v418 = vld [vmem:[%s387 + $0xd8] sm:$0xff]
        %v419 = vld [vmem:[%s387 + $0xe0] sm:$0xff]
        %v420 = vld [vmem:[%s387 + $0xe8] sm:$0xff]
        %v421 = vld [vmem:[%s387 + $0xf0] sm:$0xff]
        %v422 = vld [vmem:[%s387 + $0xf8] sm:$0xff]
        %v423 = vld [vmem:[%s387 + $0x100] sm:$0xff]
        %v424 = vld [vmem:[%s387 + $0x108] sm:$0xff]
        %v425 = vld [vmem:[%s387 + $0x110] sm:$0xff]
        %v426 = vld [vmem:[%s387 + $0x118] sm:$0xff]
        %v427 = vld [vmem:[%s387 + $0x120] sm:$0xff]
        %v428 = vld [vmem:[%s387 + $0x128] sm:$0xff]
        %v429 = vld [vmem:[%s387 + $0x130] sm:$0xff]
        %v430 = vld [vmem:[%s387 + $0x138] sm:$0xff]
        %v431 = vld [vmem:[%s387 + $0x140] sm:$0xff]
        %v432 = vld [vmem:[%s387 + $0x148] sm:$0xff]
        %v433 = vld [vmem:[%s387 + $0x150] sm:$0xff]
        %v434 = vld [vmem:[%s387 + $0x158] sm:$0xff]
        %v435 = vld [vmem:[%s387 + $0x160] sm:$0xff]
        %v436 = vld [vmem:[%s387 + $0x168] sm:$0xff]
        %v437 = vld [vmem:[%s387 + $0x170] sm:$0xff]
        %v438 = vld [vmem:[%s387 + $0x178] sm:$0xff]
        %v439 = vld [vmem:[%s387 + $0x180] sm:$0xff]
        %v440 = vld [vmem:[%s387 + $0x188] sm:$0xff]
        %v441 = vld [vmem:[%s387 + $0x190] sm:$0xff]
        %v442 = vld [vmem:[%s387 + $0x198] sm:$0xff]
        %v443 = vld [vmem:[%s387 + $0x1a0] sm:$0xff]
        %v444 = vld [vmem:[%s387 + $0x1a8] sm:$0xff]
        %v445 = vld [vmem:[%s387 + $0x1b0] sm:$0xff]
        %v446 = vld [vmem:[%s387 + $0x1b8] sm:$0xff]
        %v447 = vld [vmem:[%s387 + $0x1c0] sm:$0xff]
        %v448 = vld [vmem:[%s387 + $0x1c8] sm:$0xff]
        %v449 = vld [vmem:[%s387 + $0x1d0] sm:$0xff]
        %v450 = vld [vmem:[%s387 + $0x1d8] sm:$0xff]
        %v451 = vld [vmem:[%s387 + $0x1e0] sm:$0xff]
        %v452 = vld [vmem:[%s387 + $0x1e8] sm:$0xff]
        %v453 = vld [vmem:[%s387 + $0x1f0] sm:$0xff]
        %v454 = vld [vmem:[%s387 + $0x1f8] sm:$0xff]
        %v455 = vld [vmem:[%s387 + $0x200] sm:$0xff]
        %v456 = vld [vmem:[%s387 + $0x208] sm:$0xff]
        %v457 = vld [vmem:[%s387 + $0x210] sm:$0xff]
        %v458 = vld [vmem:[%s387 + $0x218] sm:$0xff]
        %v459 = vld [vmem:[%s387 + $0x220] sm:$0xff]
        %v460 = vld [vmem:[%s387 + $0x228] sm:$0xff]
        %v461 = vld [vmem:[%s387 + $0x230] sm:$0xff]
        %v462 = vld [vmem:[%s387 + $0x238] sm:$0xff]
        %v463 = vld [vmem:[%s387 + $0x240] sm:$0xff]
        %v464 = vld [vmem:[%s387 + $0x248] sm:$0xff]
        %v465 = vld [vmem:[%s387 + $0x250] sm:$0xff]
        %v466 = vld [vmem:[%s387 + $0x258] sm:$0xff]
        %v467 = vld [vmem:[%s387 + $0x260] sm:$0xff]
        %v468 = vld [vmem:[%s387 + $0x268] sm:$0xff]
        %v469 = vld [vmem:[%s387 + $0x270] sm:$0xff]
        %v470 = vld [vmem:[%s387 + $0x278] sm:$0xff]
        %v471 = vld [vmem:[%s387 + $0x280] sm:$0xff]
        %v472 = vld [vmem:[%s387 + $0x288] sm:$0xff]
        %v473 = vld [vmem:[%s387 + $0x290] sm:$0xff]
        %v474 = vld [vmem:[%s387 + $0x298] sm:$0xff]
        %v475 = vld [vmem:[%s387 + $0x2a0] sm:$0xff]
        %v476 = vld [vmem:[%s387 + $0x2a8] sm:$0xff]
        %v477 = vld [vmem:[%s387 + $0x2b0] sm:$0xff]
        %v478 = vld [vmem:[%s387 + $0x2b8] sm:$0xff]
        %v479 = vld [vmem:[%s387 + $0x2c0] sm:$0xff]
        %v480 = vld [vmem:[%s387 + $0x2c8] sm:$0xff]
        %v481 = vld [vmem:[%s387 + $0x2d0] sm:$0xff]
        %v482 = vld [vmem:[%s387 + $0x2d8] sm:$0xff]
        %v483 = vld [vmem:[%s387 + $0x2e0] sm:$0xff]
        %v484 = vld [vmem:[%s387 + $0x2e8] sm:$0xff]
        %v485 = vld [vmem:[%s387 + $0x2f0] sm:$0xff]
        %v486 = vld [vmem:[%s387 + $0x2f8] sm:$0xff]
        %v487 = vld [vmem:[%s387 + $0x300] sm:$0xff]
        %v488 = vld [vmem:[%s387 + $0x308] sm:$0xff]
        %v489 = vld [vmem:[%s387 + $0x310] sm:$0xff]
        %v490 = vld [vmem:[%s387 + $0x318] sm:$0xff]
        %v491 = vld [vmem:[%s387 + $0x320] sm:$0xff]
        %v492 = vld [vmem:[%s387 + $0x328] sm:$0xff]
        %v493 = vld [vmem:[%s387 + $0x330] sm:$0xff]
        %v494 = vld [vmem:[%s387 + $0x338] sm:$0xff]
        %v495 = vld [vmem:[%s387 + $0x340] sm:$0xff]
        %v496 = vld [vmem:[%s387 + $0x348] sm:$0xff]
        %v497 = vld [vmem:[%s387 + $0x350] sm:$0xff]
        %v498 = vld [vmem:[%s387 + $0x358] sm:$0xff]
        %v499 = vld [vmem:[%s387 + $0x360] sm:$0xff]
        %v500 = vld [vmem:[%s387 + $0x368] sm:$0xff]
        %v501 = vld [vmem:[%s387 + $0x370] sm:$0xff]
        %v502 = vld [vmem:[%s387 + $0x378] sm:$0xff]
        %v503 = vld [vmem:[%s387 + $0x380] sm:$0xff]
        %v504 = vld [vmem:[%s387 + $0x388] sm:$0xff]
        %v505 = vld [vmem:[%s387 + $0x390] sm:$0xff]
        %v506 = vld [vmem:[%s387 + $0x398] sm:$0xff]
        %v507 = vld [vmem:[%s387 + $0x3a0] sm:$0xff]
        %v508 = vld [vmem:[%s387 + $0x3a8] sm:$0xff]
        %v509 = vld [vmem:[%s387 + $0x3b0] sm:$0xff]
        %v510 = vld [vmem:[%s387 + $0x3b8] sm:$0xff]
        %v511 = vld [vmem:[%s387 + $0x3c0] sm:$0xff]
        %v512 = vld [vmem:[%s387 + $0x3c8] sm:$0xff]
        %v513 = vld [vmem:[%s387 + $0x3d0] sm:$0xff]
        %v514 = vld [vmem:[%s387 + $0x3d8] sm:$0xff]
        %v515 = vld [vmem:[%s387 + $0x3e0] sm:$0xff]
        %v516 = vld [vmem:[%s387 + $0x3e8] sm:$0xff]
        %v517 = vld [vmem:[%s387 + $0x3f0] sm:$0xff]
        %v518 = vld [vmem:[%s387 + $0x3f8] sm:$0xff]
        %v519 = vld [vmem:[%s387 + $0x400] sm:$0xff]
        %v520 = vld [vmem:[%s387 + $0x408] sm:$0xff]
        %v521 = vld [vmem:[%s387 + $0x410] sm:$0xff]
        %v522 = vld [vmem:[%s387 + $0x418] sm:$0xff]
        %v523 = vld [vmem:[%s387 + $0x420] sm:$0xff]
        %v524 = vld [vmem:[%s387 + $0x428] sm:$0xff]
        %v525 = vld [vmem:[%s387 + $0x430] sm:$0xff]
        %v526 = vld [vmem:[%s387 + $0x438] sm:$0xff]
        %v527 = vld [vmem:[%s387 + $0x440] sm:$0xff]
        %v528 = vld [vmem:[%s387 + $0x448] sm:$0xff]
        %v529 = vld [vmem:[%s387 + $0x450] sm:$0xff]
        %v530 = vld [vmem:[%s387 + $0x458] sm:$0xff]
        %v531 = vld [vmem:[%s387 + $0x460] sm:$0xff]
        %v532 = vld [vmem:[%s387 + $0x468] sm:$0xff]
        %v533 = vld [vmem:[%s387 + $0x470] sm:$0xff]
        %v534 = vld [vmem:[%s387 + $0x478] sm:$0xff]
        %v535 = vld [vmem:[%s387 + $0x480] sm:$0xff]
        %v536 = vld [vmem:[%s387 + $0x488] sm:$0xff]
        %v537 = vld [vmem:[%s387 + $0x490] sm:$0xff]
        %v538 = vld [vmem:[%s387 + $0x498] sm:$0xff]
        %v539 = vld [vmem:[%s387 + $0x4a0] sm:$0xff]
        %v540 = vld [vmem:[%s387 + $0x4a8] sm:$0xff]
        %v541 = vld [vmem:[%s387 + $0x4b0] sm:$0xff]
        %v542 = vld [vmem:[%s387 + $0x4b8] sm:$0xff]
        %v543 = vld [vmem:[%s387 + $0x4c0] sm:$0xff]
        %v544 = vld [vmem:[%s387 + $0x4c8] sm:$0xff]
        %v545 = vld [vmem:[%s387 + $0x4d0] sm:$0xff]
        %v546 = vld [vmem:[%s387 + $0x4d8] sm:$0xff]
        %v547 = vld [vmem:[%s387 + $0x4e0] sm:$0xff]
        %v548 = vld [vmem:[%s387 + $0x4e8] sm:$0xff]
        %v549 = vld [vmem:[%s387 + $0x4f0] sm:$0xff]
        %v550 = vld [vmem:[%s387 + $0x4f8] sm:$0xff]
        %v551 = vld [vmem:[%s387 + $0x500] sm:$0xff]
        %v552 = vld [vmem:[%s387 + $0x508] sm:$0xff]
        %v553 = vld [vmem:[%s387 + $0x510] sm:$0xff]
        %v554 = vld [vmem:[%s387 + $0x518] sm:$0xff]
        %v555 = vld [vmem:[%s387 + $0x520] sm:$0xff]
        %v556 = vld [vmem:[%s387 + $0x528] sm:$0xff]
        %v557 = vld [vmem:[%s387 + $0x530] sm:$0xff]
        %v558 = vld [vmem:[%s387 + $0x538] sm:$0xff]
        %v559 = vld [vmem:[%s387 + $0x540] sm:$0xff]
        %v560 = vld [vmem:[%s387 + $0x548] sm:$0xff]
        %v561 = vld [vmem:[%s387 + $0x550] sm:$0xff]
        %v562 = vld [vmem:[%s387 + $0x558] sm:$0xff]
        %v563 = vld [vmem:[%s387 + $0x560] sm:$0xff]
        %v564 = vld [vmem:[%s387 + $0x568] sm:$0xff]
        %v565 = vld [vmem:[%s387 + $0x570] sm:$0xff]
        %v566 = vld [vmem:[%s387 + $0x578] sm:$0xff]
        %v567 = vld [vmem:[%s387 + $0x580] sm:$0xff]
        %v568 = vld [vmem:[%s387 + $0x588] sm:$0xff]
        %v569 = vld [vmem:[%s387 + $0x590] sm:$0xff]
        %v570 = vld [vmem:[%s387 + $0x598] sm:$0xff]
        %v571 = vld [vmem:[%s387 + $0x5a0] sm:$0xff]
        %v572 = vld [vmem:[%s387 + $0x5a8] sm:$0xff]
        %v573 = vld [vmem:[%s387 + $0x5b0] sm:$0xff]
        %v574 = vld [vmem:[%s387 + $0x5b8] sm:$0xff]
        %v575 = vld [vmem:[%s387 + $0x5c0] sm:$0xff]
        %v576 = vld [vmem:[%s387 + $0x5c8] sm:$0xff]
        %v577 = vld [vmem:[%s387 + $0x5d0] sm:$0xff]
        %v578 = vld [vmem:[%s387 + $0x5d8] sm:$0xff]
        %v579 = vld [vmem:[%s387 + $0x5e0] sm:$0xff]
        %v580 = vld [vmem:[%s387 + $0x5e8] sm:$0xff]
        %v581 = vld [vmem:[%s387 + $0x5f0] sm:$0xff]
        %v582 = vld [vmem:[%s387 + $0x5f8] sm:$0xff]
        %v583 = vld [vmem:[%s387 + $0x600] sm:$0xff]
        %v584 = vld [vmem:[%s387 + $0x608] sm:$0xff]
        %v585 = vld [vmem:[%s387 + $0x610] sm:$0xff]
        %v586 = vld [vmem:[%s387 + $0x618] sm:$0xff]
        %v587 = vld [vmem:[%s387 + $0x620] sm:$0xff]
        %v588 = vld [vmem:[%s387 + $0x628] sm:$0xff]
        %v589 = vld [vmem:[%s387 + $0x630] sm:$0xff]
        %v590 = vld [vmem:[%s387 + $0x638] sm:$0xff]
        %v591 = vld [vmem:[%s387 + $0x640] sm:$0xff]
        %v592 = vld [vmem:[%s387 + $0x648] sm:$0xff]
        %v593 = vld [vmem:[%s387 + $0x650] sm:$0xff]
        %v594 = vld [vmem:[%s387 + $0x658] sm:$0xff]
        %v595 = vld [vmem:[%s387 + $0x660] sm:$0xff]
        %v596 = vld [vmem:[%s387 + $0x668] sm:$0xff]
        %v597 = vld [vmem:[%s387 + $0x670] sm:$0xff]
        %v598 = vld [vmem:[%s387 + $0x678] sm:$0xff]
        %v599 = vld [vmem:[%s387 + $0x680] sm:$0xff]
        %v600 = vld [vmem:[%s387 + $0x688] sm:$0xff]
        %v601 = vld [vmem:[%s387 + $0x690] sm:$0xff]
        %v602 = vld [vmem:[%s387 + $0x698] sm:$0xff]
        %v603 = vld [vmem:[%s387 + $0x6a0] sm:$0xff]
        %v604 = vld [vmem:[%s387 + $0x6a8] sm:$0xff]
        %v605 = vld [vmem:[%s387 + $0x6b0] sm:$0xff]
        %v606 = vld [vmem:[%s387 + $0x6b8] sm:$0xff]
        %v607 = vld [vmem:[%s387 + $0x6c0] sm:$0xff]
        %v608 = vld [vmem:[%s387 + $0x6c8] sm:$0xff]
        %v609 = vld [vmem:[%s387 + $0x6d0] sm:$0xff]
        %v610 = vld [vmem:[%s387 + $0x6d8] sm:$0xff]
        %v611 = vld [vmem:[%s387 + $0x6e0] sm:$0xff]
        %v612 = vld [vmem:[%s387 + $0x6e8] sm:$0xff]
        %v613 = vld [vmem:[%s387 + $0x6f0] sm:$0xff]
        %v614 = vld [vmem:[%s387 + $0x6f8] sm:$0xff]
        %v615 = vld [vmem:[%s387 + $0x700] sm:$0xff]
        %v616 = vld [vmem:[%s387 + $0x708] sm:$0xff]
        %v617 = vld [vmem:[%s387 + $0x710] sm:$0xff]
        %v618 = vld [vmem:[%s387 + $0x718] sm:$0xff]
        %v619 = vld [vmem:[%s387 + $0x720] sm:$0xff]
        %v620 = vld [vmem:[%s387 + $0x728] sm:$0xff]
        %v621 = vld [vmem:[%s387 + $0x730] sm:$0xff]
        %v622 = vld [vmem:[%s387 + $0x738] sm:$0xff]
        %v623 = vld [vmem:[%s387 + $0x740] sm:$0xff]
        %v624 = vld [vmem:[%s387 + $0x748] sm:$0xff]
        %v625 = vld [vmem:[%s387 + $0x750] sm:$0xff]
        %v626 = vld [vmem:[%s387 + $0x758] sm:$0xff]
        %v627 = vld [vmem:[%s387 + $0x760] sm:$0xff]
        %v628 = vld [vmem:[%s387 + $0x768] sm:$0xff]
        %v629 = vld [vmem:[%s387 + $0x770] sm:$0xff]
        %v630 = vld [vmem:[%s387 + $0x778] sm:$0xff]
        %v631 = vld [vmem:[%s387 + $0x780] sm:$0xff]
        %v632 = vld [vmem:[%s387 + $0x788] sm:$0xff]
        %v633 = vld [vmem:[%s387 + $0x790] sm:$0xff]
        %v634 = vld [vmem:[%s387 + $0x798] sm:$0xff]
        %v635 = vld [vmem:[%s387 + $0x7a0] sm:$0xff]
        %v636 = vld [vmem:[%s387 + $0x7a8] sm:$0xff]
        %v637 = vld [vmem:[%s387 + $0x7b0] sm:$0xff]
        %v638 = vld [vmem:[%s387 + $0x7b8] sm:$0xff]
        %v639 = vld [vmem:[%s387 + $0x7c0] sm:$0xff]
        %v640 = vld [vmem:[%s387 + $0x7c8] sm:$0xff]
        %v641 = vld [vmem:[%s387 + $0x7d0] sm:$0xff]
        %v642 = vld [vmem:[%s387 + $0x7d8] sm:$0xff]
        %v643 = vld [vmem:[%s387 + $0x7e0] sm:$0xff]
        %v644 = vld [vmem:[%s387 + $0x7e8] sm:$0xff]
        %v645 = vld [vmem:[%s387 + $0x7f0] sm:$0xff]
        %v646 = vld [vmem:[%s387 + $0x7f8] sm:$0xff]
        %v647 = vpack.c.bf16 %v392, %v391
        %v648 = vpack.c.bf16 %v394, %v393
        %v649 = vpack.c.bf16 %v396, %v395
        %v650 = vpack.c.bf16 %v398, %v397
        %v651 = vpack.c.bf16 %v400, %v399
        %v652 = vpack.c.bf16 %v402, %v401
        %v653 = vpack.c.bf16 %v404, %v403
        %v654 = vpack.c.bf16 %v406, %v405
        %v655 = vpack.c.bf16 %v408, %v407
        %v656 = vpack.c.bf16 %v410, %v409
        %v657 = vpack.c.bf16 %v412, %v411
        %v658 = vpack.c.bf16 %v414, %v413
        %v659 = vpack.c.bf16 %v416, %v415
        %v660 = vpack.c.bf16 %v418, %v417
        %v661 = vpack.c.bf16 %v420, %v419
        %v662 = vpack.c.bf16 %v422, %v421
        %v663 = vpack.c.bf16 %v424, %v423
        %v664 = vpack.c.bf16 %v426, %v425
        %v665 = vpack.c.bf16 %v428, %v427
        %v666 = vpack.c.bf16 %v430, %v429
        %v667 = vpack.c.bf16 %v432, %v431
        %v668 = vpack.c.bf16 %v434, %v433
        %v669 = vpack.c.bf16 %v436, %v435
        %v670 = vpack.c.bf16 %v438, %v437
        %v671 = vpack.c.bf16 %v440, %v439
        %v672 = vpack.c.bf16 %v442, %v441
        %v673 = vpack.c.bf16 %v444, %v443
        %v674 = vpack.c.bf16 %v446, %v445
        %v675 = vpack.c.bf16 %v448, %v447
        %v676 = vpack.c.bf16 %v450, %v449
        %v677 = vpack.c.bf16 %v452, %v451
        %v678 = vpack.c.bf16 %v454, %v453
        %v679 = vpack.c.bf16 %v456, %v455
        %v680 = vpack.c.bf16 %v458, %v457
        %v681 = vpack.c.bf16 %v460, %v459
        %v682 = vpack.c.bf16 %v462, %v461
        %v683 = vpack.c.bf16 %v464, %v463
        %v684 = vpack.c.bf16 %v466, %v465
        %v685 = vpack.c.bf16 %v468, %v467
        %v686 = vpack.c.bf16 %v470, %v469
        %v687 = vpack.c.bf16 %v472, %v471
        %v688 = vpack.c.bf16 %v474, %v473
        %v689 = vpack.c.bf16 %v476, %v475
        %v690 = vpack.c.bf16 %v478, %v477
        %v691 = vpack.c.bf16 %v480, %v479
        %v692 = vpack.c.bf16 %v482, %v481
        %v693 = vpack.c.bf16 %v484, %v483
        %v694 = vpack.c.bf16 %v486, %v485
        %v695 = vpack.c.bf16 %v488, %v487
        %v696 = vpack.c.bf16 %v490, %v489
        %v697 = vpack.c.bf16 %v492, %v491
        %v698 = vpack.c.bf16 %v494, %v493
        %v699 = vpack.c.bf16 %v496, %v495
        %v700 = vpack.c.bf16 %v498, %v497
        %v701 = vpack.c.bf16 %v500, %v499
        %v702 = vpack.c.bf16 %v502, %v501
        %v703 = vpack.c.bf16 %v504, %v503
        %v704 = vpack.c.bf16 %v506, %v505
        %v705 = vpack.c.bf16 %v508, %v507
        %v706 = vpack.c.bf16 %v510, %v509
        %v707 = vpack.c.bf16 %v512, %v511
        %v708 = vpack.c.bf16 %v514, %v513
        %v709 = vpack.c.bf16 %v516, %v515
        %v710 = vpack.c.bf16 %v518, %v517
        %v711 = vpack.c.bf16 %v520, %v519
        %v712 = vpack.c.bf16 %v522, %v521
        %v713 = vpack.c.bf16 %v524, %v523
        %v714 = vpack.c.bf16 %v526, %v525
        %v715 = vpack.c.bf16 %v528, %v527
        %v716 = vpack.c.bf16 %v530, %v529
        %v717 = vpack.c.bf16 %v532, %v531
        %v718 = vpack.c.bf16 %v534, %v533
        %v719 = vpack.c.bf16 %v536, %v535
        %v720 = vpack.c.bf16 %v538, %v537
        %v721 = vpack.c.bf16 %v540, %v539
        %v722 = vpack.c.bf16 %v542, %v541
        %v723 = vpack.c.bf16 %v544, %v543
        %v724 = vpack.c.bf16 %v546, %v545
        %v725 = vpack.c.bf16 %v548, %v547
        %v726 = vpack.c.bf16 %v550, %v549
        %v727 = vpack.c.bf16 %v552, %v551
        %v728 = vpack.c.bf16 %v554, %v553
        %v729 = vpack.c.bf16 %v556, %v555
        %v730 = vpack.c.bf16 %v558, %v557
        %v731 = vpack.c.bf16 %v560, %v559
        %v732 = vpack.c.bf16 %v562, %v561
        %v733 = vpack.c.bf16 %v564, %v563
        %v734 = vpack.c.bf16 %v566, %v565
        %v735 = vpack.c.bf16 %v568, %v567
        %v736 = vpack.c.bf16 %v570, %v569
        %v737 = vpack.c.bf16 %v572, %v571
        %v738 = vpack.c.bf16 %v574, %v573
        %v739 = vpack.c.bf16 %v576, %v575
        %v740 = vpack.c.bf16 %v578, %v577
        %v741 = vpack.c.bf16 %v580, %v579
        %v742 = vpack.c.bf16 %v582, %v581
        %v743 = vpack.c.bf16 %v584, %v583
        %v744 = vpack.c.bf16 %v586, %v585
        %v745 = vpack.c.bf16 %v588, %v587
        %v746 = vpack.c.bf16 %v590, %v589
        %v747 = vpack.c.bf16 %v592, %v591
        %v748 = vpack.c.bf16 %v594, %v593
        %v749 = vpack.c.bf16 %v596, %v595
        %v750 = vpack.c.bf16 %v598, %v597
        %v751 = vpack.c.bf16 %v600, %v599
        %v752 = vpack.c.bf16 %v602, %v601
        %v753 = vpack.c.bf16 %v604, %v603
        %v754 = vpack.c.bf16 %v606, %v605
        %v755 = vpack.c.bf16 %v608, %v607
        %v756 = vpack.c.bf16 %v610, %v609
        %v757 = vpack.c.bf16 %v612, %v611
        %v758 = vpack.c.bf16 %v614, %v613
        %v759 = vpack.c.bf16 %v616, %v615
        %v760 = vpack.c.bf16 %v618, %v617
        %v761 = vpack.c.bf16 %v620, %v619
        %v762 = vpack.c.bf16 %v622, %v621
        %v763 = vpack.c.bf16 %v624, %v623
        %v764 = vpack.c.bf16 %v626, %v625
        %v765 = vpack.c.bf16 %v628, %v627
        %v766 = vpack.c.bf16 %v630, %v629
        %v767 = vpack.c.bf16 %v632, %v631
        %v768 = vpack.c.bf16 %v634, %v633
        %v769 = vpack.c.bf16 %v636, %v635
        %v770 = vpack.c.bf16 %v638, %v637
        %v771 = vpack.c.bf16 %v640, %v639
        %v772 = vpack.c.bf16 %v642, %v641
        %v773 = vpack.c.bf16 %v644, %v643
        %v774 = vpack.c.bf16 %v646, %v645
        %v775 = vld [vmem:[%s1] sm:$0xf]
        %v776 = vld [vmem:[%s1 + $0x4] sm:$0xf]
        %v777 = vld [vmem:[%s1 + $0x8] sm:$0xf]
        %v778 = vld [vmem:[%s1 + $0xc] sm:$0xf]
        %v779 = vld [vmem:[%s1 + $0x10] sm:$0xf]
        %v780 = vld [vmem:[%s1 + $0x14] sm:$0xf]
        %v781 = vld [vmem:[%s1 + $0x18] sm:$0xf]
        %v782 = vld [vmem:[%s1 + $0x1c] sm:$0x7]
        %v783 = vld [vmem:[%s2] sm:$0x1]
        %v785 = vlaneseq
        %v786 = vshrl.u32 %v785, 7
        %v787 = vsub.s32 0, %v786
        %v788 = vrot.slane %v783, %v787
        %v798 = vunpack.c.l.b16 %v775
        %v799 = vunpack.c.l.b16 %v776
        %v800 = vunpack.c.l.b16 %v777
        %v801 = vunpack.c.l.b16 %v778
        %v802 = vunpack.c.l.b16 %v779
        %v803 = vunpack.c.l.b16 %v780
        %v804 = vunpack.c.l.b16 %v781
        %v805 = vunpack.c.l.b16 %v782
        %v806 = vpack.c.b16 %v799, %v798
        %v807 = vpack.c.b16 %v801, %v800
        %v808 = vpack.c.b16 %v803, %v802
        %v809 = vpack.c.b16 %v805, %v804
        %vm813 = vcmask 498688
        %v815 = vsel %vm813, %v647, 0
        %v818 = vsel %vm813, %v648, 0
        %v821 = vsel %vm813, %v649, 0
        %v824 = vsel %vm813, %v650, 0
        %v827 = vsel %vm813, %v651, 0
        %v830 = vsel %vm813, %v652, 0
        %v833 = vsel %vm813, %v653, 0
        %v836 = vsel %vm813, %v654, 0
        %v839 = vsel %vm813, %v655, 0
        %v842 = vsel %vm813, %v656, 0
        %v845 = vsel %vm813, %v657, 0
        %v848 = vsel %vm813, %v658, 0
        %v851 = vsel %vm813, %v659, 0
        %v854 = vsel %vm813, %v660, 0
        %v857 = vsel %vm813, %v661, 0
        %v860 = vsel %vm813, %v662, 0
        %v863 = vsel %vm813, %v663, 0
        %v866 = vsel %vm813, %v664, 0
        %v869 = vsel %vm813, %v665, 0
        %v872 = vsel %vm813, %v666, 0
        %v875 = vsel %vm813, %v667, 0
        %v878 = vsel %vm813, %v668, 0
        %v881 = vsel %vm813, %v669, 0
        %v884 = vsel %vm813, %v670, 0
        %v887 = vsel %vm813, %v671, 0
        %v890 = vsel %vm813, %v672, 0
        %v893 = vsel %vm813, %v673, 0
        %v896 = vsel %vm813, %v674, 0
        %v899 = vsel %vm813, %v675, 0
        %v902 = vsel %vm813, %v676, 0
        %v905 = vsel %vm813, %v677, 0
        %v908 = vsel %vm813, %v678, 0
        %v911 = vsel %vm813, %v679, 0
        %v914 = vsel %vm813, %v680, 0
        %v917 = vsel %vm813, %v681, 0
        %v920 = vsel %vm813, %v682, 0
        %v923 = vsel %vm813, %v683, 0
        %v926 = vsel %vm813, %v684, 0
        %v929 = vsel %vm813, %v685, 0
        %v932 = vsel %vm813, %v686, 0
        %v935 = vsel %vm813, %v687, 0
        %v938 = vsel %vm813, %v688, 0
        %v941 = vsel %vm813, %v689, 0
        %v944 = vsel %vm813, %v690, 0
        %v947 = vsel %vm813, %v691, 0
        %v950 = vsel %vm813, %v692, 0
        %v953 = vsel %vm813, %v693, 0
        %v956 = vsel %vm813, %v694, 0
        %v959 = vsel %vm813, %v695, 0
        %v962 = vsel %vm813, %v696, 0
        %v965 = vsel %vm813, %v697, 0
        %v968 = vsel %vm813, %v698, 0
        %v971 = vsel %vm813, %v699, 0
        %v974 = vsel %vm813, %v700, 0
        %v977 = vsel %vm813, %v701, 0
        %v980 = vsel %vm813, %v702, 0
        %v983 = vsel %vm813, %v703, 0
        %v986 = vsel %vm813, %v704, 0
        %v989 = vsel %vm813, %v705, 0
        %v992 = vsel %vm813, %v706, 0
        %v995 = vsel %vm813, %v707, 0
        %v998 = vsel %vm813, %v708, 0
        %v1001 = vsel %vm813, %v709, 0
        %v1004 = vsel %vm813, %v710, 0
        %v1007 = vsel %vm813, %v711, 0
        %v1010 = vsel %vm813, %v712, 0
        %v1013 = vsel %vm813, %v713, 0
        %v1016 = vsel %vm813, %v714, 0
        %v1019 = vsel %vm813, %v715, 0
        %v1022 = vsel %vm813, %v716, 0
        %v1025 = vsel %vm813, %v717, 0
        %v1028 = vsel %vm813, %v718, 0
        %v1031 = vsel %vm813, %v719, 0
        %v1034 = vsel %vm813, %v720, 0
        %v1037 = vsel %vm813, %v721, 0
        %v1040 = vsel %vm813, %v722, 0
        %v1043 = vsel %vm813, %v723, 0
        %v1046 = vsel %vm813, %v724, 0
        %v1049 = vsel %vm813, %v725, 0
        %v1052 = vsel %vm813, %v726, 0
        %v1055 = vsel %vm813, %v727, 0
        %v1058 = vsel %vm813, %v728, 0
        %v1061 = vsel %vm813, %v729, 0
        %v1064 = vsel %vm813, %v730, 0
        %v1067 = vsel %vm813, %v731, 0
        %v1070 = vsel %vm813, %v732, 0
        %v1073 = vsel %vm813, %v733, 0
        %v1076 = vsel %vm813, %v734, 0
        %v1079 = vsel %vm813, %v735, 0
        %v1082 = vsel %vm813, %v736, 0
        %v1085 = vsel %vm813, %v737, 0
        %v1088 = vsel %vm813, %v738, 0
        %v1091 = vsel %vm813, %v739, 0
        %v1094 = vsel %vm813, %v740, 0
        %v1097 = vsel %vm813, %v741, 0
        %v1100 = vsel %vm813, %v742, 0
        %v1103 = vsel %vm813, %v743, 0
        %v1106 = vsel %vm813, %v744, 0
        %v1109 = vsel %vm813, %v745, 0
        %v1112 = vsel %vm813, %v746, 0
        %v1115 = vsel %vm813, %v747, 0
        %v1118 = vsel %vm813, %v748, 0
        %v1121 = vsel %vm813, %v749, 0
        %v1124 = vsel %vm813, %v750, 0
        %v1127 = vsel %vm813, %v751, 0
        %v1130 = vsel %vm813, %v752, 0
        %v1133 = vsel %vm813, %v753, 0
        %v1136 = vsel %vm813, %v754, 0
        %v1139 = vsel %vm813, %v755, 0
        %v1142 = vsel %vm813, %v756, 0
        %v1145 = vsel %vm813, %v757, 0
        %v1148 = vsel %vm813, %v758, 0
        %v1151 = vsel %vm813, %v759, 0
        %v1154 = vsel %vm813, %v760, 0
        %v1157 = vsel %vm813, %v761, 0
        %v1160 = vsel %vm813, %v762, 0
        %v1163 = vsel %vm813, %v763, 0
        %v1166 = vsel %vm813, %v764, 0
        %v1169 = vsel %vm813, %v765, 0
        %v1172 = vsel %vm813, %v766, 0
        %v1175 = vsel %vm813, %v767, 0
        %v1178 = vsel %vm813, %v768, 0
        %v1181 = vsel %vm813, %v769, 0
        %v1184 = vsel %vm813, %v770, 0
        %v1187 = vsel %vm813, %v771, 0
        %v1190 = vsel %vm813, %v772, 0
        %v1193 = vsel %vm813, %v773, 0
        %v1196 = vsel %vm813, %v774, 0
        %vm1198 = vcmask 1045504
        %vm1199 = vcmask 1046528
        %v1200 = vsel %vm1198, 4294967295, 65535
        %v1201 = vsel %vm1199, %v1200, 0
        %v1203 = vand.u32 %v809, %v1201
        %1205 = vmatprep.subr.bf16.mxu0 0
        %1206 = vmatpush1.bf16.msra.mxu0 %v806
        %1207 = vmatprep.subr.bf16.mxu0 0
        %1208 = vmatpush1.bf16.msra.mxu0 %v807
        %1209 = vmatprep.subr.bf16.mxu0 0
        %1210 = vmatpush1.bf16.msra.mxu0 %v808
        %1211 = vmatprep.subr.bf16.mxu0 0
        %1212 = vmatpush1.bf16.msra.mxu0 %v1203
        %1213 = vmatprep.subr.bf16.mxu0 0
        %1214 = vmatpush1.bf16.msra.mxu0 0
        %1215 = vmatprep.subr.bf16.mxu0 0
        %1216 = vmatpush1.bf16.msra.mxu0 0
        %1217 = vmatprep.subr.bf16.mxu0 0
        %1218 = vmatpush1.bf16.msra.mxu0 0
        %1219 = vmatprep.subr.bf16.mxu0 0
        %1220 = vmatpush1.bf16.msra.mxu0 0
        %1221 = vmatprep.subr.bf16.mxu0 0
        %1222 = vmatpush1.bf16.msra.mxu0 0
        %1223 = vmatprep.subr.bf16.mxu0 0
        %1224 = vmatpush1.bf16.msra.mxu0 0
        %1225 = vmatprep.subr.bf16.mxu0 0
        %1226 = vmatpush1.bf16.msra.mxu0 0
        %1227 = vmatprep.subr.bf16.mxu0 0
        %1228 = vmatpush1.bf16.msra.mxu0 0
        %1229 = vmatprep.subr.bf16.mxu0 0
        %1230 = vmatpush1.bf16.msra.mxu0 0
        %1231 = vmatprep.subr.bf16.mxu0 0
        %1232 = vmatpush1.bf16.msra.mxu0 0
        %1233 = vmatprep.subr.bf16.mxu0 0
        %1234 = vmatpush1.bf16.msra.mxu0 0
        %1235 = vmatprep.subr.bf16.mxu0 0
        %1236 = vmatpush1.bf16.msra.mxu0 0
        %1237 = vmatprep.mubr.bf16.mxu0 0
        %1238 = vmatmul.mubr.bf16.gmra.mrb[0].mxu0 %v815
        %v1239 = vpop.f32.mrb[0].mxu0
        %v1240 = vadd.f32 %v788, %v1239
        %v1241 = vpop.f32.mrb[0].mxu0
        %v1242 = vpop.f32.mrb[0].mxu0
        %v1243 = vadd.f32 %v788, %v1242
        %v1244 = vpop.f32.mrb[0].mxu0
        %1245 = vmatprep.mubr.bf16.mxu0 0
        %1246 = vmatmul.mubr.bf16.gmra.mrb[0].mxu0 %v818
        %v1247 = vpop.f32.mrb[0].mxu0
        %v1248 = vadd.f32 %v788, %v1247
        %v1249 = vpop.f32.mrb[0].mxu0
        %v1250 = vpop.f32.mrb[0].mxu0
        %v1251 = vadd.f32 %v788, %v1250
        %v1252 = vpop.f32.mrb[0].mxu0
        %1253 = vmatprep.mubr.bf16.mxu0 0
        %1254 = vmatmul.mubr.bf16.gmra.mrb[0].mxu0 %v821
        %v1255 = vpop.f32.mrb[0].mxu0
        %v1256 = vadd.f32 %v788, %v1255
        %v1257 = vpop.f32.mrb[0].mxu0
        %v1258 = vpop.f32.mrb[0].mxu0
        %v1259 = vadd.f32 %v788, %v1258
        %v1260 = vpop.f32.mrb[0].mxu0
        %1261 = vmatprep.mubr.bf16.mxu0 0
        %1262 = vmatmul.mubr.bf16.gmra.mrb[0].mxu0 %v824
        %v1263 = vpop.f32.mrb[0].mxu0
        %v1264 = vadd.f32 %v788, %v1263
        %v1265 = vpop.f32.mrb[0].mxu0
        %v1266 = vpop.f32.mrb[0].mxu0
        %v1267 = vadd.f32 %v788, %v1266
        %v1268 = vpop.f32.mrb[0].mxu0
        %1269 = vmatprep.mubr.bf16.mxu0 0
        %1270 = vmatmul.mubr.bf16.gmra.mrb[0].mxu0 %v827
        %v1271 = vpop.f32.mrb[0].mxu0
        %v1272 = vadd.f32 %v788, %v1271
        %v1273 = vpop.f32.mrb[0].mxu0
        %v1274 = vpop.f32.mrb[0].mxu0
        %v1275 = vadd.f32 %v788, %v1274
        %v1276 = vpop.f32.mrb[0].mxu0
        %1277 = vmatprep.mubr.bf16.mxu0 0
        %1278 = vmatmul.mubr.bf16.gmra.mrb[0].mxu0 %v830
        %v1279 = vpop.f32.mrb[0].mxu0
        %v1280 = vadd.f32 %v788, %v1279
        %v1281 = vpop.f32.mrb[0].mxu0
        %v1282 = vpop.f32.mrb[0].mxu0
        %v1283 = vadd.f32 %v788, %v1282
        %v1284 = vpop.f32.mrb[0].mxu0
        %1285 = vmatprep.mubr.bf16.mxu0 0
        %1286 = vmatmul.mubr.bf16.gmra.mrb[0].mxu0 %v833
        %v1287 = vpop.f32.mrb[0].mxu0
        %v1288 = vadd.f32 %v788, %v1287
        %v1289 = vpop.f32.mrb[0].mxu0
        %v1290 = vpop.f32.mrb[0].mxu0
        %v1291 = vadd.f32 %v788, %v1290
        %v1292 = vpop.f32.mrb[0].mxu0
        %1293 = vmatprep.mubr.bf16.mxu0 0
        %1294 = vmatmul.mubr.bf16.gmra.mrb[0].mxu0 %v836
        %v1295 = vpop.f32.mrb[0].mxu0
        %v1296 = vadd.f32 %v788, %v1295
        %v1297 = vpop.f32.mrb[0].mxu0
        %v1298 = vpop.f32.mrb[0].mxu0
        %v1299 = vadd.f32 %v788, %v1298
        %v1300 = vpop.f32.mrb[0].mxu0
        %1301 = vmatprep.mubr.bf16.mxu0 0
        %1302 = vmatmul.mubr.bf16.gmra.mrb[0].mxu0 %v839
        %v1303 = vpop.f32.mrb[0].mxu0
        %v1304 = vadd.f32 %v788, %v1303
        %v1305 = vpop.f32.mrb[0].mxu0
        %v1306 = vpop.f32.mrb[0].mxu0
        %v1307 = vadd.f32 %v788, %v1306
        %v1308 = vpop.f32.mrb[0].mxu0
        %1309 = vmatprep.mubr.bf16.mxu0 0
        %1310 = vmatmul.mubr.bf16.gmra.mrb[0].mxu0 %v842
        %v1311 = vpop.f32.mrb[0].mxu0
        %v1312 = vadd.f32 %v788, %v1311
        %v1313 = vpop.f32.mrb[0].mxu0
        %v1314 = vpop.f32.mrb[0].mxu0
        %v1315 = vadd.f32 %v788, %v1314
        %v1316 = vpop.f32.mrb[0].mxu0
        %1317 = vmatprep.mubr.bf16.mxu0 0
        %1318 = vmatmul.mubr.bf16.gmra.mrb[0].mxu0 %v845
        %v1319 = vpop.f32.mrb[0].mxu0
        %v1320 = vadd.f32 %v788, %v1319
        %v1321 = vpop.f32.mrb[0].mxu0
        %v1322 = vpop.f32.mrb[0].mxu0
        %v1323 = vadd.f32 %v788, %v1322
        %v1324 = vpop.f32.mrb[0].mxu0
        %1325 = vmatprep.mubr.bf16.mxu0 0
        %1326 = vmatmul.mubr.bf16.gmra.mrb[0].mxu0 %v848
        %v1327 = vpop.f32.mrb[0].mxu0
        %v1328 = vadd.f32 %v788, %v1327
        %v1329 = vpop.f32.mrb[0].mxu0
        %v1330 = vpop.f32.mrb[0].mxu0
        %v1331 = vadd.f32 %v788, %v1330
        %v1332 = vpop.f32.mrb[0].mxu0
        %1333 = vmatprep.mubr.bf16.mxu0 0
        %1334 = vmatmul.mubr.bf16.gmra.mrb[0].mxu0 %v851
        %v1335 = vpop.f32.mrb[0].mxu0
        %v1336 = vadd.f32 %v788, %v1335
        %v1337 = vpop.f32.mrb[0].mxu0
        %v1338 = vpop.f32.mrb[0].mxu0
        %v1339 = vadd.f32 %v788, %v1338
        %v1340 = vpop.f32.mrb[0].mxu0
        %1341 = vmatprep.mubr.bf16.mxu0 0
        %1342 = vmatmul.mubr.bf16.gmra.mrb[0].mxu0 %v854
        %v1343 = vpop.f32.mrb[0].mxu0
        %v1344 = vadd.f32 %v788, %v1343
        %v1345 = vpop.f32.mrb[0].mxu0
        %v1346 = vpop.f32.mrb[0].mxu0
        %v1347 = vadd.f32 %v788, %v1346
        %v1348 = vpop.f32.mrb[0].mxu0
        %1349 = vmatprep.mubr.bf16.mxu0 0
        %1350 = vmatmul.mubr.bf16.gmra.mrb[0].mxu0 %v857
        %v1351 = vpop.f32.mrb[0].mxu0
        %v1352 = vadd.f32 %v788, %v1351
        %v1353 = vpop.f32.mrb[0].mxu0
        %v1354 = vpop.f32.mrb[0].mxu0
        %v1355 = vadd.f32 %v788, %v1354
        %v1356 = vpop.f32.mrb[0].mxu0
        %1357 = vmatprep.mubr.bf16.mxu0 0
        %1358 = vmatmul.mubr.bf16.gmra.mrb[0].mxu0 %v860
        %v1359 = vpop.f32.mrb[0].mxu0
        %v1360 = vadd.f32 %v788, %v1359
        %v1361 = vpop.f32.mrb[0].mxu0
        %v1362 = vpop.f32.mrb[0].mxu0
        %v1363 = vadd.f32 %v788, %v1362
        %v1364 = vpop.f32.mrb[0].mxu0
        %1365 = vmatprep.mubr.bf16.mxu0 0
        %1366 = vmatmul.mubr.bf16.gmra.mrb[0].mxu0 %v863
        %v1367 = vpop.f32.mrb[0].mxu0
        %v1368 = vadd.f32 %v788, %v1367
        %v1369 = vpop.f32.mrb[0].mxu0
        %v1370 = vpop.f32.mrb[0].mxu0
        %v1371 = vadd.f32 %v788, %v1370
        %v1372 = vpop.f32.mrb[0].mxu0
        %1373 = vmatprep.mubr.bf16.mxu0 0
        %1374 = vmatmul.mubr.bf16.gmra.mrb[0].mxu0 %v866
        %v1375 = vpop.f32.mrb[0].mxu0
        %v1376 = vadd.f32 %v788, %v1375
        %v1377 = vpop.f32.mrb[0].mxu0
        %v1378 = vpop.f32.mrb[0].mxu0
        %v1379 = vadd.f32 %v788, %v1378
        %v1380 = vpop.f32.mrb[0].mxu0
        %1381 = vmatprep.mubr.bf16.mxu0 0
        %1382 = vmatmul.mubr.bf16.gmra.mrb[0].mxu0 %v869
        %v1383 = vpop.f32.mrb[0].mxu0
        %v1384 = vadd.f32 %v788, %v1383
        %v1385 = vpop.f32.mrb[0].mxu0
        %v1386 = vpop.f32.mrb[0].mxu0
        %v1387 = vadd.f32 %v788, %v1386
        %v1388 = vpop.f32.mrb[0].mxu0
        %1389 = vmatprep.mubr.bf16.mxu0 0
        %1390 = vmatmul.mubr.bf16.gmra.mrb[0].mxu0 %v872
        %v1391 = vpop.f32.mrb[0].mxu0
        %v1392 = vadd.f32 %v788, %v1391
        %v1393 = vpop.f32.mrb[0].mxu0
        %v1394 = vpop.f32.mrb[0].mxu0
        %v1395 = vadd.f32 %v788, %v1394
        %v1396 = vpop.f32.mrb[0].mxu0
        %1397 = vmatprep.mubr.bf16.mxu0 0
        %1398 = vmatmul.mubr.bf16.gmra.mrb[0].mxu0 %v875
        %v1399 = vpop.f32.mrb[0].mxu0
        %v1400 = vadd.f32 %v788, %v1399
        %v1401 = vpop.f32.mrb[0].mxu0
        %v1402 = vpop.f32.mrb[0].mxu0
        %v1403 = vadd.f32 %v788, %v1402
        %v1404 = vpop.f32.mrb[0].mxu0
        %1405 = vmatprep.mubr.bf16.mxu0 0
        %1406 = vmatmul.mubr.bf16.gmra.mrb[0].mxu0 %v878
        %v1407 = vpop.f32.mrb[0].mxu0
        %v1408 = vadd.f32 %v788, %v1407
        %v1409 = vpop.f32.mrb[0].mxu0
        %v1410 = vpop.f32.mrb[0].mxu0
        %v1411 = vadd.f32 %v788, %v1410
        %v1412 = vpop.f32.mrb[0].mxu0
        %1413 = vmatprep.mubr.bf16.mxu0 0
        %1414 = vmatmul.mubr.bf16.gmra.mrb[0].mxu0 %v881
        %v1415 = vpop.f32.mrb[0].mxu0
        %v1416 = vadd.f32 %v788, %v1415
        %v1417 = vpop.f32.mrb[0].mxu0
        %v1418 = vpop.f32.mrb[0].mxu0
        %v1419 = vadd.f32 %v788, %v1418
        %v1420 = vpop.f32.mrb[0].mxu0
        %1421 = vmatprep.mubr.bf16.mxu0 0
        %1422 = vmatmul.mubr.bf16.gmra.mrb[0].mxu0 %v884
        %v1423 = vpop.f32.mrb[0].mxu0
        %v1424 = vadd.f32 %v788, %v1423
        %v1425 = vpop.f32.mrb[0].mxu0
        %v1426 = vpop.f32.mrb[0].mxu0
        %v1427 = vadd.f32 %v788, %v1426
        %v1428 = vpop.f32.mrb[0].mxu0
        %1429 = vmatprep.mubr.bf16.mxu0 0
        %1430 = vmatmul.mubr.bf16.gmra.mrb[0].mxu0 %v887
        %v1431 = vpop.f32.mrb[0].mxu0
        %v1432 = vadd.f32 %v788, %v1431
        %v1433 = vpop.f32.mrb[0].mxu0
        %v1434 = vpop.f32.mrb[0].mxu0
        %v1435 = vadd.f32 %v788, %v1434
        %v1436 = vpop.f32.mrb[0].mxu0
        %1437 = vmatprep.mubr.bf16.mxu0 0
        %1438 = vmatmul.mubr.bf16.gmra.mrb[0].mxu0 %v890
        %v1439 = vpop.f32.mrb[0].mxu0
        %v1440 = vadd.f32 %v788, %v1439
        %v1441 = vpop.f32.mrb[0].mxu0
        %v1442 = vpop.f32.mrb[0].mxu0
        %v1443 = vadd.f32 %v788, %v1442
        %v1444 = vpop.f32.mrb[0].mxu0
        %1445 = vmatprep.mubr.bf16.mxu0 0
        %1446 = vmatmul.mubr.bf16.gmra.mrb[0].mxu0 %v893
        %v1447 = vpop.f32.mrb[0].mxu0
        %v1448 = vadd.f32 %v788, %v1447
        %v1449 = vpop.f32.mrb[0].mxu0
        %v1450 = vpop.f32.mrb[0].mxu0
        %v1451 = vadd.f32 %v788, %v1450
        %v1452 = vpop.f32.mrb[0].mxu0
        %1453 = vmatprep.mubr.bf16.mxu0 0
        %1454 = vmatmul.mubr.bf16.gmra.mrb[0].mxu0 %v896
        %v1455 = vpop.f32.mrb[0].mxu0
        %v1456 = vadd.f32 %v788, %v1455
        %v1457 = vpop.f32.mrb[0].mxu0
        %v1458 = vpop.f32.mrb[0].mxu0
        %v1459 = vadd.f32 %v788, %v1458
        %v1460 = vpop.f32.mrb[0].mxu0
        %1461 = vmatprep.mubr.bf16.mxu0 0
        %1462 = vmatmul.mubr.bf16.gmra.mrb[0].mxu0 %v899
        %v1463 = vpop.f32.mrb[0].mxu0
        %v1464 = vadd.f32 %v788, %v1463
        %v1465 = vpop.f32.mrb[0].mxu0
        %v1466 = vpop.f32.mrb[0].mxu0
        %v1467 = vadd.f32 %v788, %v1466
        %v1468 = vpop.f32.mrb[0].mxu0
        %1469 = vmatprep.mubr.bf16.mxu0 0
        %1470 = vmatmul.mubr.bf16.gmra.mrb[0].mxu0 %v902
        %v1471 = vpop.f32.mrb[0].mxu0
        %v1472 = vadd.f32 %v788, %v1471
        %v1473 = vpop.f32.mrb[0].mxu0
        %v1474 = vpop.f32.mrb[0].mxu0
        %v1475 = vadd.f32 %v788, %v1474
        %v1476 = vpop.f32.mrb[0].mxu0
        %1477 = vmatprep.mubr.bf16.mxu0 0
        %1478 = vmatmul.mubr.bf16.gmra.mrb[0].mxu0 %v905
        %v1479 = vpop.f32.mrb[0].mxu0
        %v1480 = vadd.f32 %v788, %v1479
        %v1481 = vpop.f32.mrb[0].mxu0
        %v1482 = vpop.f32.mrb[0].mxu0
        %v1483 = vadd.f32 %v788, %v1482
        %v1484 = vpop.f32.mrb[0].mxu0
        %1485 = vmatprep.mubr.bf16.mxu0 0
        %1486 = vmatmul.mubr.bf16.gmra.mrb[0].mxu0 %v908
        %v1487 = vpop.f32.mrb[0].mxu0
        %v1488 = vadd.f32 %v788, %v1487
        %v1489 = vpop.f32.mrb[0].mxu0
        %v1490 = vpop.f32.mrb[0].mxu0
        %v1491 = vadd.f32 %v788, %v1490
        %v1492 = vpop.f32.mrb[0].mxu0
        %1493 = vmatprep.mubr.bf16.mxu0 0
        %1494 = vmatmul.mubr.bf16.gmra.mrb[0].mxu0 %v911
        %v1495 = vpop.f32.mrb[0].mxu0
        %v1496 = vadd.f32 %v788, %v1495
        %v1497 = vpop.f32.mrb[0].mxu0
        %v1498 = vpop.f32.mrb[0].mxu0
        %v1499 = vadd.f32 %v788, %v1498
        %v1500 = vpop.f32.mrb[0].mxu0
        %1501 = vmatprep.mubr.bf16.mxu0 0
        %1502 = vmatmul.mubr.bf16.gmra.mrb[0].mxu0 %v914
        %v1503 = vpop.f32.mrb[0].mxu0
        %v1504 = vadd.f32 %v788, %v1503
        %v1505 = vpop.f32.mrb[0].mxu0
        %v1506 = vpop.f32.mrb[0].mxu0
        %v1507 = vadd.f32 %v788, %v1506
        %v1508 = vpop.f32.mrb[0].mxu0
        %1509 = vmatprep.mubr.bf16.mxu0 0
        %1510 = vmatmul.mubr.bf16.gmra.mrb[0].mxu0 %v917
        %v1511 = vpop.f32.mrb[0].mxu0
        %v1512 = vadd.f32 %v788, %v1511
        %v1513 = vpop.f32.mrb[0].mxu0
        %v1514 = vpop.f32.mrb[0].mxu0
        %v1515 = vadd.f32 %v788, %v1514
        %v1516 = vpop.f32.mrb[0].mxu0
        %1517 = vmatprep.mubr.bf16.mxu0 0
        %1518 = vmatmul.mubr.bf16.gmra.mrb[0].mxu0 %v920
        %v1519 = vpop.f32.mrb[0].mxu0
        %v1520 = vadd.f32 %v788, %v1519
        %v1521 = vpop.f32.mrb[0].mxu0
        %v1522 = vpop.f32.mrb[0].mxu0
        %v1523 = vadd.f32 %v788, %v1522
        %v1524 = vpop.f32.mrb[0].mxu0
        %1525 = vmatprep.mubr.bf16.mxu0 0
        %1526 = vmatmul.mubr.bf16.gmra.mrb[0].mxu0 %v923
        %v1527 = vpop.f32.mrb[0].mxu0
        %v1528 = vadd.f32 %v788, %v1527
        %v1529 = vpop.f32.mrb[0].mxu0
        %v1530 = vpop.f32.mrb[0].mxu0
        %v1531 = vadd.f32 %v788, %v1530
        %v1532 = vpop.f32.mrb[0].mxu0
        %1533 = vmatprep.mubr.bf16.mxu0 0
        %1534 = vmatmul.mubr.bf16.gmra.mrb[0].mxu0 %v926
        %v1535 = vpop.f32.mrb[0].mxu0
        %v1536 = vadd.f32 %v788, %v1535
        %v1537 = vpop.f32.mrb[0].mxu0
        %v1538 = vpop.f32.mrb[0].mxu0
        %v1539 = vadd.f32 %v788, %v1538
        %v1540 = vpop.f32.mrb[0].mxu0
        %1541 = vmatprep.mubr.bf16.mxu0 0
        %1542 = vmatmul.mubr.bf16.gmra.mrb[0].mxu0 %v929
        %v1543 = vpop.f32.mrb[0].mxu0
        %v1544 = vadd.f32 %v788, %v1543
        %v1545 = vpop.f32.mrb[0].mxu0
        %v1546 = vpop.f32.mrb[0].mxu0
        %v1547 = vadd.f32 %v788, %v1546
        %v1548 = vpop.f32.mrb[0].mxu0
        %1549 = vmatprep.mubr.bf16.mxu0 0
        %1550 = vmatmul.mubr.bf16.gmra.mrb[0].mxu0 %v932
        %v1551 = vpop.f32.mrb[0].mxu0
        %v1552 = vadd.f32 %v788, %v1551
        %v1553 = vpop.f32.mrb[0].mxu0
        %v1554 = vpop.f32.mrb[0].mxu0
        %v1555 = vadd.f32 %v788, %v1554
        %v1556 = vpop.f32.mrb[0].mxu0
        %1557 = vmatprep.mubr.bf16.mxu0 0
        %1558 = vmatmul.mubr.bf16.gmra.mrb[0].mxu0 %v935
        %v1559 = vpop.f32.mrb[0].mxu0
        %v1560 = vadd.f32 %v788, %v1559
        %v1561 = vpop.f32.mrb[0].mxu0
        %v1562 = vpop.f32.mrb[0].mxu0
        %v1563 = vadd.f32 %v788, %v1562
        %v1564 = vpop.f32.mrb[0].mxu0
        %1565 = vmatprep.mubr.bf16.mxu0 0
        %1566 = vmatmul.mubr.bf16.gmra.mrb[0].mxu0 %v938
        %v1567 = vpop.f32.mrb[0].mxu0
        %v1568 = vadd.f32 %v788, %v1567
        %v1569 = vpop.f32.mrb[0].mxu0
        %v1570 = vpop.f32.mrb[0].mxu0
        %v1571 = vadd.f32 %v788, %v1570
        %v1572 = vpop.f32.mrb[0].mxu0
        %1573 = vmatprep.mubr.bf16.mxu0 0
        %1574 = vmatmul.mubr.bf16.gmra.mrb[0].mxu0 %v941
        %v1575 = vpop.f32.mrb[0].mxu0
        %v1576 = vadd.f32 %v788, %v1575
        %v1577 = vpop.f32.mrb[0].mxu0
        %v1578 = vpop.f32.mrb[0].mxu0
        %v1579 = vadd.f32 %v788, %v1578
        %v1580 = vpop.f32.mrb[0].mxu0
        %1581 = vmatprep.mubr.bf16.mxu0 0
        %1582 = vmatmul.mubr.bf16.gmra.mrb[0].mxu0 %v944
        %v1583 = vpop.f32.mrb[0].mxu0
        %v1584 = vadd.f32 %v788, %v1583
        %v1585 = vpop.f32.mrb[0].mxu0
        %v1586 = vpop.f32.mrb[0].mxu0
        %v1587 = vadd.f32 %v788, %v1586
        %v1588 = vpop.f32.mrb[0].mxu0
        %1589 = vmatprep.mubr.bf16.mxu0 0
        %1590 = vmatmul.mubr.bf16.gmra.mrb[0].mxu0 %v947
        %v1591 = vpop.f32.mrb[0].mxu0
        %v1592 = vadd.f32 %v788, %v1591
        %v1593 = vpop.f32.mrb[0].mxu0
        %v1594 = vpop.f32.mrb[0].mxu0
        %v1595 = vadd.f32 %v788, %v1594
        %v1596 = vpop.f32.mrb[0].mxu0
        %1597 = vmatprep.mubr.bf16.mxu0 0
        %1598 = vmatmul.mubr.bf16.gmra.mrb[0].mxu0 %v950
        %v1599 = vpop.f32.mrb[0].mxu0
        %v1600 = vadd.f32 %v788, %v1599
        %v1601 = vpop.f32.mrb[0].mxu0
        %v1602 = vpop.f32.mrb[0].mxu0
        %v1603 = vadd.f32 %v788, %v1602
        %v1604 = vpop.f32.mrb[0].mxu0
        %1605 = vmatprep.mubr.bf16.mxu0 0
        %1606 = vmatmul.mubr.bf16.gmra.mrb[0].mxu0 %v953
        %v1607 = vpop.f32.mrb[0].mxu0
        %v1608 = vadd.f32 %v788, %v1607
        %v1609 = vpop.f32.mrb[0].mxu0
        %v1610 = vpop.f32.mrb[0].mxu0
        %v1611 = vadd.f32 %v788, %v1610
        %v1612 = vpop.f32.mrb[0].mxu0
        %1613 = vmatprep.mubr.bf16.mxu0 0
        %1614 = vmatmul.mubr.bf16.gmra.mrb[0].mxu0 %v956
        %v1615 = vpop.f32.mrb[0].mxu0
        %v1616 = vadd.f32 %v788, %v1615
        %v1617 = vpop.f32.mrb[0].mxu0
        %v1618 = vpop.f32.mrb[0].mxu0
        %v1619 = vadd.f32 %v788, %v1618
        %v1620 = vpop.f32.mrb[0].mxu0
        %1621 = vmatprep.mubr.bf16.mxu0 0
        %1622 = vmatmul.mubr.bf16.gmra.mrb[0].mxu0 %v959
        %v1623 = vpop.f32.mrb[0].mxu0
        %v1624 = vadd.f32 %v788, %v1623
        %v1625 = vpop.f32.mrb[0].mxu0
        %v1626 = vpop.f32.mrb[0].mxu0
        %v1627 = vadd.f32 %v788, %v1626
        %v1628 = vpop.f32.mrb[0].mxu0
        %1629 = vmatprep.mubr.bf16.mxu0 0
        %1630 = vmatmul.mubr.bf16.gmra.mrb[0].mxu0 %v962
        %v1631 = vpop.f32.mrb[0].mxu0
        %v1632 = vadd.f32 %v788, %v1631
        %v1633 = vpop.f32.mrb[0].mxu0
        %v1634 = vpop.f32.mrb[0].mxu0
        %v1635 = vadd.f32 %v788, %v1634
        %v1636 = vpop.f32.mrb[0].mxu0
        %1637 = vmatprep.mubr.bf16.mxu0 0
        %1638 = vmatmul.mubr.bf16.gmra.mrb[0].mxu0 %v965
        %v1639 = vpop.f32.mrb[0].mxu0
        %v1640 = vadd.f32 %v788, %v1639
        %v1641 = vpop.f32.mrb[0].mxu0
        %v1642 = vpop.f32.mrb[0].mxu0
        %v1643 = vadd.f32 %v788, %v1642
        %v1644 = vpop.f32.mrb[0].mxu0
        %1645 = vmatprep.mubr.bf16.mxu0 0
        %1646 = vmatmul.mubr.bf16.gmra.mrb[0].mxu0 %v968
        %v1647 = vpop.f32.mrb[0].mxu0
        %v1648 = vadd.f32 %v788, %v1647
        %v1649 = vpop.f32.mrb[0].mxu0
        %v1650 = vpop.f32.mrb[0].mxu0
        %v1651 = vadd.f32 %v788, %v1650
        %v1652 = vpop.f32.mrb[0].mxu0
        %1653 = vmatprep.mubr.bf16.mxu0 0
        %1654 = vmatmul.mubr.bf16.gmra.mrb[0].mxu0 %v971
        %v1655 = vpop.f32.mrb[0].mxu0
        %v1656 = vadd.f32 %v788, %v1655
        %v1657 = vpop.f32.mrb[0].mxu0
        %v1658 = vpop.f32.mrb[0].mxu0
        %v1659 = vadd.f32 %v788, %v1658
        %v1660 = vpop.f32.mrb[0].mxu0
        %1661 = vmatprep.mubr.bf16.mxu0 0
        %1662 = vmatmul.mubr.bf16.gmra.mrb[0].mxu0 %v974
        %v1663 = vpop.f32.mrb[0].mxu0
        %v1664 = vadd.f32 %v788, %v1663
        %v1665 = vpop.f32.mrb[0].mxu0
        %v1666 = vpop.f32.mrb[0].mxu0
        %v1667 = vadd.f32 %v788, %v1666
        %v1668 = vpop.f32.mrb[0].mxu0
        %1669 = vmatprep.mubr.bf16.mxu0 0
        %1670 = vmatmul.mubr.bf16.gmra.mrb[0].mxu0 %v977
        %v1671 = vpop.f32.mrb[0].mxu0
        %v1672 = vadd.f32 %v788, %v1671
        %v1673 = vpop.f32.mrb[0].mxu0
        %v1674 = vpop.f32.mrb[0].mxu0
        %v1675 = vadd.f32 %v788, %v1674
        %v1676 = vpop.f32.mrb[0].mxu0
        %1677 = vmatprep.mubr.bf16.mxu0 0
        %1678 = vmatmul.mubr.bf16.gmra.mrb[0].mxu0 %v980
        %v1679 = vpop.f32.mrb[0].mxu0
        %v1680 = vadd.f32 %v788, %v1679
        %v1681 = vpop.f32.mrb[0].mxu0
        %v1682 = vpop.f32.mrb[0].mxu0
        %v1683 = vadd.f32 %v788, %v1682
        %v1684 = vpop.f32.mrb[0].mxu0
        %1685 = vmatprep.mubr.bf16.mxu0 0
        %1686 = vmatmul.mubr.bf16.gmra.mrb[0].mxu0 %v983
        %v1687 = vpop.f32.mrb[0].mxu0
        %v1688 = vadd.f32 %v788, %v1687
        %v1689 = vpop.f32.mrb[0].mxu0
        %v1690 = vpop.f32.mrb[0].mxu0
        %v1691 = vadd.f32 %v788, %v1690
        %v1692 = vpop.f32.mrb[0].mxu0
        %1693 = vmatprep.mubr.bf16.mxu0 0
        %1694 = vmatmul.mubr.bf16.gmra.mrb[0].mxu0 %v986
        %v1695 = vpop.f32.mrb[0].mxu0
        %v1696 = vadd.f32 %v788, %v1695
        %v1697 = vpop.f32.mrb[0].mxu0
        %v1698 = vpop.f32.mrb[0].mxu0
        %v1699 = vadd.f32 %v788, %v1698
        %v1700 = vpop.f32.mrb[0].mxu0
        %1701 = vmatprep.mubr.bf16.mxu0 0
        %1702 = vmatmul.mubr.bf16.gmra.mrb[0].mxu0 %v989
        %v1703 = vpop.f32.mrb[0].mxu0
        %v1704 = vadd.f32 %v788, %v1703
        %v1705 = vpop.f32.mrb[0].mxu0
        %v1706 = vpop.f32.mrb[0].mxu0
        %v1707 = vadd.f32 %v788, %v1706
        %v1708 = vpop.f32.mrb[0].mxu0
        %1709 = vmatprep.mubr.bf16.mxu0 0
        %1710 = vmatmul.mubr.bf16.gmra.mrb[0].mxu0 %v992
        %v1711 = vpop.f32.mrb[0].mxu0
        %v1712 = vadd.f32 %v788, %v1711
        %v1713 = vpop.f32.mrb[0].mxu0
        %v1714 = vpop.f32.mrb[0].mxu0
        %v1715 = vadd.f32 %v788, %v1714
        %v1716 = vpop.f32.mrb[0].mxu0
        %1717 = vmatprep.mubr.bf16.mxu0 0
        %1718 = vmatmul.mubr.bf16.gmra.mrb[0].mxu0 %v995
        %v1719 = vpop.f32.mrb[0].mxu0
        %v1720 = vadd.f32 %v788, %v1719
        %v1721 = vpop.f32.mrb[0].mxu0
        %v1722 = vpop.f32.mrb[0].mxu0
        %v1723 = vadd.f32 %v788, %v1722
        %v1724 = vpop.f32.mrb[0].mxu0
        %1725 = vmatprep.mubr.bf16.mxu0 0
        %1726 = vmatmul.mubr.bf16.gmra.mrb[0].mxu0 %v998
        %v1727 = vpop.f32.mrb[0].mxu0
        %v1728 = vadd.f32 %v788, %v1727
        %v1729 = vpop.f32.mrb[0].mxu0
        %v1730 = vpop.f32.mrb[0].mxu0
        %v1731 = vadd.f32 %v788, %v1730
        %v1732 = vpop.f32.mrb[0].mxu0
        %1733 = vmatprep.mubr.bf16.mxu0 0
        %1734 = vmatmul.mubr.bf16.gmra.mrb[0].mxu0 %v1001
        %v1735 = vpop.f32.mrb[0].mxu0
        %v1736 = vadd.f32 %v788, %v1735
        %v1737 = vpop.f32.mrb[0].mxu0
        %v1738 = vpop.f32.mrb[0].mxu0
        %v1739 = vadd.f32 %v788, %v1738
        %v1740 = vpop.f32.mrb[0].mxu0
        %1741 = vmatprep.mubr.bf16.mxu0 0
        %1742 = vmatmul.mubr.bf16.gmra.mrb[0].mxu0 %v1004
        %v1743 = vpop.f32.mrb[0].mxu0
        %v1744 = vadd.f32 %v788, %v1743
        %v1745 = vpop.f32.mrb[0].mxu0
        %v1746 = vpop.f32.mrb[0].mxu0
        %v1747 = vadd.f32 %v788, %v1746
        %v1748 = vpop.f32.mrb[0].mxu0
        %1749 = vmatprep.mubr.bf16.mxu0 0
        %1750 = vmatmul.mubr.bf16.gmra.mrb[0].mxu0 %v1007
        %v1751 = vpop.f32.mrb[0].mxu0
        %v1752 = vadd.f32 %v788, %v1751
        %v1753 = vpop.f32.mrb[0].mxu0
        %v1754 = vpop.f32.mrb[0].mxu0
        %v1755 = vadd.f32 %v788, %v1754
        %v1756 = vpop.f32.mrb[0].mxu0
        %1757 = vmatprep.mubr.bf16.mxu0 0
        %1758 = vmatmul.mubr.bf16.gmra.mrb[0].mxu0 %v1010
        %v1759 = vpop.f32.mrb[0].mxu0
        %v1760 = vadd.f32 %v788, %v1759
        %v1761 = vpop.f32.mrb[0].mxu0
        %v1762 = vpop.f32.mrb[0].mxu0
        %v1763 = vadd.f32 %v788, %v1762
        %v1764 = vpop.f32.mrb[0].mxu0
        %1765 = vmatprep.mubr.bf16.mxu0 0
        %1766 = vmatmul.mubr.bf16.gmra.mrb[0].mxu0 %v1013
        %v1767 = vpop.f32.mrb[0].mxu0
        %v1768 = vadd.f32 %v788, %v1767
        %v1769 = vpop.f32.mrb[0].mxu0
        %v1770 = vpop.f32.mrb[0].mxu0
        %v1771 = vadd.f32 %v788, %v1770
        %v1772 = vpop.f32.mrb[0].mxu0
        %1773 = vmatprep.mubr.bf16.mxu0 0
        %1774 = vmatmul.mubr.bf16.gmra.mrb[0].mxu0 %v1016
        %v1775 = vpop.f32.mrb[0].mxu0
        %v1776 = vadd.f32 %v788, %v1775
        %v1777 = vpop.f32.mrb[0].mxu0
        %v1778 = vpop.f32.mrb[0].mxu0
        %v1779 = vadd.f32 %v788, %v1778
        %v1780 = vpop.f32.mrb[0].mxu0
        %1781 = vmatprep.mubr.bf16.mxu0 0
        %1782 = vmatmul.mubr.bf16.gmra.mrb[0].mxu0 %v1019
        %v1783 = vpop.f32.mrb[0].mxu0
        %v1784 = vadd.f32 %v788, %v1783
        %v1785 = vpop.f32.mrb[0].mxu0
        %v1786 = vpop.f32.mrb[0].mxu0
        %v1787 = vadd.f32 %v788, %v1786
        %v1788 = vpop.f32.mrb[0].mxu0
        %1789 = vmatprep.mubr.bf16.mxu0 0
        %1790 = vmatmul.mubr.bf16.gmra.mrb[0].mxu0 %v1022
        %v1791 = vpop.f32.mrb[0].mxu0
        %v1792 = vadd.f32 %v788, %v1791
        %v1793 = vpop.f32.mrb[0].mxu0
        %v1794 = vpop.f32.mrb[0].mxu0
        %v1795 = vadd.f32 %v788, %v1794
        %v1796 = vpop.f32.mrb[0].mxu0
        %1797 = vmatprep.mubr.bf16.mxu0 0
        %1798 = vmatmul.mubr.bf16.gmra.mrb[0].mxu0 %v1025
        %v1799 = vpop.f32.mrb[0].mxu0
        %v1800 = vadd.f32 %v788, %v1799
        %v1801 = vpop.f32.mrb[0].mxu0
        %v1802 = vpop.f32.mrb[0].mxu0
        %v1803 = vadd.f32 %v788, %v1802
        %v1804 = vpop.f32.mrb[0].mxu0
        %1805 = vmatprep.mubr.bf16.mxu0 0
        %1806 = vmatmul.mubr.bf16.gmra.mrb[0].mxu0 %v1028
        %v1807 = vpop.f32.mrb[0].mxu0
        %v1808 = vadd.f32 %v788, %v1807
        %v1809 = vpop.f32.mrb[0].mxu0
        %v1810 = vpop.f32.mrb[0].mxu0
        %v1811 = vadd.f32 %v788, %v1810
        %v1812 = vpop.f32.mrb[0].mxu0
        %1813 = vmatprep.mubr.bf16.mxu0 0
        %1814 = vmatmul.mubr.bf16.gmra.mrb[0].mxu0 %v1031
        %v1815 = vpop.f32.mrb[0].mxu0
        %v1816 = vadd.f32 %v788, %v1815
        %v1817 = vpop.f32.mrb[0].mxu0
        %v1818 = vpop.f32.mrb[0].mxu0
        %v1819 = vadd.f32 %v788, %v1818
        %v1820 = vpop.f32.mrb[0].mxu0
        %1821 = vmatprep.mubr.bf16.mxu0 0
        %1822 = vmatmul.mubr.bf16.gmra.mrb[0].mxu0 %v1034
        %v1823 = vpop.f32.mrb[0].mxu0
        %v1824 = vadd.f32 %v788, %v1823
        %v1825 = vpop.f32.mrb[0].mxu0
        %v1826 = vpop.f32.mrb[0].mxu0
        %v1827 = vadd.f32 %v788, %v1826
        %v1828 = vpop.f32.mrb[0].mxu0
        %1829 = vmatprep.mubr.bf16.mxu0 0
        %1830 = vmatmul.mubr.bf16.gmra.mrb[0].mxu0 %v1037
        %v1831 = vpop.f32.mrb[0].mxu0
        %v1832 = vadd.f32 %v788, %v1831
        %v1833 = vpop.f32.mrb[0].mxu0
        %v1834 = vpop.f32.mrb[0].mxu0
        %v1835 = vadd.f32 %v788, %v1834
        %v1836 = vpop.f32.mrb[0].mxu0
        %1837 = vmatprep.mubr.bf16.mxu0 0
        %1838 = vmatmul.mubr.bf16.gmra.mrb[0].mxu0 %v1040
        %v1839 = vpop.f32.mrb[0].mxu0
        %v1840 = vadd.f32 %v788, %v1839
        %v1841 = vpop.f32.mrb[0].mxu0
        %v1842 = vpop.f32.mrb[0].mxu0
        %v1843 = vadd.f32 %v788, %v1842
        %v1844 = vpop.f32.mrb[0].mxu0
        %1845 = vmatprep.mubr.bf16.mxu0 0
        %1846 = vmatmul.mubr.bf16.gmra.mrb[0].mxu0 %v1043
        %v1847 = vpop.f32.mrb[0].mxu0
        %v1848 = vadd.f32 %v788, %v1847
        %v1849 = vpop.f32.mrb[0].mxu0
        %v1850 = vpop.f32.mrb[0].mxu0
        %v1851 = vadd.f32 %v788, %v1850
        %v1852 = vpop.f32.mrb[0].mxu0
        %1853 = vmatprep.mubr.bf16.mxu0 0
        %1854 = vmatmul.mubr.bf16.gmra.mrb[0].mxu0 %v1046
        %v1855 = vpop.f32.mrb[0].mxu0
        %v1856 = vadd.f32 %v788, %v1855
        %v1857 = vpop.f32.mrb[0].mxu0
        %v1858 = vpop.f32.mrb[0].mxu0
        %v1859 = vadd.f32 %v788, %v1858
        %v1860 = vpop.f32.mrb[0].mxu0
        %1861 = vmatprep.mubr.bf16.mxu0 0
        %1862 = vmatmul.mubr.bf16.gmra.mrb[0].mxu0 %v1049
        %v1863 = vpop.f32.mrb[0].mxu0
        %v1864 = vadd.f32 %v788, %v1863
        %v1865 = vpop.f32.mrb[0].mxu0
        %v1866 = vpop.f32.mrb[0].mxu0
        %v1867 = vadd.f32 %v788, %v1866
        %v1868 = vpop.f32.mrb[0].mxu0
        %1869 = vmatprep.mubr.bf16.mxu0 0
        %1870 = vmatmul.mubr.bf16.gmra.mrb[0].mxu0 %v1052
        %v1871 = vpop.f32.mrb[0].mxu0
        %v1872 = vadd.f32 %v788, %v1871
        %v1873 = vpop.f32.mrb[0].mxu0
        %v1874 = vpop.f32.mrb[0].mxu0
        %v1875 = vadd.f32 %v788, %v1874
        %v1876 = vpop.f32.mrb[0].mxu0
        %1877 = vmatprep.mubr.bf16.mxu0 0
        %1878 = vmatmul.mubr.bf16.gmra.mrb[0].mxu0 %v1055
        %v1879 = vpop.f32.mrb[0].mxu0
        %v1880 = vadd.f32 %v788, %v1879
        %v1881 = vpop.f32.mrb[0].mxu0
        %v1882 = vpop.f32.mrb[0].mxu0
        %v1883 = vadd.f32 %v788, %v1882
        %v1884 = vpop.f32.mrb[0].mxu0
        %1885 = vmatprep.mubr.bf16.mxu0 0
        %1886 = vmatmul.mubr.bf16.gmra.mrb[0].mxu0 %v1058
        %v1887 = vpop.f32.mrb[0].mxu0
        %v1888 = vadd.f32 %v788, %v1887
        %v1889 = vpop.f32.mrb[0].mxu0
        %v1890 = vpop.f32.mrb[0].mxu0
        %v1891 = vadd.f32 %v788, %v1890
        %v1892 = vpop.f32.mrb[0].mxu0
        %1893 = vmatprep.mubr.bf16.mxu0 0
        %1894 = vmatmul.mubr.bf16.gmra.mrb[0].mxu0 %v1061
        %v1895 = vpop.f32.mrb[0].mxu0
        %v1896 = vadd.f32 %v788, %v1895
        %v1897 = vpop.f32.mrb[0].mxu0
        %v1898 = vpop.f32.mrb[0].mxu0
        %v1899 = vadd.f32 %v788, %v1898
        %v1900 = vpop.f32.mrb[0].mxu0
        %1901 = vmatprep.mubr.bf16.mxu0 0
        %1902 = vmatmul.mubr.bf16.gmra.mrb[0].mxu0 %v1064
        %v1903 = vpop.f32.mrb[0].mxu0
        %v1904 = vadd.f32 %v788, %v1903
        %v1905 = vpop.f32.mrb[0].mxu0
        %v1906 = vpop.f32.mrb[0].mxu0
        %v1907 = vadd.f32 %v788, %v1906
        %v1908 = vpop.f32.mrb[0].mxu0
        %1909 = vmatprep.mubr.bf16.mxu0 0
        %1910 = vmatmul.mubr.bf16.gmra.mrb[0].mxu0 %v1067
        %v1911 = vpop.f32.mrb[0].mxu0
        %v1912 = vadd.f32 %v788, %v1911
        %v1913 = vpop.f32.mrb[0].mxu0
        %v1914 = vpop.f32.mrb[0].mxu0
        %v1915 = vadd.f32 %v788, %v1914
        %v1916 = vpop.f32.mrb[0].mxu0
        %1917 = vmatprep.mubr.bf16.mxu0 0
        %1918 = vmatmul.mubr.bf16.gmra.mrb[0].mxu0 %v1070
        %v1919 = vpop.f32.mrb[0].mxu0
        %v1920 = vadd.f32 %v788, %v1919
        %v1921 = vpop.f32.mrb[0].mxu0
        %v1922 = vpop.f32.mrb[0].mxu0
        %v1923 = vadd.f32 %v788, %v1922
        %v1924 = vpop.f32.mrb[0].mxu0
        %1925 = vmatprep.mubr.bf16.mxu0 0
        %1926 = vmatmul.mubr.bf16.gmra.mrb[0].mxu0 %v1073
        %v1927 = vpop.f32.mrb[0].mxu0
        %v1928 = vadd.f32 %v788, %v1927
        %v1929 = vpop.f32.mrb[0].mxu0
        %v1930 = vpop.f32.mrb[0].mxu0
        %v1931 = vadd.f32 %v788, %v1930
        %v1932 = vpop.f32.mrb[0].mxu0
        %1933 = vmatprep.mubr.bf16.mxu0 0
        %1934 = vmatmul.mubr.bf16.gmra.mrb[0].mxu0 %v1076
        %v1935 = vpop.f32.mrb[0].mxu0
        %v1936 = vadd.f32 %v788, %v1935
        %v1937 = vpop.f32.mrb[0].mxu0
        %v1938 = vpop.f32.mrb[0].mxu0
        %v1939 = vadd.f32 %v788, %v1938
        %v1940 = vpop.f32.mrb[0].mxu0
        %1941 = vmatprep.mubr.bf16.mxu0 0
        %1942 = vmatmul.mubr.bf16.gmra.mrb[0].mxu0 %v1079
        %v1943 = vpop.f32.mrb[0].mxu0
        %v1944 = vadd.f32 %v788, %v1943
        %v1945 = vpop.f32.mrb[0].mxu0
        %v1946 = vpop.f32.mrb[0].mxu0
        %v1947 = vadd.f32 %v788, %v1946
        %v1948 = vpop.f32.mrb[0].mxu0
        %1949 = vmatprep.mubr.bf16.mxu0 0
        %1950 = vmatmul.mubr.bf16.gmra.mrb[0].mxu0 %v1082
        %v1951 = vpop.f32.mrb[0].mxu0
        %v1952 = vadd.f32 %v788, %v1951
        %v1953 = vpop.f32.mrb[0].mxu0
        %v1954 = vpop.f32.mrb[0].mxu0
        %v1955 = vadd.f32 %v788, %v1954
        %v1956 = vpop.f32.mrb[0].mxu0
        %1957 = vmatprep.mubr.bf16.mxu0 0
        %1958 = vmatmul.mubr.bf16.gmra.mrb[0].mxu0 %v1085
        %v1959 = vpop.f32.mrb[0].mxu0
        %v1960 = vadd.f32 %v788, %v1959
        %v1961 = vpop.f32.mrb[0].mxu0
        %v1962 = vpop.f32.mrb[0].mxu0
        %v1963 = vadd.f32 %v788, %v1962
        %v1964 = vpop.f32.mrb[0].mxu0
        %1965 = vmatprep.mubr.bf16.mxu0 0
        %1966 = vmatmul.mubr.bf16.gmra.mrb[0].mxu0 %v1088
        %v1967 = vpop.f32.mrb[0].mxu0
        %v1968 = vadd.f32 %v788, %v1967
        %v1969 = vpop.f32.mrb[0].mxu0
        %v1970 = vpop.f32.mrb[0].mxu0
        %v1971 = vadd.f32 %v788, %v1970
        %v1972 = vpop.f32.mrb[0].mxu0
        %1973 = vmatprep.mubr.bf16.mxu0 0
        %1974 = vmatmul.mubr.bf16.gmra.mrb[0].mxu0 %v1091
        %v1975 = vpop.f32.mrb[0].mxu0
        %v1976 = vadd.f32 %v788, %v1975
        %v1977 = vpop.f32.mrb[0].mxu0
        %v1978 = vpop.f32.mrb[0].mxu0
        %v1979 = vadd.f32 %v788, %v1978
        %v1980 = vpop.f32.mrb[0].mxu0
        %1981 = vmatprep.mubr.bf16.mxu0 0
        %1982 = vmatmul.mubr.bf16.gmra.mrb[0].mxu0 %v1094
        %v1983 = vpop.f32.mrb[0].mxu0
        %v1984 = vadd.f32 %v788, %v1983
        %v1985 = vpop.f32.mrb[0].mxu0
        %v1986 = vpop.f32.mrb[0].mxu0
        %v1987 = vadd.f32 %v788, %v1986
        %v1988 = vpop.f32.mrb[0].mxu0
        %1989 = vmatprep.mubr.bf16.mxu0 0
        %1990 = vmatmul.mubr.bf16.gmra.mrb[0].mxu0 %v1097
        %v1991 = vpop.f32.mrb[0].mxu0
        %v1992 = vadd.f32 %v788, %v1991
        %v1993 = vpop.f32.mrb[0].mxu0
        %v1994 = vpop.f32.mrb[0].mxu0
        %v1995 = vadd.f32 %v788, %v1994
        %v1996 = vpop.f32.mrb[0].mxu0
        %1997 = vmatprep.mubr.bf16.mxu0 0
        %1998 = vmatmul.mubr.bf16.gmra.mrb[0].mxu0 %v1100
        %v1999 = vpop.f32.mrb[0].mxu0
        %v2000 = vadd.f32 %v788, %v1999
        %v2001 = vpop.f32.mrb[0].mxu0
        %v2002 = vpop.f32.mrb[0].mxu0
        %v2003 = vadd.f32 %v788, %v2002
        %v2004 = vpop.f32.mrb[0].mxu0
        %2005 = vmatprep.mubr.bf16.mxu0 0
        %2006 = vmatmul.mubr.bf16.gmra.mrb[0].mxu0 %v1103
        %v2007 = vpop.f32.mrb[0].mxu0
        %v2008 = vadd.f32 %v788, %v2007
        %v2009 = vpop.f32.mrb[0].mxu0
        %v2010 = vpop.f32.mrb[0].mxu0
        %v2011 = vadd.f32 %v788, %v2010
        %v2012 = vpop.f32.mrb[0].mxu0
        %2013 = vmatprep.mubr.bf16.mxu0 0
        %2014 = vmatmul.mubr.bf16.gmra.mrb[0].mxu0 %v1106
        %v2015 = vpop.f32.mrb[0].mxu0
        %v2016 = vadd.f32 %v788, %v2015
        %v2017 = vpop.f32.mrb[0].mxu0
        %v2018 = vpop.f32.mrb[0].mxu0
        %v2019 = vadd.f32 %v788, %v2018
        %v2020 = vpop.f32.mrb[0].mxu0
        %2021 = vmatprep.mubr.bf16.mxu0 0
        %2022 = vmatmul.mubr.bf16.gmra.mrb[0].mxu0 %v1109
        %v2023 = vpop.f32.mrb[0].mxu0
        %v2024 = vadd.f32 %v788, %v2023
        %v2025 = vpop.f32.mrb[0].mxu0
        %v2026 = vpop.f32.mrb[0].mxu0
        %v2027 = vadd.f32 %v788, %v2026
        %v2028 = vpop.f32.mrb[0].mxu0
        %2029 = vmatprep.mubr.bf16.mxu0 0
        %2030 = vmatmul.mubr.bf16.gmra.mrb[0].mxu0 %v1112
        %v2031 = vpop.f32.mrb[0].mxu0
        %v2032 = vadd.f32 %v788, %v2031
        %v2033 = vpop.f32.mrb[0].mxu0
        %v2034 = vpop.f32.mrb[0].mxu0
        %v2035 = vadd.f32 %v788, %v2034
        %v2036 = vpop.f32.mrb[0].mxu0
        %2037 = vmatprep.mubr.bf16.mxu0 0
        %2038 = vmatmul.mubr.bf16.gmra.mrb[0].mxu0 %v1115
        %v2039 = vpop.f32.mrb[0].mxu0
        %v2040 = vadd.f32 %v788, %v2039
        %v2041 = vpop.f32.mrb[0].mxu0
        %v2042 = vpop.f32.mrb[0].mxu0
        %v2043 = vadd.f32 %v788, %v2042
        %v2044 = vpop.f32.mrb[0].mxu0
        %2045 = vmatprep.mubr.bf16.mxu0 0
        %2046 = vmatmul.mubr.bf16.gmra.mrb[0].mxu0 %v1118
        %v2047 = vpop.f32.mrb[0].mxu0
        %v2048 = vadd.f32 %v788, %v2047
        %v2049 = vpop.f32.mrb[0].mxu0
        %v2050 = vpop.f32.mrb[0].mxu0
        %v2051 = vadd.f32 %v788, %v2050
        %v2052 = vpop.f32.mrb[0].mxu0
        %2053 = vmatprep.mubr.bf16.mxu0 0
        %2054 = vmatmul.mubr.bf16.gmra.mrb[0].mxu0 %v1121
        %v2055 = vpop.f32.mrb[0].mxu0
        %v2056 = vadd.f32 %v788, %v2055
        %v2057 = vpop.f32.mrb[0].mxu0
        %v2058 = vpop.f32.mrb[0].mxu0
        %v2059 = vadd.f32 %v788, %v2058
        %v2060 = vpop.f32.mrb[0].mxu0
        %2061 = vmatprep.mubr.bf16.mxu0 0
        %2062 = vmatmul.mubr.bf16.gmra.mrb[0].mxu0 %v1124
        %v2063 = vpop.f32.mrb[0].mxu0
        %v2064 = vadd.f32 %v788, %v2063
        %v2065 = vpop.f32.mrb[0].mxu0
        %v2066 = vpop.f32.mrb[0].mxu0
        %v2067 = vadd.f32 %v788, %v2066
        %v2068 = vpop.f32.mrb[0].mxu0
        %2069 = vmatprep.mubr.bf16.mxu0 0
        %2070 = vmatmul.mubr.bf16.gmra.mrb[0].mxu0 %v1127
        %v2071 = vpop.f32.mrb[0].mxu0
        %v2072 = vadd.f32 %v788, %v2071
        %v2073 = vpop.f32.mrb[0].mxu0
        %v2074 = vpop.f32.mrb[0].mxu0
        %v2075 = vadd.f32 %v788, %v2074
        %v2076 = vpop.f32.mrb[0].mxu0
        %2077 = vmatprep.mubr.bf16.mxu0 0
        %2078 = vmatmul.mubr.bf16.gmra.mrb[0].mxu0 %v1130
        %v2079 = vpop.f32.mrb[0].mxu0
        %v2080 = vadd.f32 %v788, %v2079
        %v2081 = vpop.f32.mrb[0].mxu0
        %v2082 = vpop.f32.mrb[0].mxu0
        %v2083 = vadd.f32 %v788, %v2082
        %v2084 = vpop.f32.mrb[0].mxu0
        %2085 = vmatprep.mubr.bf16.mxu0 0
        %2086 = vmatmul.mubr.bf16.gmra.mrb[0].mxu0 %v1133
        %v2087 = vpop.f32.mrb[0].mxu0
        %v2088 = vadd.f32 %v788, %v2087
        %v2089 = vpop.f32.mrb[0].mxu0
        %v2090 = vpop.f32.mrb[0].mxu0
        %v2091 = vadd.f32 %v788, %v2090
        %v2092 = vpop.f32.mrb[0].mxu0
        %2093 = vmatprep.mubr.bf16.mxu0 0
        %2094 = vmatmul.mubr.bf16.gmra.mrb[0].mxu0 %v1136
        %v2095 = vpop.f32.mrb[0].mxu0
        %v2096 = vadd.f32 %v788, %v2095
        %v2097 = vpop.f32.mrb[0].mxu0
        %v2098 = vpop.f32.mrb[0].mxu0
        %v2099 = vadd.f32 %v788, %v2098
        %v2100 = vpop.f32.mrb[0].mxu0
        %2101 = vmatprep.mubr.bf16.mxu0 0
        %2102 = vmatmul.mubr.bf16.gmra.mrb[0].mxu0 %v1139
        %v2103 = vpop.f32.mrb[0].mxu0
        %v2104 = vadd.f32 %v788, %v2103
        %v2105 = vpop.f32.mrb[0].mxu0
        %v2106 = vpop.f32.mrb[0].mxu0
        %v2107 = vadd.f32 %v788, %v2106
        %v2108 = vpop.f32.mrb[0].mxu0
        %2109 = vmatprep.mubr.bf16.mxu0 0
        %2110 = vmatmul.mubr.bf16.gmra.mrb[0].mxu0 %v1142
        %v2111 = vpop.f32.mrb[0].mxu0
        %v2112 = vadd.f32 %v788, %v2111
        %v2113 = vpop.f32.mrb[0].mxu0
        %v2114 = vpop.f32.mrb[0].mxu0
        %v2115 = vadd.f32 %v788, %v2114
        %v2116 = vpop.f32.mrb[0].mxu0
        %2117 = vmatprep.mubr.bf16.mxu0 0
        %2118 = vmatmul.mubr.bf16.gmra.mrb[0].mxu0 %v1145
        %v2119 = vpop.f32.mrb[0].mxu0
        %v2120 = vadd.f32 %v788, %v2119
        %v2121 = vpop.f32.mrb[0].mxu0
        %v2122 = vpop.f32.mrb[0].mxu0
        %v2123 = vadd.f32 %v788, %v2122
        %v2124 = vpop.f32.mrb[0].mxu0
        %2125 = vmatprep.mubr.bf16.mxu0 0
        %2126 = vmatmul.mubr.bf16.gmra.mrb[0].mxu0 %v1148
        %v2127 = vpop.f32.mrb[0].mxu0
        %v2128 = vadd.f32 %v788, %v2127
        %v2129 = vpop.f32.mrb[0].mxu0
        %v2130 = vpop.f32.mrb[0].mxu0
        %v2131 = vadd.f32 %v788, %v2130
        %v2132 = vpop.f32.mrb[0].mxu0
        %2133 = vmatprep.mubr.bf16.mxu0 0
        %2134 = vmatmul.mubr.bf16.gmra.mrb[0].mxu0 %v1151
        %v2135 = vpop.f32.mrb[0].mxu0
        %v2136 = vadd.f32 %v788, %v2135
        %v2137 = vpop.f32.mrb[0].mxu0
        %v2138 = vpop.f32.mrb[0].mxu0
        %v2139 = vadd.f32 %v788, %v2138
        %v2140 = vpop.f32.mrb[0].mxu0
        %2141 = vmatprep.mubr.bf16.mxu0 0
        %2142 = vmatmul.mubr.bf16.gmra.mrb[0].mxu0 %v1154
        %v2143 = vpop.f32.mrb[0].mxu0
        %v2144 = vadd.f32 %v788, %v2143
        %v2145 = vpop.f32.mrb[0].mxu0
        %v2146 = vpop.f32.mrb[0].mxu0
        %v2147 = vadd.f32 %v788, %v2146
        %v2148 = vpop.f32.mrb[0].mxu0
        %2149 = vmatprep.mubr.bf16.mxu0 0
        %2150 = vmatmul.mubr.bf16.gmra.mrb[0].mxu0 %v1157
        %v2151 = vpop.f32.mrb[0].mxu0
        %v2152 = vadd.f32 %v788, %v2151
        %v2153 = vpop.f32.mrb[0].mxu0
        %v2154 = vpop.f32.mrb[0].mxu0
        %v2155 = vadd.f32 %v788, %v2154
        %v2156 = vpop.f32.mrb[0].mxu0
        %2157 = vmatprep.mubr.bf16.mxu0 0
        %2158 = vmatmul.mubr.bf16.gmra.mrb[0].mxu0 %v1160
        %v2159 = vpop.f32.mrb[0].mxu0
        %v2160 = vadd.f32 %v788, %v2159
        %v2161 = vpop.f32.mrb[0].mxu0
        %v2162 = vpop.f32.mrb[0].mxu0
        %v2163 = vadd.f32 %v788, %v2162
        %v2164 = vpop.f32.mrb[0].mxu0
        %2165 = vmatprep.mubr.bf16.mxu0 0
        %2166 = vmatmul.mubr.bf16.gmra.mrb[0].mxu0 %v1163
        %v2167 = vpop.f32.mrb[0].mxu0
        %v2168 = vadd.f32 %v788, %v2167
        %v2169 = vpop.f32.mrb[0].mxu0
        %v2170 = vpop.f32.mrb[0].mxu0
        %v2171 = vadd.f32 %v788, %v2170
        %v2172 = vpop.f32.mrb[0].mxu0
        %2173 = vmatprep.mubr.bf16.mxu0 0
        %2174 = vmatmul.mubr.bf16.gmra.mrb[0].mxu0 %v1166
        %v2175 = vpop.f32.mrb[0].mxu0
        %v2176 = vadd.f32 %v788, %v2175
        %v2177 = vpop.f32.mrb[0].mxu0
        %v2178 = vpop.f32.mrb[0].mxu0
        %v2179 = vadd.f32 %v788, %v2178
        %v2180 = vpop.f32.mrb[0].mxu0
        %2181 = vmatprep.mubr.bf16.mxu0 0
        %2182 = vmatmul.mubr.bf16.gmra.mrb[0].mxu0 %v1169
        %v2183 = vpop.f32.mrb[0].mxu0
        %v2184 = vadd.f32 %v788, %v2183
        %v2185 = vpop.f32.mrb[0].mxu0
        %v2186 = vpop.f32.mrb[0].mxu0
        %v2187 = vadd.f32 %v788, %v2186
        %v2188 = vpop.f32.mrb[0].mxu0
        %2189 = vmatprep.mubr.bf16.mxu0 0
        %2190 = vmatmul.mubr.bf16.gmra.mrb[0].mxu0 %v1172
        %v2191 = vpop.f32.mrb[0].mxu0
        %v2192 = vadd.f32 %v788, %v2191
        %v2193 = vpop.f32.mrb[0].mxu0
        %v2194 = vpop.f32.mrb[0].mxu0
        %v2195 = vadd.f32 %v788, %v2194
        %v2196 = vpop.f32.mrb[0].mxu0
        %2197 = vmatprep.mubr.bf16.mxu0 0
        %2198 = vmatmul.mubr.bf16.gmra.mrb[0].mxu0 %v1175
        %v2199 = vpop.f32.mrb[0].mxu0
        %v2200 = vadd.f32 %v788, %v2199
        %v2201 = vpop.f32.mrb[0].mxu0
        %v2202 = vpop.f32.mrb[0].mxu0
        %v2203 = vadd.f32 %v788, %v2202
        %v2204 = vpop.f32.mrb[0].mxu0
        %2205 = vmatprep.mubr.bf16.mxu0 0
        %2206 = vmatmul.mubr.bf16.gmra.mrb[0].mxu0 %v1178
        %v2207 = vpop.f32.mrb[0].mxu0
        %v2208 = vadd.f32 %v788, %v2207
        %v2209 = vpop.f32.mrb[0].mxu0
        %v2210 = vpop.f32.mrb[0].mxu0
        %v2211 = vadd.f32 %v788, %v2210
        %v2212 = vpop.f32.mrb[0].mxu0
        %2213 = vmatprep.mubr.bf16.mxu0 0
        %2214 = vmatmul.mubr.bf16.gmra.mrb[0].mxu0 %v1181
        %v2215 = vpop.f32.mrb[0].mxu0
        %v2216 = vadd.f32 %v788, %v2215
        %v2217 = vpop.f32.mrb[0].mxu0
        %v2218 = vpop.f32.mrb[0].mxu0
        %v2219 = vadd.f32 %v788, %v2218
        %v2220 = vpop.f32.mrb[0].mxu0
        %2221 = vmatprep.mubr.bf16.mxu0 0
        %2222 = vmatmul.mubr.bf16.gmra.mrb[0].mxu0 %v1184
        %v2223 = vpop.f32.mrb[0].mxu0
        %v2224 = vadd.f32 %v788, %v2223
        %v2225 = vpop.f32.mrb[0].mxu0
        %v2226 = vpop.f32.mrb[0].mxu0
        %v2227 = vadd.f32 %v788, %v2226
        %v2228 = vpop.f32.mrb[0].mxu0
        %2229 = vmatprep.mubr.bf16.mxu0 0
        %2230 = vmatmul.mubr.bf16.gmra.mrb[0].mxu0 %v1187
        %v2231 = vpop.f32.mrb[0].mxu0
        %v2232 = vadd.f32 %v788, %v2231
        %v2233 = vpop.f32.mrb[0].mxu0
        %v2234 = vpop.f32.mrb[0].mxu0
        %v2235 = vadd.f32 %v788, %v2234
        %v2236 = vpop.f32.mrb[0].mxu0
        %2237 = vmatprep.mubr.bf16.mxu0 0
        %2238 = vmatmul.mubr.bf16.gmra.mrb[0].mxu0 %v1190
        %v2239 = vpop.f32.mrb[0].mxu0
        %v2240 = vadd.f32 %v788, %v2239
        %v2241 = vpop.f32.mrb[0].mxu0
        %v2242 = vpop.f32.mrb[0].mxu0
        %v2243 = vadd.f32 %v788, %v2242
        %v2244 = vpop.f32.mrb[0].mxu0
        %2245 = vmatprep.mubr.bf16.mxu0 0
        %2246 = vmatmul.mubr.bf16.gmra.mrb[0].mxu0 %v1193
        %v2247 = vpop.f32.mrb[0].mxu0
        %v2248 = vadd.f32 %v788, %v2247
        %v2249 = vpop.f32.mrb[0].mxu0
        %v2250 = vpop.f32.mrb[0].mxu0
        %v2251 = vadd.f32 %v788, %v2250
        %v2252 = vpop.f32.mrb[0].mxu0
        %2253 = vmatprep.mubr.bf16.mxu0 0
        %2254 = vmatmul.mubr.bf16.gmra.mrb[0].mxu0 %v1196
        %v2255 = vpop.f32.mrb[0].mxu0
        %v2256 = vadd.f32 %v788, %v2255
        %v2257 = vpop.f32.mrb[0].mxu0
        %v2258 = vpop.f32.mrb[0].mxu0
        %v2259 = vadd.f32 %v788, %v2258
        %v2260 = vpop.f32.mrb[0].mxu0
        %2261 = vdwg.mxu0
        %v2262 = vmax.f32 %v1240, 0.0
        %v2263 = vmax.f32 %v1243, 0.0
        %v2264 = vmax.f32 %v1248, 0.0
        %v2265 = vmax.f32 %v1251, 0.0
        %v2266 = vmax.f32 %v1256, 0.0
        %v2267 = vmax.f32 %v1259, 0.0
        %v2268 = vmax.f32 %v1264, 0.0
        %v2269 = vmax.f32 %v1267, 0.0
        %v2270 = vmax.f32 %v1272, 0.0
        %v2271 = vmax.f32 %v1275, 0.0
        %v2272 = vmax.f32 %v1280, 0.0
        %v2273 = vmax.f32 %v1283, 0.0
        %v2274 = vmax.f32 %v1288, 0.0
        %v2275 = vmax.f32 %v1291, 0.0
        %v2276 = vmax.f32 %v1296, 0.0
        %v2277 = vmax.f32 %v1299, 0.0
        %v2278 = vmax.f32 %v1304, 0.0
        %v2279 = vmax.f32 %v1307, 0.0
        %v2280 = vmax.f32 %v1312, 0.0
        %v2281 = vmax.f32 %v1315, 0.0
        %v2282 = vmax.f32 %v1320, 0.0
        %v2283 = vmax.f32 %v1323, 0.0
        %v2284 = vmax.f32 %v1328, 0.0
        %v2285 = vmax.f32 %v1331, 0.0
        %v2286 = vmax.f32 %v1336, 0.0
        %v2287 = vmax.f32 %v1339, 0.0
        %v2288 = vmax.f32 %v1344, 0.0
        %v2289 = vmax.f32 %v1347, 0.0
        %v2290 = vmax.f32 %v1352, 0.0
        %v2291 = vmax.f32 %v1355, 0.0
        %v2292 = vmax.f32 %v1360, 0.0
        %v2293 = vmax.f32 %v1363, 0.0
        %v2294 = vmax.f32 %v1368, 0.0
        %v2295 = vmax.f32 %v1371, 0.0
        %v2296 = vmax.f32 %v1376, 0.0
        %v2297 = vmax.f32 %v1379, 0.0
        %v2298 = vmax.f32 %v1384, 0.0
        %v2299 = vmax.f32 %v1387, 0.0
        %v2300 = vmax.f32 %v1392, 0.0
        %v2301 = vmax.f32 %v1395, 0.0
        %v2302 = vmax.f32 %v1400, 0.0
        %v2303 = vmax.f32 %v1403, 0.0
        %v2304 = vmax.f32 %v1408, 0.0
        %v2305 = vmax.f32 %v1411, 0.0
        %v2306 = vmax.f32 %v1416, 0.0
        %v2307 = vmax.f32 %v1419, 0.0
        %v2308 = vmax.f32 %v1424, 0.0
        %v2309 = vmax.f32 %v1427, 0.0
        %v2310 = vmax.f32 %v1432, 0.0
        %v2311 = vmax.f32 %v1435, 0.0
        %v2312 = vmax.f32 %v1440, 0.0
        %v2313 = vmax.f32 %v1443, 0.0
        %v2314 = vmax.f32 %v1448, 0.0
        %v2315 = vmax.f32 %v1451, 0.0
        %v2316 = vmax.f32 %v1456, 0.0
        %v2317 = vmax.f32 %v1459, 0.0
        %v2318 = vmax.f32 %v1464, 0.0
        %v2319 = vmax.f32 %v1467, 0.0
        %v2320 = vmax.f32 %v1472, 0.0
        %v2321 = vmax.f32 %v1475, 0.0
        %v2322 = vmax.f32 %v1480, 0.0
        %v2323 = vmax.f32 %v1483, 0.0
        %v2324 = vmax.f32 %v1488, 0.0
        %v2325 = vmax.f32 %v1491, 0.0
        %v2326 = vmax.f32 %v1496, 0.0
        %v2327 = vmax.f32 %v1499, 0.0
        %v2328 = vmax.f32 %v1504, 0.0
        %v2329 = vmax.f32 %v1507, 0.0
        %v2330 = vmax.f32 %v1512, 0.0
        %v2331 = vmax.f32 %v1515, 0.0
        %v2332 = vmax.f32 %v1520, 0.0
        %v2333 = vmax.f32 %v1523, 0.0
        %v2334 = vmax.f32 %v1528, 0.0
        %v2335 = vmax.f32 %v1531, 0.0
        %v2336 = vmax.f32 %v1536, 0.0
        %v2337 = vmax.f32 %v1539, 0.0
        %v2338 = vmax.f32 %v1544, 0.0
        %v2339 = vmax.f32 %v1547, 0.0
        %v2340 = vmax.f32 %v1552, 0.0
        %v2341 = vmax.f32 %v1555, 0.0
        %v2342 = vmax.f32 %v1560, 0.0
        %v2343 = vmax.f32 %v1563, 0.0
        %v2344 = vmax.f32 %v1568, 0.0
        %v2345 = vmax.f32 %v1571, 0.0
        %v2346 = vmax.f32 %v1576, 0.0
        %v2347 = vmax.f32 %v1579, 0.0
        %v2348 = vmax.f32 %v1584, 0.0
        %v2349 = vmax.f32 %v1587, 0.0
        %v2350 = vmax.f32 %v1592, 0.0
        %v2351 = vmax.f32 %v1595, 0.0
        %v2352 = vmax.f32 %v1600, 0.0
        %v2353 = vmax.f32 %v1603, 0.0
        %v2354 = vmax.f32 %v1608, 0.0
        %v2355 = vmax.f32 %v1611, 0.0
        %v2356 = vmax.f32 %v1616, 0.0
        %v2357 = vmax.f32 %v1619, 0.0
        %v2358 = vmax.f32 %v1624, 0.0
        %v2359 = vmax.f32 %v1627, 0.0
        %v2360 = vmax.f32 %v1632, 0.0
        %v2361 = vmax.f32 %v1635, 0.0
        %v2362 = vmax.f32 %v1640, 0.0
        %v2363 = vmax.f32 %v1643, 0.0
        %v2364 = vmax.f32 %v1648, 0.0
        %v2365 = vmax.f32 %v1651, 0.0
        %v2366 = vmax.f32 %v1656, 0.0
        %v2367 = vmax.f32 %v1659, 0.0
        %v2368 = vmax.f32 %v1664, 0.0
        %v2369 = vmax.f32 %v1667, 0.0
        %v2370 = vmax.f32 %v1672, 0.0
        %v2371 = vmax.f32 %v1675, 0.0
        %v2372 = vmax.f32 %v1680, 0.0
        %v2373 = vmax.f32 %v1683, 0.0
        %v2374 = vmax.f32 %v1688, 0.0
        %v2375 = vmax.f32 %v1691, 0.0
        %v2376 = vmax.f32 %v1696, 0.0
        %v2377 = vmax.f32 %v1699, 0.0
        %v2378 = vmax.f32 %v1704, 0.0
        %v2379 = vmax.f32 %v1707, 0.0
        %v2380 = vmax.f32 %v1712, 0.0
        %v2381 = vmax.f32 %v1715, 0.0
        %v2382 = vmax.f32 %v1720, 0.0
        %v2383 = vmax.f32 %v1723, 0.0
        %v2384 = vmax.f32 %v1728, 0.0
        %v2385 = vmax.f32 %v1731, 0.0
        %v2386 = vmax.f32 %v1736, 0.0
        %v2387 = vmax.f32 %v1739, 0.0
        %v2388 = vmax.f32 %v1744, 0.0
        %v2389 = vmax.f32 %v1747, 0.0
        %v2390 = vmax.f32 %v1752, 0.0
        %v2391 = vmax.f32 %v1755, 0.0
        %v2392 = vmax.f32 %v1760, 0.0
        %v2393 = vmax.f32 %v1763, 0.0
        %v2394 = vmax.f32 %v1768, 0.0
        %v2395 = vmax.f32 %v1771, 0.0
        %v2396 = vmax.f32 %v1776, 0.0
        %v2397 = vmax.f32 %v1779, 0.0
        %v2398 = vmax.f32 %v1784, 0.0
        %v2399 = vmax.f32 %v1787, 0.0
        %v2400 = vmax.f32 %v1792, 0.0
        %v2401 = vmax.f32 %v1795, 0.0
        %v2402 = vmax.f32 %v1800, 0.0
        %v2403 = vmax.f32 %v1803, 0.0
        %v2404 = vmax.f32 %v1808, 0.0
        %v2405 = vmax.f32 %v1811, 0.0
        %v2406 = vmax.f32 %v1816, 0.0
        %v2407 = vmax.f32 %v1819, 0.0
        %v2408 = vmax.f32 %v1824, 0.0
        %v2409 = vmax.f32 %v1827, 0.0
        %v2410 = vmax.f32 %v1832, 0.0
        %v2411 = vmax.f32 %v1835, 0.0
        %v2412 = vmax.f32 %v1840, 0.0
        %v2413 = vmax.f32 %v1843, 0.0
        %v2414 = vmax.f32 %v1848, 0.0
        %v2415 = vmax.f32 %v1851, 0.0
        %v2416 = vmax.f32 %v1856, 0.0
        %v2417 = vmax.f32 %v1859, 0.0
        %v2418 = vmax.f32 %v1864, 0.0
        %v2419 = vmax.f32 %v1867, 0.0
        %v2420 = vmax.f32 %v1872, 0.0
        %v2421 = vmax.f32 %v1875, 0.0
        %v2422 = vmax.f32 %v1880, 0.0
        %v2423 = vmax.f32 %v1883, 0.0
        %v2424 = vmax.f32 %v1888, 0.0
        %v2425 = vmax.f32 %v1891, 0.0
        %v2426 = vmax.f32 %v1896, 0.0
        %v2427 = vmax.f32 %v1899, 0.0
        %v2428 = vmax.f32 %v1904, 0.0
        %v2429 = vmax.f32 %v1907, 0.0
        %v2430 = vmax.f32 %v1912, 0.0
        %v2431 = vmax.f32 %v1915, 0.0
        %v2432 = vmax.f32 %v1920, 0.0
        %v2433 = vmax.f32 %v1923, 0.0
        %v2434 = vmax.f32 %v1928, 0.0
        %v2435 = vmax.f32 %v1931, 0.0
        %v2436 = vmax.f32 %v1936, 0.0
        %v2437 = vmax.f32 %v1939, 0.0
        %v2438 = vmax.f32 %v1944, 0.0
        %v2439 = vmax.f32 %v1947, 0.0
        %v2440 = vmax.f32 %v1952, 0.0
        %v2441 = vmax.f32 %v1955, 0.0
        %v2442 = vmax.f32 %v1960, 0.0
        %v2443 = vmax.f32 %v1963, 0.0
        %v2444 = vmax.f32 %v1968, 0.0
        %v2445 = vmax.f32 %v1971, 0.0
        %v2446 = vmax.f32 %v1976, 0.0
        %v2447 = vmax.f32 %v1979, 0.0
        %v2448 = vmax.f32 %v1984, 0.0
        %v2449 = vmax.f32 %v1987, 0.0
        %v2450 = vmax.f32 %v1992, 0.0
        %v2451 = vmax.f32 %v1995, 0.0
        %v2452 = vmax.f32 %v2000, 0.0
        %v2453 = vmax.f32 %v2003, 0.0
        %v2454 = vmax.f32 %v2008, 0.0
        %v2455 = vmax.f32 %v2011, 0.0
        %v2456 = vmax.f32 %v2016, 0.0
        %v2457 = vmax.f32 %v2019, 0.0
        %v2458 = vmax.f32 %v2024, 0.0
        %v2459 = vmax.f32 %v2027, 0.0
        %v2460 = vmax.f32 %v2032, 0.0
        %v2461 = vmax.f32 %v2035, 0.0
        %v2462 = vmax.f32 %v2040, 0.0
        %v2463 = vmax.f32 %v2043, 0.0
        %v2464 = vmax.f32 %v2048, 0.0
        %v2465 = vmax.f32 %v2051, 0.0
        %v2466 = vmax.f32 %v2056, 0.0
        %v2467 = vmax.f32 %v2059, 0.0
        %v2468 = vmax.f32 %v2064, 0.0
        %v2469 = vmax.f32 %v2067, 0.0
        %v2470 = vmax.f32 %v2072, 0.0
        %v2471 = vmax.f32 %v2075, 0.0
        %v2472 = vmax.f32 %v2080, 0.0
        %v2473 = vmax.f32 %v2083, 0.0
        %v2474 = vmax.f32 %v2088, 0.0
        %v2475 = vmax.f32 %v2091, 0.0
        %v2476 = vmax.f32 %v2096, 0.0
        %v2477 = vmax.f32 %v2099, 0.0
        %v2478 = vmax.f32 %v2104, 0.0
        %v2479 = vmax.f32 %v2107, 0.0
        %v2480 = vmax.f32 %v2112, 0.0
        %v2481 = vmax.f32 %v2115, 0.0
        %v2482 = vmax.f32 %v2120, 0.0
        %v2483 = vmax.f32 %v2123, 0.0
        %v2484 = vmax.f32 %v2128, 0.0
        %v2485 = vmax.f32 %v2131, 0.0
        %v2486 = vmax.f32 %v2136, 0.0
        %v2487 = vmax.f32 %v2139, 0.0
        %v2488 = vmax.f32 %v2144, 0.0
        %v2489 = vmax.f32 %v2147, 0.0
        %v2490 = vmax.f32 %v2152, 0.0
        %v2491 = vmax.f32 %v2155, 0.0
        %v2492 = vmax.f32 %v2160, 0.0
        %v2493 = vmax.f32 %v2163, 0.0
        %v2494 = vmax.f32 %v2168, 0.0
        %v2495 = vmax.f32 %v2171, 0.0
        %v2496 = vmax.f32 %v2176, 0.0
        %v2497 = vmax.f32 %v2179, 0.0
        %v2498 = vmax.f32 %v2184, 0.0
        %v2499 = vmax.f32 %v2187, 0.0
        %v2500 = vmax.f32 %v2192, 0.0
        %v2501 = vmax.f32 %v2195, 0.0
        %v2502 = vmax.f32 %v2200, 0.0
        %v2503 = vmax.f32 %v2203, 0.0
        %v2504 = vmax.f32 %v2208, 0.0
        %v2505 = vmax.f32 %v2211, 0.0
        %v2506 = vmax.f32 %v2216, 0.0
        %v2507 = vmax.f32 %v2219, 0.0
        %v2508 = vmax.f32 %v2224, 0.0
        %v2509 = vmax.f32 %v2227, 0.0
        %v2510 = vmax.f32 %v2232, 0.0
        %v2511 = vmax.f32 %v2235, 0.0
        %v2512 = vmax.f32 %v2240, 0.0
        %v2513 = vmax.f32 %v2243, 0.0
        %v2514 = vmax.f32 %v2248, 0.0
        %v2515 = vmax.f32 %v2251, 0.0
        %v2516 = vmax.f32 %v2256, 0.0
        %v2517 = vmax.f32 %v2259, 0.0
        %v2518 = vpack.c.bf16 %v2263, %v2262
        %v2519 = vpack.c.bf16 %v2265, %v2264
        %v2520 = vpack.c.bf16 %v2267, %v2266
        %v2521 = vpack.c.bf16 %v2269, %v2268
        %v2522 = vpack.c.bf16 %v2271, %v2270
        %v2523 = vpack.c.bf16 %v2273, %v2272
        %v2524 = vpack.c.bf16 %v2275, %v2274
        %v2525 = vpack.c.bf16 %v2277, %v2276
        %v2526 = vpack.c.bf16 %v2279, %v2278
        %v2527 = vpack.c.bf16 %v2281, %v2280
        %v2528 = vpack.c.bf16 %v2283, %v2282
        %v2529 = vpack.c.bf16 %v2285, %v2284
        %v2530 = vpack.c.bf16 %v2287, %v2286
        %v2531 = vpack.c.bf16 %v2289, %v2288
        %v2532 = vpack.c.bf16 %v2291, %v2290
        %v2533 = vpack.c.bf16 %v2293, %v2292
        %v2534 = vpack.c.bf16 %v2295, %v2294
        %v2535 = vpack.c.bf16 %v2297, %v2296
        %v2536 = vpack.c.bf16 %v2299, %v2298
        %v2537 = vpack.c.bf16 %v2301, %v2300
        %v2538 = vpack.c.bf16 %v2303, %v2302
        %v2539 = vpack.c.bf16 %v2305, %v2304
        %v2540 = vpack.c.bf16 %v2307, %v2306
        %v2541 = vpack.c.bf16 %v2309, %v2308
        %v2542 = vpack.c.bf16 %v2311, %v2310
        %v2543 = vpack.c.bf16 %v2313, %v2312
        %v2544 = vpack.c.bf16 %v2315, %v2314
        %v2545 = vpack.c.bf16 %v2317, %v2316
        %v2546 = vpack.c.bf16 %v2319, %v2318
        %v2547 = vpack.c.bf16 %v2321, %v2320
        %v2548 = vpack.c.bf16 %v2323, %v2322
        %v2549 = vpack.c.bf16 %v2325, %v2324
        %v2550 = vpack.c.bf16 %v2327, %v2326
        %v2551 = vpack.c.bf16 %v2329, %v2328
        %v2552 = vpack.c.bf16 %v2331, %v2330
        %v2553 = vpack.c.bf16 %v2333, %v2332
        %v2554 = vpack.c.bf16 %v2335, %v2334
        %v2555 = vpack.c.bf16 %v2337, %v2336
        %v2556 = vpack.c.bf16 %v2339, %v2338
        %v2557 = vpack.c.bf16 %v2341, %v2340
        %v2558 = vpack.c.bf16 %v2343, %v2342
        %v2559 = vpack.c.bf16 %v2345, %v2344
        %v2560 = vpack.c.bf16 %v2347, %v2346
        %v2561 = vpack.c.bf16 %v2349, %v2348
        %v2562 = vpack.c.bf16 %v2351, %v2350
        %v2563 = vpack.c.bf16 %v2353, %v2352
        %v2564 = vpack.c.bf16 %v2355, %v2354
        %v2565 = vpack.c.bf16 %v2357, %v2356
        %v2566 = vpack.c.bf16 %v2359, %v2358
        %v2567 = vpack.c.bf16 %v2361, %v2360
        %v2568 = vpack.c.bf16 %v2363, %v2362
        %v2569 = vpack.c.bf16 %v2365, %v2364
        %v2570 = vpack.c.bf16 %v2367, %v2366
        %v2571 = vpack.c.bf16 %v2369, %v2368
        %v2572 = vpack.c.bf16 %v2371, %v2370
        %v2573 = vpack.c.bf16 %v2373, %v2372
        %v2574 = vpack.c.bf16 %v2375, %v2374
        %v2575 = vpack.c.bf16 %v2377, %v2376
        %v2576 = vpack.c.bf16 %v2379, %v2378
        %v2577 = vpack.c.bf16 %v2381, %v2380
        %v2578 = vpack.c.bf16 %v2383, %v2382
        %v2579 = vpack.c.bf16 %v2385, %v2384
        %v2580 = vpack.c.bf16 %v2387, %v2386
        %v2581 = vpack.c.bf16 %v2389, %v2388
        %v2582 = vpack.c.bf16 %v2391, %v2390
        %v2583 = vpack.c.bf16 %v2393, %v2392
        %v2584 = vpack.c.bf16 %v2395, %v2394
        %v2585 = vpack.c.bf16 %v2397, %v2396
        %v2586 = vpack.c.bf16 %v2399, %v2398
        %v2587 = vpack.c.bf16 %v2401, %v2400
        %v2588 = vpack.c.bf16 %v2403, %v2402
        %v2589 = vpack.c.bf16 %v2405, %v2404
        %v2590 = vpack.c.bf16 %v2407, %v2406
        %v2591 = vpack.c.bf16 %v2409, %v2408
        %v2592 = vpack.c.bf16 %v2411, %v2410
        %v2593 = vpack.c.bf16 %v2413, %v2412
        %v2594 = vpack.c.bf16 %v2415, %v2414
        %v2595 = vpack.c.bf16 %v2417, %v2416
        %v2596 = vpack.c.bf16 %v2419, %v2418
        %v2597 = vpack.c.bf16 %v2421, %v2420
        %v2598 = vpack.c.bf16 %v2423, %v2422
        %v2599 = vpack.c.bf16 %v2425, %v2424
        %v2600 = vpack.c.bf16 %v2427, %v2426
        %v2601 = vpack.c.bf16 %v2429, %v2428
        %v2602 = vpack.c.bf16 %v2431, %v2430
        %v2603 = vpack.c.bf16 %v2433, %v2432
        %v2604 = vpack.c.bf16 %v2435, %v2434
        %v2605 = vpack.c.bf16 %v2437, %v2436
        %v2606 = vpack.c.bf16 %v2439, %v2438
        %v2607 = vpack.c.bf16 %v2441, %v2440
        %v2608 = vpack.c.bf16 %v2443, %v2442
        %v2609 = vpack.c.bf16 %v2445, %v2444
        %v2610 = vpack.c.bf16 %v2447, %v2446
        %v2611 = vpack.c.bf16 %v2449, %v2448
        %v2612 = vpack.c.bf16 %v2451, %v2450
        %v2613 = vpack.c.bf16 %v2453, %v2452
        %v2614 = vpack.c.bf16 %v2455, %v2454
        %v2615 = vpack.c.bf16 %v2457, %v2456
        %v2616 = vpack.c.bf16 %v2459, %v2458
        %v2617 = vpack.c.bf16 %v2461, %v2460
        %v2618 = vpack.c.bf16 %v2463, %v2462
        %v2619 = vpack.c.bf16 %v2465, %v2464
        %v2620 = vpack.c.bf16 %v2467, %v2466
        %v2621 = vpack.c.bf16 %v2469, %v2468
        %v2622 = vpack.c.bf16 %v2471, %v2470
        %v2623 = vpack.c.bf16 %v2473, %v2472
        %v2624 = vpack.c.bf16 %v2475, %v2474
        %v2625 = vpack.c.bf16 %v2477, %v2476
        %v2626 = vpack.c.bf16 %v2479, %v2478
        %v2627 = vpack.c.bf16 %v2481, %v2480
        %v2628 = vpack.c.bf16 %v2483, %v2482
        %v2629 = vpack.c.bf16 %v2485, %v2484
        %v2630 = vpack.c.bf16 %v2487, %v2486
        %v2631 = vpack.c.bf16 %v2489, %v2488
        %v2632 = vpack.c.bf16 %v2491, %v2490
        %v2633 = vpack.c.bf16 %v2493, %v2492
        %v2634 = vpack.c.bf16 %v2495, %v2494
        %v2635 = vpack.c.bf16 %v2497, %v2496
        %v2636 = vpack.c.bf16 %v2499, %v2498
        %v2637 = vpack.c.bf16 %v2501, %v2500
        %v2638 = vpack.c.bf16 %v2503, %v2502
        %v2639 = vpack.c.bf16 %v2505, %v2504
        %v2640 = vpack.c.bf16 %v2507, %v2506
        %v2641 = vpack.c.bf16 %v2509, %v2508
        %v2642 = vpack.c.bf16 %v2511, %v2510
        %v2643 = vpack.c.bf16 %v2513, %v2512
        %v2644 = vpack.c.bf16 %v2515, %v2514
        %v2645 = vpack.c.bf16 %v2517, %v2516
        %v2646 = vld [vmem:[%s3] sm:$0xf]
        %v2647 = vld [vmem:[%s3 + $0x4] sm:$0xf]
        %v2648 = vld [vmem:[%s3 + $0x8] sm:$0xf]
        %v2649 = vld [vmem:[%s3 + $0xc] sm:$0xf]
        %v2650 = vld [vmem:[%s3 + $0x10] sm:$0xf]
        %v2651 = vld [vmem:[%s3 + $0x14] sm:$0xf]
        %v2652 = vld [vmem:[%s3 + $0x18] sm:$0xf]
        %v2653 = vld [vmem:[%s3 + $0x1c] sm:$0xf]
        %v2654 = vld [vmem:[%s3 + $0x20] sm:$0xf]
        %v2655 = vld [vmem:[%s3 + $0x24] sm:$0xf]
        %v2656 = vld [vmem:[%s3 + $0x28] sm:$0xf]
        %v2657 = vld [vmem:[%s3 + $0x2c] sm:$0xf]
        %v2658 = vld [vmem:[%s3 + $0x30] sm:$0xf]
        %v2659 = vld [vmem:[%s3 + $0x34] sm:$0xf]
        %v2660 = vld [vmem:[%s3 + $0x38] sm:$0xf]
        %v2661 = vld [vmem:[%s3 + $0x3c] sm:$0xf]
        %v2662 = vld [vmem:[%s4] sm:$0x1]
        %v2664 = vlaneseq
        %v2665 = vshrl.u32 %v2664, 7
        %v2666 = vsub.s32 0, %v2665
        %v2667 = vrot.slane %v2662, %v2666
        %v2685 = vunpack.c.l.b16 %v2646
        %v2686 = vunpack.c.l.b16 %v2647
        %v2687 = vunpack.c.l.b16 %v2648
        %v2688 = vunpack.c.l.b16 %v2649
        %v2689 = vunpack.c.l.b16 %v2650
        %v2690 = vunpack.c.l.b16 %v2651
        %v2691 = vunpack.c.l.b16 %v2652
        %v2692 = vunpack.c.l.b16 %v2653
        %v2693 = vunpack.c.l.b16 %v2654
        %v2694 = vunpack.c.l.b16 %v2655
        %v2695 = vunpack.c.l.b16 %v2656
        %v2696 = vunpack.c.l.b16 %v2657
        %v2697 = vunpack.c.l.b16 %v2658
        %v2698 = vunpack.c.l.b16 %v2659
        %v2699 = vunpack.c.l.b16 %v2660
        %v2700 = vunpack.c.l.b16 %v2661
        %v2701 = vpack.c.b16 %v2686, %v2685
        %v2702 = vpack.c.b16 %v2688, %v2687
        %v2703 = vpack.c.b16 %v2690, %v2689
        %v2704 = vpack.c.b16 %v2692, %v2691
        %v2705 = vpack.c.b16 %v2694, %v2693
        %v2706 = vpack.c.b16 %v2696, %v2695
        %v2707 = vpack.c.b16 %v2698, %v2697
        %v2708 = vpack.c.b16 %v2700, %v2699
        %2717 = vmatprep.subr.bf16.mxu0 0
        %2718 = vmatpush1.bf16.msra.mxu0 %v2701
        %2719 = vmatprep.subr.bf16.mxu0 0
        %2720 = vmatpush1.bf16.msra.mxu0 %v2702
        %2721 = vmatprep.subr.bf16.mxu0 0
        %2722 = vmatpush1.bf16.msra.mxu0 %v2703
        %2723 = vmatprep.subr.bf16.mxu0 0
        %2724 = vmatpush1.bf16.msra.mxu0 %v2704
        %2725 = vmatprep.subr.bf16.mxu0 0
        %2726 = vmatpush1.bf16.msra.mxu0 %v2705
        %2727 = vmatprep.subr.bf16.mxu0 0
        %2728 = vmatpush1.bf16.msra.mxu0 %v2706
        %2729 = vmatprep.subr.bf16.mxu0 0
        %2730 = vmatpush1.bf16.msra.mxu0 %v2707
        %2731 = vmatprep.subr.bf16.mxu0 0
        %2732 = vmatpush1.bf16.msra.mxu0 %v2708
        %2733 = vmatprep.subr.bf16.mxu0 0
        %2734 = vmatpush1.bf16.msra.mxu0 0
        %2735 = vmatprep.subr.bf16.mxu0 0
        %2736 = vmatpush1.bf16.msra.mxu0 0
        %2737 = vmatprep.subr.bf16.mxu0 0
        %2738 = vmatpush1.bf16.msra.mxu0 0
        %2739 = vmatprep.subr.bf16.mxu0 0
        %2740 = vmatpush1.bf16.msra.mxu0 0
        %2741 = vmatprep.subr.bf16.mxu0 0
        %2742 = vmatpush1.bf16.msra.mxu0 0
        %2743 = vmatprep.subr.bf16.mxu0 0
        %2744 = vmatpush1.bf16.msra.mxu0 0
        %2745 = vmatprep.subr.bf16.mxu0 0
        %2746 = vmatpush1.bf16.msra.mxu0 0
        %2747 = vmatprep.subr.bf16.mxu0 0
        %2748 = vmatpush1.bf16.msra.mxu0 0
        %2749 = vmatprep.mubr.bf16.mxu0 0
        %2750 = vmatmul.mubr.bf16.gmra.mrb[0].mxu0 %v2518
        %v2751 = vpop.f32.mrb[0].mxu0
        %v2752 = vadd.f32 %v2667, %v2751
        %v2753 = vpop.f32.mrb[0].mxu0
        %v2754 = vpop.f32.mrb[0].mxu0
        %v2755 = vadd.f32 %v2667, %v2754
        %v2756 = vpop.f32.mrb[0].mxu0
        %2757 = vmatprep.mubr.bf16.mxu0 0
        %2758 = vmatmul.mubr.bf16.gmra.mrb[0].mxu0 %v2519
        %v2759 = vpop.f32.mrb[0].mxu0
        %v2760 = vadd.f32 %v2667, %v2759
        %v2761 = vpop.f32.mrb[0].mxu0
        %v2762 = vpop.f32.mrb[0].mxu0
        %v2763 = vadd.f32 %v2667, %v2762
        %v2764 = vpop.f32.mrb[0].mxu0
        %2765 = vmatprep.mubr.bf16.mxu0 0
        %2766 = vmatmul.mubr.bf16.gmra.mrb[0].mxu0 %v2520
        %v2767 = vpop.f32.mrb[0].mxu0
        %v2768 = vadd.f32 %v2667, %v2767
        %v2769 = vpop.f32.mrb[0].mxu0
        %v2770 = vpop.f32.mrb[0].mxu0
        %v2771 = vadd.f32 %v2667, %v2770
        %v2772 = vpop.f32.mrb[0].mxu0
        %2773 = vmatprep.mubr.bf16.mxu0 0
        %2774 = vmatmul.mubr.bf16.gmra.mrb[0].mxu0 %v2521
        %v2775 = vpop.f32.mrb[0].mxu0
        %v2776 = vadd.f32 %v2667, %v2775
        %v2777 = vpop.f32.mrb[0].mxu0
        %v2778 = vpop.f32.mrb[0].mxu0
        %v2779 = vadd.f32 %v2667, %v2778
        %v2780 = vpop.f32.mrb[0].mxu0
        %2781 = vmatprep.mubr.bf16.mxu0 0
        %2782 = vmatmul.mubr.bf16.gmra.mrb[0].mxu0 %v2522
        %v2783 = vpop.f32.mrb[0].mxu0
        %v2784 = vadd.f32 %v2667, %v2783
        %v2785 = vpop.f32.mrb[0].mxu0
        %v2786 = vpop.f32.mrb[0].mxu0
        %v2787 = vadd.f32 %v2667, %v2786
        %v2788 = vpop.f32.mrb[0].mxu0
        %2789 = vmatprep.mubr.bf16.mxu0 0
        %2790 = vmatmul.mubr.bf16.gmra.mrb[0].mxu0 %v2523
        %v2791 = vpop.f32.mrb[0].mxu0
        %v2792 = vadd.f32 %v2667, %v2791
        %v2793 = vpop.f32.mrb[0].mxu0
        %v2794 = vpop.f32.mrb[0].mxu0
        %v2795 = vadd.f32 %v2667, %v2794
        %v2796 = vpop.f32.mrb[0].mxu0
        %2797 = vmatprep.mubr.bf16.mxu0 0
        %2798 = vmatmul.mubr.bf16.gmra.mrb[0].mxu0 %v2524
        %v2799 = vpop.f32.mrb[0].mxu0
        %v2800 = vadd.f32 %v2667, %v2799
        %v2801 = vpop.f32.mrb[0].mxu0
        %v2802 = vpop.f32.mrb[0].mxu0
        %v2803 = vadd.f32 %v2667, %v2802
        %v2804 = vpop.f32.mrb[0].mxu0
        %2805 = vmatprep.mubr.bf16.mxu0 0
        %2806 = vmatmul.mubr.bf16.gmra.mrb[0].mxu0 %v2525
        %v2807 = vpop.f32.mrb[0].mxu0
        %v2808 = vadd.f32 %v2667, %v2807
        %v2809 = vpop.f32.mrb[0].mxu0
        %v2810 = vpop.f32.mrb[0].mxu0
        %v2811 = vadd.f32 %v2667, %v2810
        %v2812 = vpop.f32.mrb[0].mxu0
        %2813 = vmatprep.mubr.bf16.mxu0 0
        %2814 = vmatmul.mubr.bf16.gmra.mrb[0].mxu0 %v2526
        %v2815 = vpop.f32.mrb[0].mxu0
        %v2816 = vadd.f32 %v2667, %v2815
        %v2817 = vpop.f32.mrb[0].mxu0
        %v2818 = vpop.f32.mrb[0].mxu0
        %v2819 = vadd.f32 %v2667, %v2818
        %v2820 = vpop.f32.mrb[0].mxu0
        %2821 = vmatprep.mubr.bf16.mxu0 0
        %2822 = vmatmul.mubr.bf16.gmra.mrb[0].mxu0 %v2527
        %v2823 = vpop.f32.mrb[0].mxu0
        %v2824 = vadd.f32 %v2667, %v2823
        %v2825 = vpop.f32.mrb[0].mxu0
        %v2826 = vpop.f32.mrb[0].mxu0
        %v2827 = vadd.f32 %v2667, %v2826
        %v2828 = vpop.f32.mrb[0].mxu0
        %2829 = vmatprep.mubr.bf16.mxu0 0
        %2830 = vmatmul.mubr.bf16.gmra.mrb[0].mxu0 %v2528
        %v2831 = vpop.f32.mrb[0].mxu0
        %v2832 = vadd.f32 %v2667, %v2831
        %v2833 = vpop.f32.mrb[0].mxu0
        %v2834 = vpop.f32.mrb[0].mxu0
        %v2835 = vadd.f32 %v2667, %v2834
        %v2836 = vpop.f32.mrb[0].mxu0
        %2837 = vmatprep.mubr.bf16.mxu0 0
        %2838 = vmatmul.mubr.bf16.gmra.mrb[0].mxu0 %v2529
        %v2839 = vpop.f32.mrb[0].mxu0
        %v2840 = vadd.f32 %v2667, %v2839
        %v2841 = vpop.f32.mrb[0].mxu0
        %v2842 = vpop.f32.mrb[0].mxu0
        %v2843 = vadd.f32 %v2667, %v2842
        %v2844 = vpop.f32.mrb[0].mxu0
        %2845 = vmatprep.mubr.bf16.mxu0 0
        %2846 = vmatmul.mubr.bf16.gmra.mrb[0].mxu0 %v2530
        %v2847 = vpop.f32.mrb[0].mxu0
        %v2848 = vadd.f32 %v2667, %v2847
        %v2849 = vpop.f32.mrb[0].mxu0
        %v2850 = vpop.f32.mrb[0].mxu0
        %v2851 = vadd.f32 %v2667, %v2850
        %v2852 = vpop.f32.mrb[0].mxu0
        %2853 = vmatprep.mubr.bf16.mxu0 0
        %2854 = vmatmul.mubr.bf16.gmra.mrb[0].mxu0 %v2531
        %v2855 = vpop.f32.mrb[0].mxu0
        %v2856 = vadd.f32 %v2667, %v2855
        %v2857 = vpop.f32.mrb[0].mxu0
        %v2858 = vpop.f32.mrb[0].mxu0
        %v2859 = vadd.f32 %v2667, %v2858
        %v2860 = vpop.f32.mrb[0].mxu0
        %2861 = vmatprep.mubr.bf16.mxu0 0
        %2862 = vmatmul.mubr.bf16.gmra.mrb[0].mxu0 %v2532
        %v2863 = vpop.f32.mrb[0].mxu0
        %v2864 = vadd.f32 %v2667, %v2863
        %v2865 = vpop.f32.mrb[0].mxu0
        %v2866 = vpop.f32.mrb[0].mxu0
        %v2867 = vadd.f32 %v2667, %v2866
        %v2868 = vpop.f32.mrb[0].mxu0
        %2869 = vmatprep.mubr.bf16.mxu0 0
        %2870 = vmatmul.mubr.bf16.gmra.mrb[0].mxu0 %v2533
        %v2871 = vpop.f32.mrb[0].mxu0
        %v2872 = vadd.f32 %v2667, %v2871
        %v2873 = vpop.f32.mrb[0].mxu0
        %v2874 = vpop.f32.mrb[0].mxu0
        %v2875 = vadd.f32 %v2667, %v2874
        %v2876 = vpop.f32.mrb[0].mxu0
        %2877 = vmatprep.mubr.bf16.mxu0 0
        %2878 = vmatmul.mubr.bf16.gmra.mrb[0].mxu0 %v2534
        %v2879 = vpop.f32.mrb[0].mxu0
        %v2880 = vadd.f32 %v2667, %v2879
        %v2881 = vpop.f32.mrb[0].mxu0
        %v2882 = vpop.f32.mrb[0].mxu0
        %v2883 = vadd.f32 %v2667, %v2882
        %v2884 = vpop.f32.mrb[0].mxu0
        %2885 = vmatprep.mubr.bf16.mxu0 0
        %2886 = vmatmul.mubr.bf16.gmra.mrb[0].mxu0 %v2535
        %v2887 = vpop.f32.mrb[0].mxu0
        %v2888 = vadd.f32 %v2667, %v2887
        %v2889 = vpop.f32.mrb[0].mxu0
        %v2890 = vpop.f32.mrb[0].mxu0
        %v2891 = vadd.f32 %v2667, %v2890
        %v2892 = vpop.f32.mrb[0].mxu0
        %2893 = vmatprep.mubr.bf16.mxu0 0
        %2894 = vmatmul.mubr.bf16.gmra.mrb[0].mxu0 %v2536
        %v2895 = vpop.f32.mrb[0].mxu0
        %v2896 = vadd.f32 %v2667, %v2895
        %v2897 = vpop.f32.mrb[0].mxu0
        %v2898 = vpop.f32.mrb[0].mxu0
        %v2899 = vadd.f32 %v2667, %v2898
        %v2900 = vpop.f32.mrb[0].mxu0
        %2901 = vmatprep.mubr.bf16.mxu0 0
        %2902 = vmatmul.mubr.bf16.gmra.mrb[0].mxu0 %v2537
        %v2903 = vpop.f32.mrb[0].mxu0
        %v2904 = vadd.f32 %v2667, %v2903
        %v2905 = vpop.f32.mrb[0].mxu0
        %v2906 = vpop.f32.mrb[0].mxu0
        %v2907 = vadd.f32 %v2667, %v2906
        %v2908 = vpop.f32.mrb[0].mxu0
        %2909 = vmatprep.mubr.bf16.mxu0 0
        %2910 = vmatmul.mubr.bf16.gmra.mrb[0].mxu0 %v2538
        %v2911 = vpop.f32.mrb[0].mxu0
        %v2912 = vadd.f32 %v2667, %v2911
        %v2913 = vpop.f32.mrb[0].mxu0
        %v2914 = vpop.f32.mrb[0].mxu0
        %v2915 = vadd.f32 %v2667, %v2914
        %v2916 = vpop.f32.mrb[0].mxu0
        %2917 = vmatprep.mubr.bf16.mxu0 0
        %2918 = vmatmul.mubr.bf16.gmra.mrb[0].mxu0 %v2539
        %v2919 = vpop.f32.mrb[0].mxu0
        %v2920 = vadd.f32 %v2667, %v2919
        %v2921 = vpop.f32.mrb[0].mxu0
        %v2922 = vpop.f32.mrb[0].mxu0
        %v2923 = vadd.f32 %v2667, %v2922
        %v2924 = vpop.f32.mrb[0].mxu0
        %2925 = vmatprep.mubr.bf16.mxu0 0
        %2926 = vmatmul.mubr.bf16.gmra.mrb[0].mxu0 %v2540
        %v2927 = vpop.f32.mrb[0].mxu0
        %v2928 = vadd.f32 %v2667, %v2927
        %v2929 = vpop.f32.mrb[0].mxu0
        %v2930 = vpop.f32.mrb[0].mxu0
        %v2931 = vadd.f32 %v2667, %v2930
        %v2932 = vpop.f32.mrb[0].mxu0
        %2933 = vmatprep.mubr.bf16.mxu0 0
        %2934 = vmatmul.mubr.bf16.gmra.mrb[0].mxu0 %v2541
        %v2935 = vpop.f32.mrb[0].mxu0
        %v2936 = vadd.f32 %v2667, %v2935
        %v2937 = vpop.f32.mrb[0].mxu0
        %v2938 = vpop.f32.mrb[0].mxu0
        %v2939 = vadd.f32 %v2667, %v2938
        %v2940 = vpop.f32.mrb[0].mxu0
        %2941 = vmatprep.mubr.bf16.mxu0 0
        %2942 = vmatmul.mubr.bf16.gmra.mrb[0].mxu0 %v2542
        %v2943 = vpop.f32.mrb[0].mxu0
        %v2944 = vadd.f32 %v2667, %v2943
        %v2945 = vpop.f32.mrb[0].mxu0
        %v2946 = vpop.f32.mrb[0].mxu0
        %v2947 = vadd.f32 %v2667, %v2946
        %v2948 = vpop.f32.mrb[0].mxu0
        %2949 = vmatprep.mubr.bf16.mxu0 0
        %2950 = vmatmul.mubr.bf16.gmra.mrb[0].mxu0 %v2543
        %v2951 = vpop.f32.mrb[0].mxu0
        %v2952 = vadd.f32 %v2667, %v2951
        %v2953 = vpop.f32.mrb[0].mxu0
        %v2954 = vpop.f32.mrb[0].mxu0
        %v2955 = vadd.f32 %v2667, %v2954
        %v2956 = vpop.f32.mrb[0].mxu0
        %2957 = vmatprep.mubr.bf16.mxu0 0
        %2958 = vmatmul.mubr.bf16.gmra.mrb[0].mxu0 %v2544
        %v2959 = vpop.f32.mrb[0].mxu0
        %v2960 = vadd.f32 %v2667, %v2959
        %v2961 = vpop.f32.mrb[0].mxu0
        %v2962 = vpop.f32.mrb[0].mxu0
        %v2963 = vadd.f32 %v2667, %v2962
        %v2964 = vpop.f32.mrb[0].mxu0
        %2965 = vmatprep.mubr.bf16.mxu0 0
        %2966 = vmatmul.mubr.bf16.gmra.mrb[0].mxu0 %v2545
        %v2967 = vpop.f32.mrb[0].mxu0
        %v2968 = vadd.f32 %v2667, %v2967
        %v2969 = vpop.f32.mrb[0].mxu0
        %v2970 = vpop.f32.mrb[0].mxu0
        %v2971 = vadd.f32 %v2667, %v2970
        %v2972 = vpop.f32.mrb[0].mxu0
        %2973 = vmatprep.mubr.bf16.mxu0 0
        %2974 = vmatmul.mubr.bf16.gmra.mrb[0].mxu0 %v2546
        %v2975 = vpop.f32.mrb[0].mxu0
        %v2976 = vadd.f32 %v2667, %v2975
        %v2977 = vpop.f32.mrb[0].mxu0
        %v2978 = vpop.f32.mrb[0].mxu0
        %v2979 = vadd.f32 %v2667, %v2978
        %v2980 = vpop.f32.mrb[0].mxu0
        %2981 = vmatprep.mubr.bf16.mxu0 0
        %2982 = vmatmul.mubr.bf16.gmra.mrb[0].mxu0 %v2547
        %v2983 = vpop.f32.mrb[0].mxu0
        %v2984 = vadd.f32 %v2667, %v2983
        %v2985 = vpop.f32.mrb[0].mxu0
        %v2986 = vpop.f32.mrb[0].mxu0
        %v2987 = vadd.f32 %v2667, %v2986
        %v2988 = vpop.f32.mrb[0].mxu0
        %2989 = vmatprep.mubr.bf16.mxu0 0
        %2990 = vmatmul.mubr.bf16.gmra.mrb[0].mxu0 %v2548
        %v2991 = vpop.f32.mrb[0].mxu0
        %v2992 = vadd.f32 %v2667, %v2991
        %v2993 = vpop.f32.mrb[0].mxu0
        %v2994 = vpop.f32.mrb[0].mxu0
        %v2995 = vadd.f32 %v2667, %v2994
        %v2996 = vpop.f32.mrb[0].mxu0
        %2997 = vmatprep.mubr.bf16.mxu0 0
        %2998 = vmatmul.mubr.bf16.gmra.mrb[0].mxu0 %v2549
        %v2999 = vpop.f32.mrb[0].mxu0
        %v3000 = vadd.f32 %v2667, %v2999
        %v3001 = vpop.f32.mrb[0].mxu0
        %v3002 = vpop.f32.mrb[0].mxu0
        %v3003 = vadd.f32 %v2667, %v3002
        %v3004 = vpop.f32.mrb[0].mxu0
        %3005 = vmatprep.mubr.bf16.mxu0 0
        %3006 = vmatmul.mubr.bf16.gmra.mrb[0].mxu0 %v2550
        %v3007 = vpop.f32.mrb[0].mxu0
        %v3008 = vadd.f32 %v2667, %v3007
        %v3009 = vpop.f32.mrb[0].mxu0
        %v3010 = vpop.f32.mrb[0].mxu0
        %v3011 = vadd.f32 %v2667, %v3010
        %v3012 = vpop.f32.mrb[0].mxu0
        %3013 = vmatprep.mubr.bf16.mxu0 0
        %3014 = vmatmul.mubr.bf16.gmra.mrb[0].mxu0 %v2551
        %v3015 = vpop.f32.mrb[0].mxu0
        %v3016 = vadd.f32 %v2667, %v3015
        %v3017 = vpop.f32.mrb[0].mxu0
        %v3018 = vpop.f32.mrb[0].mxu0
        %v3019 = vadd.f32 %v2667, %v3018
        %v3020 = vpop.f32.mrb[0].mxu0
        %3021 = vmatprep.mubr.bf16.mxu0 0
        %3022 = vmatmul.mubr.bf16.gmra.mrb[0].mxu0 %v2552
        %v3023 = vpop.f32.mrb[0].mxu0
        %v3024 = vadd.f32 %v2667, %v3023
        %v3025 = vpop.f32.mrb[0].mxu0
        %v3026 = vpop.f32.mrb[0].mxu0
        %v3027 = vadd.f32 %v2667, %v3026
        %v3028 = vpop.f32.mrb[0].mxu0
        %3029 = vmatprep.mubr.bf16.mxu0 0
        %3030 = vmatmul.mubr.bf16.gmra.mrb[0].mxu0 %v2553
        %v3031 = vpop.f32.mrb[0].mxu0
        %v3032 = vadd.f32 %v2667, %v3031
        %v3033 = vpop.f32.mrb[0].mxu0
        %v3034 = vpop.f32.mrb[0].mxu0
        %v3035 = vadd.f32 %v2667, %v3034
        %v3036 = vpop.f32.mrb[0].mxu0
        %3037 = vmatprep.mubr.bf16.mxu0 0
        %3038 = vmatmul.mubr.bf16.gmra.mrb[0].mxu0 %v2554
        %v3039 = vpop.f32.mrb[0].mxu0
        %v3040 = vadd.f32 %v2667, %v3039
        %v3041 = vpop.f32.mrb[0].mxu0
        %v3042 = vpop.f32.mrb[0].mxu0
        %v3043 = vadd.f32 %v2667, %v3042
        %v3044 = vpop.f32.mrb[0].mxu0
        %3045 = vmatprep.mubr.bf16.mxu0 0
        %3046 = vmatmul.mubr.bf16.gmra.mrb[0].mxu0 %v2555
        %v3047 = vpop.f32.mrb[0].mxu0
        %v3048 = vadd.f32 %v2667, %v3047
        %v3049 = vpop.f32.mrb[0].mxu0
        %v3050 = vpop.f32.mrb[0].mxu0
        %v3051 = vadd.f32 %v2667, %v3050
        %v3052 = vpop.f32.mrb[0].mxu0
        %3053 = vmatprep.mubr.bf16.mxu0 0
        %3054 = vmatmul.mubr.bf16.gmra.mrb[0].mxu0 %v2556
        %v3055 = vpop.f32.mrb[0].mxu0
        %v3056 = vadd.f32 %v2667, %v3055
        %v3057 = vpop.f32.mrb[0].mxu0
        %v3058 = vpop.f32.mrb[0].mxu0
        %v3059 = vadd.f32 %v2667, %v3058
        %v3060 = vpop.f32.mrb[0].mxu0
        %3061 = vmatprep.mubr.bf16.mxu0 0
        %3062 = vmatmul.mubr.bf16.gmra.mrb[0].mxu0 %v2557
        %v3063 = vpop.f32.mrb[0].mxu0
        %v3064 = vadd.f32 %v2667, %v3063
        %v3065 = vpop.f32.mrb[0].mxu0
        %v3066 = vpop.f32.mrb[0].mxu0
        %v3067 = vadd.f32 %v2667, %v3066
        %v3068 = vpop.f32.mrb[0].mxu0
        %3069 = vmatprep.mubr.bf16.mxu0 0
        %3070 = vmatmul.mubr.bf16.gmra.mrb[0].mxu0 %v2558
        %v3071 = vpop.f32.mrb[0].mxu0
        %v3072 = vadd.f32 %v2667, %v3071
        %v3073 = vpop.f32.mrb[0].mxu0
        %v3074 = vpop.f32.mrb[0].mxu0
        %v3075 = vadd.f32 %v2667, %v3074
        %v3076 = vpop.f32.mrb[0].mxu0
        %3077 = vmatprep.mubr.bf16.mxu0 0
        %3078 = vmatmul.mubr.bf16.gmra.mrb[0].mxu0 %v2559
        %v3079 = vpop.f32.mrb[0].mxu0
        %v3080 = vadd.f32 %v2667, %v3079
        %v3081 = vpop.f32.mrb[0].mxu0
        %v3082 = vpop.f32.mrb[0].mxu0
        %v3083 = vadd.f32 %v2667, %v3082
        %v3084 = vpop.f32.mrb[0].mxu0
        %3085 = vmatprep.mubr.bf16.mxu0 0
        %3086 = vmatmul.mubr.bf16.gmra.mrb[0].mxu0 %v2560
        %v3087 = vpop.f32.mrb[0].mxu0
        %v3088 = vadd.f32 %v2667, %v3087
        %v3089 = vpop.f32.mrb[0].mxu0
        %v3090 = vpop.f32.mrb[0].mxu0
        %v3091 = vadd.f32 %v2667, %v3090
        %v3092 = vpop.f32.mrb[0].mxu0
        %3093 = vmatprep.mubr.bf16.mxu0 0
        %3094 = vmatmul.mubr.bf16.gmra.mrb[0].mxu0 %v2561
        %v3095 = vpop.f32.mrb[0].mxu0
        %v3096 = vadd.f32 %v2667, %v3095
        %v3097 = vpop.f32.mrb[0].mxu0
        %v3098 = vpop.f32.mrb[0].mxu0
        %v3099 = vadd.f32 %v2667, %v3098
        %v3100 = vpop.f32.mrb[0].mxu0
        %3101 = vmatprep.mubr.bf16.mxu0 0
        %3102 = vmatmul.mubr.bf16.gmra.mrb[0].mxu0 %v2562
        %v3103 = vpop.f32.mrb[0].mxu0
        %v3104 = vadd.f32 %v2667, %v3103
        %v3105 = vpop.f32.mrb[0].mxu0
        %v3106 = vpop.f32.mrb[0].mxu0
        %v3107 = vadd.f32 %v2667, %v3106
        %v3108 = vpop.f32.mrb[0].mxu0
        %3109 = vmatprep.mubr.bf16.mxu0 0
        %3110 = vmatmul.mubr.bf16.gmra.mrb[0].mxu0 %v2563
        %v3111 = vpop.f32.mrb[0].mxu0
        %v3112 = vadd.f32 %v2667, %v3111
        %v3113 = vpop.f32.mrb[0].mxu0
        %v3114 = vpop.f32.mrb[0].mxu0
        %v3115 = vadd.f32 %v2667, %v3114
        %v3116 = vpop.f32.mrb[0].mxu0
        %3117 = vmatprep.mubr.bf16.mxu0 0
        %3118 = vmatmul.mubr.bf16.gmra.mrb[0].mxu0 %v2564
        %v3119 = vpop.f32.mrb[0].mxu0
        %v3120 = vadd.f32 %v2667, %v3119
        %v3121 = vpop.f32.mrb[0].mxu0
        %v3122 = vpop.f32.mrb[0].mxu0
        %v3123 = vadd.f32 %v2667, %v3122
        %v3124 = vpop.f32.mrb[0].mxu0
        %3125 = vmatprep.mubr.bf16.mxu0 0
        %3126 = vmatmul.mubr.bf16.gmra.mrb[0].mxu0 %v2565
        %v3127 = vpop.f32.mrb[0].mxu0
        %v3128 = vadd.f32 %v2667, %v3127
        %v3129 = vpop.f32.mrb[0].mxu0
        %v3130 = vpop.f32.mrb[0].mxu0
        %v3131 = vadd.f32 %v2667, %v3130
        %v3132 = vpop.f32.mrb[0].mxu0
        %3133 = vmatprep.mubr.bf16.mxu0 0
        %3134 = vmatmul.mubr.bf16.gmra.mrb[0].mxu0 %v2566
        %v3135 = vpop.f32.mrb[0].mxu0
        %v3136 = vadd.f32 %v2667, %v3135
        %v3137 = vpop.f32.mrb[0].mxu0
        %v3138 = vpop.f32.mrb[0].mxu0
        %v3139 = vadd.f32 %v2667, %v3138
        %v3140 = vpop.f32.mrb[0].mxu0
        %3141 = vmatprep.mubr.bf16.mxu0 0
        %3142 = vmatmul.mubr.bf16.gmra.mrb[0].mxu0 %v2567
        %v3143 = vpop.f32.mrb[0].mxu0
        %v3144 = vadd.f32 %v2667, %v3143
        %v3145 = vpop.f32.mrb[0].mxu0
        %v3146 = vpop.f32.mrb[0].mxu0
        %v3147 = vadd.f32 %v2667, %v3146
        %v3148 = vpop.f32.mrb[0].mxu0
        %3149 = vmatprep.mubr.bf16.mxu0 0
        %3150 = vmatmul.mubr.bf16.gmra.mrb[0].mxu0 %v2568
        %v3151 = vpop.f32.mrb[0].mxu0
        %v3152 = vadd.f32 %v2667, %v3151
        %v3153 = vpop.f32.mrb[0].mxu0
        %v3154 = vpop.f32.mrb[0].mxu0
        %v3155 = vadd.f32 %v2667, %v3154
        %v3156 = vpop.f32.mrb[0].mxu0
        %3157 = vmatprep.mubr.bf16.mxu0 0
        %3158 = vmatmul.mubr.bf16.gmra.mrb[0].mxu0 %v2569
        %v3159 = vpop.f32.mrb[0].mxu0
        %v3160 = vadd.f32 %v2667, %v3159
        %v3161 = vpop.f32.mrb[0].mxu0
        %v3162 = vpop.f32.mrb[0].mxu0
        %v3163 = vadd.f32 %v2667, %v3162
        %v3164 = vpop.f32.mrb[0].mxu0
        %3165 = vmatprep.mubr.bf16.mxu0 0
        %3166 = vmatmul.mubr.bf16.gmra.mrb[0].mxu0 %v2570
        %v3167 = vpop.f32.mrb[0].mxu0
        %v3168 = vadd.f32 %v2667, %v3167
        %v3169 = vpop.f32.mrb[0].mxu0
        %v3170 = vpop.f32.mrb[0].mxu0
        %v3171 = vadd.f32 %v2667, %v3170
        %v3172 = vpop.f32.mrb[0].mxu0
        %3173 = vmatprep.mubr.bf16.mxu0 0
        %3174 = vmatmul.mubr.bf16.gmra.mrb[0].mxu0 %v2571
        %v3175 = vpop.f32.mrb[0].mxu0
        %v3176 = vadd.f32 %v2667, %v3175
        %v3177 = vpop.f32.mrb[0].mxu0
        %v3178 = vpop.f32.mrb[0].mxu0
        %v3179 = vadd.f32 %v2667, %v3178
        %v3180 = vpop.f32.mrb[0].mxu0
        %3181 = vmatprep.mubr.bf16.mxu0 0
        %3182 = vmatmul.mubr.bf16.gmra.mrb[0].mxu0 %v2572
        %v3183 = vpop.f32.mrb[0].mxu0
        %v3184 = vadd.f32 %v2667, %v3183
        %v3185 = vpop.f32.mrb[0].mxu0
        %v3186 = vpop.f32.mrb[0].mxu0
        %v3187 = vadd.f32 %v2667, %v3186
        %v3188 = vpop.f32.mrb[0].mxu0
        %3189 = vmatprep.mubr.bf16.mxu0 0
        %3190 = vmatmul.mubr.bf16.gmra.mrb[0].mxu0 %v2573
        %v3191 = vpop.f32.mrb[0].mxu0
        %v3192 = vadd.f32 %v2667, %v3191
        %v3193 = vpop.f32.mrb[0].mxu0
        %v3194 = vpop.f32.mrb[0].mxu0
        %v3195 = vadd.f32 %v2667, %v3194
        %v3196 = vpop.f32.mrb[0].mxu0
        %3197 = vmatprep.mubr.bf16.mxu0 0
        %3198 = vmatmul.mubr.bf16.gmra.mrb[0].mxu0 %v2574
        %v3199 = vpop.f32.mrb[0].mxu0
        %v3200 = vadd.f32 %v2667, %v3199
        %v3201 = vpop.f32.mrb[0].mxu0
        %v3202 = vpop.f32.mrb[0].mxu0
        %v3203 = vadd.f32 %v2667, %v3202
        %v3204 = vpop.f32.mrb[0].mxu0
        %3205 = vmatprep.mubr.bf16.mxu0 0
        %3206 = vmatmul.mubr.bf16.gmra.mrb[0].mxu0 %v2575
        %v3207 = vpop.f32.mrb[0].mxu0
        %v3208 = vadd.f32 %v2667, %v3207
        %v3209 = vpop.f32.mrb[0].mxu0
        %v3210 = vpop.f32.mrb[0].mxu0
        %v3211 = vadd.f32 %v2667, %v3210
        %v3212 = vpop.f32.mrb[0].mxu0
        %3213 = vmatprep.mubr.bf16.mxu0 0
        %3214 = vmatmul.mubr.bf16.gmra.mrb[0].mxu0 %v2576
        %v3215 = vpop.f32.mrb[0].mxu0
        %v3216 = vadd.f32 %v2667, %v3215
        %v3217 = vpop.f32.mrb[0].mxu0
        %v3218 = vpop.f32.mrb[0].mxu0
        %v3219 = vadd.f32 %v2667, %v3218
        %v3220 = vpop.f32.mrb[0].mxu0
        %3221 = vmatprep.mubr.bf16.mxu0 0
        %3222 = vmatmul.mubr.bf16.gmra.mrb[0].mxu0 %v2577
        %v3223 = vpop.f32.mrb[0].mxu0
        %v3224 = vadd.f32 %v2667, %v3223
        %v3225 = vpop.f32.mrb[0].mxu0
        %v3226 = vpop.f32.mrb[0].mxu0
        %v3227 = vadd.f32 %v2667, %v3226
        %v3228 = vpop.f32.mrb[0].mxu0
        %3229 = vmatprep.mubr.bf16.mxu0 0
        %3230 = vmatmul.mubr.bf16.gmra.mrb[0].mxu0 %v2578
        %v3231 = vpop.f32.mrb[0].mxu0
        %v3232 = vadd.f32 %v2667, %v3231
        %v3233 = vpop.f32.mrb[0].mxu0
        %v3234 = vpop.f32.mrb[0].mxu0
        %v3235 = vadd.f32 %v2667, %v3234
        %v3236 = vpop.f32.mrb[0].mxu0
        %3237 = vmatprep.mubr.bf16.mxu0 0
        %3238 = vmatmul.mubr.bf16.gmra.mrb[0].mxu0 %v2579
        %v3239 = vpop.f32.mrb[0].mxu0
        %v3240 = vadd.f32 %v2667, %v3239
        %v3241 = vpop.f32.mrb[0].mxu0
        %v3242 = vpop.f32.mrb[0].mxu0
        %v3243 = vadd.f32 %v2667, %v3242
        %v3244 = vpop.f32.mrb[0].mxu0
        %3245 = vmatprep.mubr.bf16.mxu0 0
        %3246 = vmatmul.mubr.bf16.gmra.mrb[0].mxu0 %v2580
        %v3247 = vpop.f32.mrb[0].mxu0
        %v3248 = vadd.f32 %v2667, %v3247
        %v3249 = vpop.f32.mrb[0].mxu0
        %v3250 = vpop.f32.mrb[0].mxu0
        %v3251 = vadd.f32 %v2667, %v3250
        %v3252 = vpop.f32.mrb[0].mxu0
        %3253 = vmatprep.mubr.bf16.mxu0 0
        %3254 = vmatmul.mubr.bf16.gmra.mrb[0].mxu0 %v2581
        %v3255 = vpop.f32.mrb[0].mxu0
        %v3256 = vadd.f32 %v2667, %v3255
        %v3257 = vpop.f32.mrb[0].mxu0
        %v3258 = vpop.f32.mrb[0].mxu0
        %v3259 = vadd.f32 %v2667, %v3258
        %v3260 = vpop.f32.mrb[0].mxu0
        %3261 = vmatprep.mubr.bf16.mxu0 0
        %3262 = vmatmul.mubr.bf16.gmra.mrb[0].mxu0 %v2582
        %v3263 = vpop.f32.mrb[0].mxu0
        %v3264 = vadd.f32 %v2667, %v3263
        %v3265 = vpop.f32.mrb[0].mxu0
        %v3266 = vpop.f32.mrb[0].mxu0
        %v3267 = vadd.f32 %v2667, %v3266
        %v3268 = vpop.f32.mrb[0].mxu0
        %3269 = vmatprep.mubr.bf16.mxu0 0
        %3270 = vmatmul.mubr.bf16.gmra.mrb[0].mxu0 %v2583
        %v3271 = vpop.f32.mrb[0].mxu0
        %v3272 = vadd.f32 %v2667, %v3271
        %v3273 = vpop.f32.mrb[0].mxu0
        %v3274 = vpop.f32.mrb[0].mxu0
        %v3275 = vadd.f32 %v2667, %v3274
        %v3276 = vpop.f32.mrb[0].mxu0
        %3277 = vmatprep.mubr.bf16.mxu0 0
        %3278 = vmatmul.mubr.bf16.gmra.mrb[0].mxu0 %v2584
        %v3279 = vpop.f32.mrb[0].mxu0
        %v3280 = vadd.f32 %v2667, %v3279
        %v3281 = vpop.f32.mrb[0].mxu0
        %v3282 = vpop.f32.mrb[0].mxu0
        %v3283 = vadd.f32 %v2667, %v3282
        %v3284 = vpop.f32.mrb[0].mxu0
        %3285 = vmatprep.mubr.bf16.mxu0 0
        %3286 = vmatmul.mubr.bf16.gmra.mrb[0].mxu0 %v2585
        %v3287 = vpop.f32.mrb[0].mxu0
        %v3288 = vadd.f32 %v2667, %v3287
        %v3289 = vpop.f32.mrb[0].mxu0
        %v3290 = vpop.f32.mrb[0].mxu0
        %v3291 = vadd.f32 %v2667, %v3290
        %v3292 = vpop.f32.mrb[0].mxu0
        %3293 = vmatprep.mubr.bf16.mxu0 0
        %3294 = vmatmul.mubr.bf16.gmra.mrb[0].mxu0 %v2586
        %v3295 = vpop.f32.mrb[0].mxu0
        %v3296 = vadd.f32 %v2667, %v3295
        %v3297 = vpop.f32.mrb[0].mxu0
        %v3298 = vpop.f32.mrb[0].mxu0
        %v3299 = vadd.f32 %v2667, %v3298
        %v3300 = vpop.f32.mrb[0].mxu0
        %3301 = vmatprep.mubr.bf16.mxu0 0
        %3302 = vmatmul.mubr.bf16.gmra.mrb[0].mxu0 %v2587
        %v3303 = vpop.f32.mrb[0].mxu0
        %v3304 = vadd.f32 %v2667, %v3303
        %v3305 = vpop.f32.mrb[0].mxu0
        %v3306 = vpop.f32.mrb[0].mxu0
        %v3307 = vadd.f32 %v2667, %v3306
        %v3308 = vpop.f32.mrb[0].mxu0
        %3309 = vmatprep.mubr.bf16.mxu0 0
        %3310 = vmatmul.mubr.bf16.gmra.mrb[0].mxu0 %v2588
        %v3311 = vpop.f32.mrb[0].mxu0
        %v3312 = vadd.f32 %v2667, %v3311
        %v3313 = vpop.f32.mrb[0].mxu0
        %v3314 = vpop.f32.mrb[0].mxu0
        %v3315 = vadd.f32 %v2667, %v3314
        %v3316 = vpop.f32.mrb[0].mxu0
        %3317 = vmatprep.mubr.bf16.mxu0 0
        %3318 = vmatmul.mubr.bf16.gmra.mrb[0].mxu0 %v2589
        %v3319 = vpop.f32.mrb[0].mxu0
        %v3320 = vadd.f32 %v2667, %v3319
        %v3321 = vpop.f32.mrb[0].mxu0
        %v3322 = vpop.f32.mrb[0].mxu0
        %v3323 = vadd.f32 %v2667, %v3322
        %v3324 = vpop.f32.mrb[0].mxu0
        %3325 = vmatprep.mubr.bf16.mxu0 0
        %3326 = vmatmul.mubr.bf16.gmra.mrb[0].mxu0 %v2590
        %v3327 = vpop.f32.mrb[0].mxu0
        %v3328 = vadd.f32 %v2667, %v3327
        %v3329 = vpop.f32.mrb[0].mxu0
        %v3330 = vpop.f32.mrb[0].mxu0
        %v3331 = vadd.f32 %v2667, %v3330
        %v3332 = vpop.f32.mrb[0].mxu0
        %3333 = vmatprep.mubr.bf16.mxu0 0
        %3334 = vmatmul.mubr.bf16.gmra.mrb[0].mxu0 %v2591
        %v3335 = vpop.f32.mrb[0].mxu0
        %v3336 = vadd.f32 %v2667, %v3335
        %v3337 = vpop.f32.mrb[0].mxu0
        %v3338 = vpop.f32.mrb[0].mxu0
        %v3339 = vadd.f32 %v2667, %v3338
        %v3340 = vpop.f32.mrb[0].mxu0
        %3341 = vmatprep.mubr.bf16.mxu0 0
        %3342 = vmatmul.mubr.bf16.gmra.mrb[0].mxu0 %v2592
        %v3343 = vpop.f32.mrb[0].mxu0
        %v3344 = vadd.f32 %v2667, %v3343
        %v3345 = vpop.f32.mrb[0].mxu0
        %v3346 = vpop.f32.mrb[0].mxu0
        %v3347 = vadd.f32 %v2667, %v3346
        %v3348 = vpop.f32.mrb[0].mxu0
        %3349 = vmatprep.mubr.bf16.mxu0 0
        %3350 = vmatmul.mubr.bf16.gmra.mrb[0].mxu0 %v2593
        %v3351 = vpop.f32.mrb[0].mxu0
        %v3352 = vadd.f32 %v2667, %v3351
        %v3353 = vpop.f32.mrb[0].mxu0
        %v3354 = vpop.f32.mrb[0].mxu0
        %v3355 = vadd.f32 %v2667, %v3354
        %v3356 = vpop.f32.mrb[0].mxu0
        %3357 = vmatprep.mubr.bf16.mxu0 0
        %3358 = vmatmul.mubr.bf16.gmra.mrb[0].mxu0 %v2594
        %v3359 = vpop.f32.mrb[0].mxu0
        %v3360 = vadd.f32 %v2667, %v3359
        %v3361 = vpop.f32.mrb[0].mxu0
        %v3362 = vpop.f32.mrb[0].mxu0
        %v3363 = vadd.f32 %v2667, %v3362
        %v3364 = vpop.f32.mrb[0].mxu0
        %3365 = vmatprep.mubr.bf16.mxu0 0
        %3366 = vmatmul.mubr.bf16.gmra.mrb[0].mxu0 %v2595
        %v3367 = vpop.f32.mrb[0].mxu0
        %v3368 = vadd.f32 %v2667, %v3367
        %v3369 = vpop.f32.mrb[0].mxu0
        %v3370 = vpop.f32.mrb[0].mxu0
        %v3371 = vadd.f32 %v2667, %v3370
        %v3372 = vpop.f32.mrb[0].mxu0
        %3373 = vmatprep.mubr.bf16.mxu0 0
        %3374 = vmatmul.mubr.bf16.gmra.mrb[0].mxu0 %v2596
        %v3375 = vpop.f32.mrb[0].mxu0
        %v3376 = vadd.f32 %v2667, %v3375
        %v3377 = vpop.f32.mrb[0].mxu0
        %v3378 = vpop.f32.mrb[0].mxu0
        %v3379 = vadd.f32 %v2667, %v3378
        %v3380 = vpop.f32.mrb[0].mxu0
        %3381 = vmatprep.mubr.bf16.mxu0 0
        %3382 = vmatmul.mubr.bf16.gmra.mrb[0].mxu0 %v2597
        %v3383 = vpop.f32.mrb[0].mxu0
        %v3384 = vadd.f32 %v2667, %v3383
        %v3385 = vpop.f32.mrb[0].mxu0
        %v3386 = vpop.f32.mrb[0].mxu0
        %v3387 = vadd.f32 %v2667, %v3386
        %v3388 = vpop.f32.mrb[0].mxu0
        %3389 = vmatprep.mubr.bf16.mxu0 0
        %3390 = vmatmul.mubr.bf16.gmra.mrb[0].mxu0 %v2598
        %v3391 = vpop.f32.mrb[0].mxu0
        %v3392 = vadd.f32 %v2667, %v3391
        %v3393 = vpop.f32.mrb[0].mxu0
        %v3394 = vpop.f32.mrb[0].mxu0
        %v3395 = vadd.f32 %v2667, %v3394
        %v3396 = vpop.f32.mrb[0].mxu0
        %3397 = vmatprep.mubr.bf16.mxu0 0
        %3398 = vmatmul.mubr.bf16.gmra.mrb[0].mxu0 %v2599
        %v3399 = vpop.f32.mrb[0].mxu0
        %v3400 = vadd.f32 %v2667, %v3399
        %v3401 = vpop.f32.mrb[0].mxu0
        %v3402 = vpop.f32.mrb[0].mxu0
        %v3403 = vadd.f32 %v2667, %v3402
        %v3404 = vpop.f32.mrb[0].mxu0
        %3405 = vmatprep.mubr.bf16.mxu0 0
        %3406 = vmatmul.mubr.bf16.gmra.mrb[0].mxu0 %v2600
        %v3407 = vpop.f32.mrb[0].mxu0
        %v3408 = vadd.f32 %v2667, %v3407
        %v3409 = vpop.f32.mrb[0].mxu0
        %v3410 = vpop.f32.mrb[0].mxu0
        %v3411 = vadd.f32 %v2667, %v3410
        %v3412 = vpop.f32.mrb[0].mxu0
        %3413 = vmatprep.mubr.bf16.mxu0 0
        %3414 = vmatmul.mubr.bf16.gmra.mrb[0].mxu0 %v2601
        %v3415 = vpop.f32.mrb[0].mxu0
        %v3416 = vadd.f32 %v2667, %v3415
        %v3417 = vpop.f32.mrb[0].mxu0
        %v3418 = vpop.f32.mrb[0].mxu0
        %v3419 = vadd.f32 %v2667, %v3418
        %v3420 = vpop.f32.mrb[0].mxu0
        %3421 = vmatprep.mubr.bf16.mxu0 0
        %3422 = vmatmul.mubr.bf16.gmra.mrb[0].mxu0 %v2602
        %v3423 = vpop.f32.mrb[0].mxu0
        %v3424 = vadd.f32 %v2667, %v3423
        %v3425 = vpop.f32.mrb[0].mxu0
        %v3426 = vpop.f32.mrb[0].mxu0
        %v3427 = vadd.f32 %v2667, %v3426
        %v3428 = vpop.f32.mrb[0].mxu0
        %3429 = vmatprep.mubr.bf16.mxu0 0
        %3430 = vmatmul.mubr.bf16.gmra.mrb[0].mxu0 %v2603
        %v3431 = vpop.f32.mrb[0].mxu0
        %v3432 = vadd.f32 %v2667, %v3431
        %v3433 = vpop.f32.mrb[0].mxu0
        %v3434 = vpop.f32.mrb[0].mxu0
        %v3435 = vadd.f32 %v2667, %v3434
        %v3436 = vpop.f32.mrb[0].mxu0
        %3437 = vmatprep.mubr.bf16.mxu0 0
        %3438 = vmatmul.mubr.bf16.gmra.mrb[0].mxu0 %v2604
        %v3439 = vpop.f32.mrb[0].mxu0
        %v3440 = vadd.f32 %v2667, %v3439
        %v3441 = vpop.f32.mrb[0].mxu0
        %v3442 = vpop.f32.mrb[0].mxu0
        %v3443 = vadd.f32 %v2667, %v3442
        %v3444 = vpop.f32.mrb[0].mxu0
        %3445 = vmatprep.mubr.bf16.mxu0 0
        %3446 = vmatmul.mubr.bf16.gmra.mrb[0].mxu0 %v2605
        %v3447 = vpop.f32.mrb[0].mxu0
        %v3448 = vadd.f32 %v2667, %v3447
        %v3449 = vpop.f32.mrb[0].mxu0
        %v3450 = vpop.f32.mrb[0].mxu0
        %v3451 = vadd.f32 %v2667, %v3450
        %v3452 = vpop.f32.mrb[0].mxu0
        %3453 = vmatprep.mubr.bf16.mxu0 0
        %3454 = vmatmul.mubr.bf16.gmra.mrb[0].mxu0 %v2606
        %v3455 = vpop.f32.mrb[0].mxu0
        %v3456 = vadd.f32 %v2667, %v3455
        %v3457 = vpop.f32.mrb[0].mxu0
        %v3458 = vpop.f32.mrb[0].mxu0
        %v3459 = vadd.f32 %v2667, %v3458
        %v3460 = vpop.f32.mrb[0].mxu0
        %3461 = vmatprep.mubr.bf16.mxu0 0
        %3462 = vmatmul.mubr.bf16.gmra.mrb[0].mxu0 %v2607
        %v3463 = vpop.f32.mrb[0].mxu0
        %v3464 = vadd.f32 %v2667, %v3463
        %v3465 = vpop.f32.mrb[0].mxu0
        %v3466 = vpop.f32.mrb[0].mxu0
        %v3467 = vadd.f32 %v2667, %v3466
        %v3468 = vpop.f32.mrb[0].mxu0
        %3469 = vmatprep.mubr.bf16.mxu0 0
        %3470 = vmatmul.mubr.bf16.gmra.mrb[0].mxu0 %v2608
        %v3471 = vpop.f32.mrb[0].mxu0
        %v3472 = vadd.f32 %v2667, %v3471
        %v3473 = vpop.f32.mrb[0].mxu0
        %v3474 = vpop.f32.mrb[0].mxu0
        %v3475 = vadd.f32 %v2667, %v3474
        %v3476 = vpop.f32.mrb[0].mxu0
        %3477 = vmatprep.mubr.bf16.mxu0 0
        %3478 = vmatmul.mubr.bf16.gmra.mrb[0].mxu0 %v2609
        %v3479 = vpop.f32.mrb[0].mxu0
        %v3480 = vadd.f32 %v2667, %v3479
        %v3481 = vpop.f32.mrb[0].mxu0
        %v3482 = vpop.f32.mrb[0].mxu0
        %v3483 = vadd.f32 %v2667, %v3482
        %v3484 = vpop.f32.mrb[0].mxu0
        %3485 = vmatprep.mubr.bf16.mxu0 0
        %3486 = vmatmul.mubr.bf16.gmra.mrb[0].mxu0 %v2610
        %v3487 = vpop.f32.mrb[0].mxu0
        %v3488 = vadd.f32 %v2667, %v3487
        %v3489 = vpop.f32.mrb[0].mxu0
        %v3490 = vpop.f32.mrb[0].mxu0
        %v3491 = vadd.f32 %v2667, %v3490
        %v3492 = vpop.f32.mrb[0].mxu0
        %3493 = vmatprep.mubr.bf16.mxu0 0
        %3494 = vmatmul.mubr.bf16.gmra.mrb[0].mxu0 %v2611
        %v3495 = vpop.f32.mrb[0].mxu0
        %v3496 = vadd.f32 %v2667, %v3495
        %v3497 = vpop.f32.mrb[0].mxu0
        %v3498 = vpop.f32.mrb[0].mxu0
        %v3499 = vadd.f32 %v2667, %v3498
        %v3500 = vpop.f32.mrb[0].mxu0
        %3501 = vmatprep.mubr.bf16.mxu0 0
        %3502 = vmatmul.mubr.bf16.gmra.mrb[0].mxu0 %v2612
        %v3503 = vpop.f32.mrb[0].mxu0
        %v3504 = vadd.f32 %v2667, %v3503
        %v3505 = vpop.f32.mrb[0].mxu0
        %v3506 = vpop.f32.mrb[0].mxu0
        %v3507 = vadd.f32 %v2667, %v3506
        %v3508 = vpop.f32.mrb[0].mxu0
        %3509 = vmatprep.mubr.bf16.mxu0 0
        %3510 = vmatmul.mubr.bf16.gmra.mrb[0].mxu0 %v2613
        %v3511 = vpop.f32.mrb[0].mxu0
        %v3512 = vadd.f32 %v2667, %v3511
        %v3513 = vpop.f32.mrb[0].mxu0
        %v3514 = vpop.f32.mrb[0].mxu0
        %v3515 = vadd.f32 %v2667, %v3514
        %v3516 = vpop.f32.mrb[0].mxu0
        %3517 = vmatprep.mubr.bf16.mxu0 0
        %3518 = vmatmul.mubr.bf16.gmra.mrb[0].mxu0 %v2614
        %v3519 = vpop.f32.mrb[0].mxu0
        %v3520 = vadd.f32 %v2667, %v3519
        %v3521 = vpop.f32.mrb[0].mxu0
        %v3522 = vpop.f32.mrb[0].mxu0
        %v3523 = vadd.f32 %v2667, %v3522
        %v3524 = vpop.f32.mrb[0].mxu0
        %3525 = vmatprep.mubr.bf16.mxu0 0
        %3526 = vmatmul.mubr.bf16.gmra.mrb[0].mxu0 %v2615
        %v3527 = vpop.f32.mrb[0].mxu0
        %v3528 = vadd.f32 %v2667, %v3527
        %v3529 = vpop.f32.mrb[0].mxu0
        %v3530 = vpop.f32.mrb[0].mxu0
        %v3531 = vadd.f32 %v2667, %v3530
        %v3532 = vpop.f32.mrb[0].mxu0
        %3533 = vmatprep.mubr.bf16.mxu0 0
        %3534 = vmatmul.mubr.bf16.gmra.mrb[0].mxu0 %v2616
        %v3535 = vpop.f32.mrb[0].mxu0
        %v3536 = vadd.f32 %v2667, %v3535
        %v3537 = vpop.f32.mrb[0].mxu0
        %v3538 = vpop.f32.mrb[0].mxu0
        %v3539 = vadd.f32 %v2667, %v3538
        %v3540 = vpop.f32.mrb[0].mxu0
        %3541 = vmatprep.mubr.bf16.mxu0 0
        %3542 = vmatmul.mubr.bf16.gmra.mrb[0].mxu0 %v2617
        %v3543 = vpop.f32.mrb[0].mxu0
        %v3544 = vadd.f32 %v2667, %v3543
        %v3545 = vpop.f32.mrb[0].mxu0
        %v3546 = vpop.f32.mrb[0].mxu0
        %v3547 = vadd.f32 %v2667, %v3546
        %v3548 = vpop.f32.mrb[0].mxu0
        %3549 = vmatprep.mubr.bf16.mxu0 0
        %3550 = vmatmul.mubr.bf16.gmra.mrb[0].mxu0 %v2618
        %v3551 = vpop.f32.mrb[0].mxu0
        %v3552 = vadd.f32 %v2667, %v3551
        %v3553 = vpop.f32.mrb[0].mxu0
        %v3554 = vpop.f32.mrb[0].mxu0
        %v3555 = vadd.f32 %v2667, %v3554
        %v3556 = vpop.f32.mrb[0].mxu0
        %3557 = vmatprep.mubr.bf16.mxu0 0
        %3558 = vmatmul.mubr.bf16.gmra.mrb[0].mxu0 %v2619
        %v3559 = vpop.f32.mrb[0].mxu0
        %v3560 = vadd.f32 %v2667, %v3559
        %v3561 = vpop.f32.mrb[0].mxu0
        %v3562 = vpop.f32.mrb[0].mxu0
        %v3563 = vadd.f32 %v2667, %v3562
        %v3564 = vpop.f32.mrb[0].mxu0
        %3565 = vmatprep.mubr.bf16.mxu0 0
        %3566 = vmatmul.mubr.bf16.gmra.mrb[0].mxu0 %v2620
        %v3567 = vpop.f32.mrb[0].mxu0
        %v3568 = vadd.f32 %v2667, %v3567
        %v3569 = vpop.f32.mrb[0].mxu0
        %v3570 = vpop.f32.mrb[0].mxu0
        %v3571 = vadd.f32 %v2667, %v3570
        %v3572 = vpop.f32.mrb[0].mxu0
        %3573 = vmatprep.mubr.bf16.mxu0 0
        %3574 = vmatmul.mubr.bf16.gmra.mrb[0].mxu0 %v2621
        %v3575 = vpop.f32.mrb[0].mxu0
        %v3576 = vadd.f32 %v2667, %v3575
        %v3577 = vpop.f32.mrb[0].mxu0
        %v3578 = vpop.f32.mrb[0].mxu0
        %v3579 = vadd.f32 %v2667, %v3578
        %v3580 = vpop.f32.mrb[0].mxu0
        %3581 = vmatprep.mubr.bf16.mxu0 0
        %3582 = vmatmul.mubr.bf16.gmra.mrb[0].mxu0 %v2622
        %v3583 = vpop.f32.mrb[0].mxu0
        %v3584 = vadd.f32 %v2667, %v3583
        %v3585 = vpop.f32.mrb[0].mxu0
        %v3586 = vpop.f32.mrb[0].mxu0
        %v3587 = vadd.f32 %v2667, %v3586
        %v3588 = vpop.f32.mrb[0].mxu0
        %3589 = vmatprep.mubr.bf16.mxu0 0
        %3590 = vmatmul.mubr.bf16.gmra.mrb[0].mxu0 %v2623
        %v3591 = vpop.f32.mrb[0].mxu0
        %v3592 = vadd.f32 %v2667, %v3591
        %v3593 = vpop.f32.mrb[0].mxu0
        %v3594 = vpop.f32.mrb[0].mxu0
        %v3595 = vadd.f32 %v2667, %v3594
        %v3596 = vpop.f32.mrb[0].mxu0
        %3597 = vmatprep.mubr.bf16.mxu0 0
        %3598 = vmatmul.mubr.bf16.gmra.mrb[0].mxu0 %v2624
        %v3599 = vpop.f32.mrb[0].mxu0
        %v3600 = vadd.f32 %v2667, %v3599
        %v3601 = vpop.f32.mrb[0].mxu0
        %v3602 = vpop.f32.mrb[0].mxu0
        %v3603 = vadd.f32 %v2667, %v3602
        %v3604 = vpop.f32.mrb[0].mxu0
        %3605 = vmatprep.mubr.bf16.mxu0 0
        %3606 = vmatmul.mubr.bf16.gmra.mrb[0].mxu0 %v2625
        %v3607 = vpop.f32.mrb[0].mxu0
        %v3608 = vadd.f32 %v2667, %v3607
        %v3609 = vpop.f32.mrb[0].mxu0
        %v3610 = vpop.f32.mrb[0].mxu0
        %v3611 = vadd.f32 %v2667, %v3610
        %v3612 = vpop.f32.mrb[0].mxu0
        %3613 = vmatprep.mubr.bf16.mxu0 0
        %3614 = vmatmul.mubr.bf16.gmra.mrb[0].mxu0 %v2626
        %v3615 = vpop.f32.mrb[0].mxu0
        %v3616 = vadd.f32 %v2667, %v3615
        %v3617 = vpop.f32.mrb[0].mxu0
        %v3618 = vpop.f32.mrb[0].mxu0
        %v3619 = vadd.f32 %v2667, %v3618
        %v3620 = vpop.f32.mrb[0].mxu0
        %3621 = vmatprep.mubr.bf16.mxu0 0
        %3622 = vmatmul.mubr.bf16.gmra.mrb[0].mxu0 %v2627
        %v3623 = vpop.f32.mrb[0].mxu0
        %v3624 = vadd.f32 %v2667, %v3623
        %v3625 = vpop.f32.mrb[0].mxu0
        %v3626 = vpop.f32.mrb[0].mxu0
        %v3627 = vadd.f32 %v2667, %v3626
        %v3628 = vpop.f32.mrb[0].mxu0
        %3629 = vmatprep.mubr.bf16.mxu0 0
        %3630 = vmatmul.mubr.bf16.gmra.mrb[0].mxu0 %v2628
        %v3631 = vpop.f32.mrb[0].mxu0
        %v3632 = vadd.f32 %v2667, %v3631
        %v3633 = vpop.f32.mrb[0].mxu0
        %v3634 = vpop.f32.mrb[0].mxu0
        %v3635 = vadd.f32 %v2667, %v3634
        %v3636 = vpop.f32.mrb[0].mxu0
        %3637 = vmatprep.mubr.bf16.mxu0 0
        %3638 = vmatmul.mubr.bf16.gmra.mrb[0].mxu0 %v2629
        %v3639 = vpop.f32.mrb[0].mxu0
        %v3640 = vadd.f32 %v2667, %v3639
        %v3641 = vpop.f32.mrb[0].mxu0
        %v3642 = vpop.f32.mrb[0].mxu0
        %v3643 = vadd.f32 %v2667, %v3642
        %v3644 = vpop.f32.mrb[0].mxu0
        %3645 = vmatprep.mubr.bf16.mxu0 0
        %3646 = vmatmul.mubr.bf16.gmra.mrb[0].mxu0 %v2630
        %v3647 = vpop.f32.mrb[0].mxu0
        %v3648 = vadd.f32 %v2667, %v3647
        %v3649 = vpop.f32.mrb[0].mxu0
        %v3650 = vpop.f32.mrb[0].mxu0
        %v3651 = vadd.f32 %v2667, %v3650
        %v3652 = vpop.f32.mrb[0].mxu0
        %3653 = vmatprep.mubr.bf16.mxu0 0
        %3654 = vmatmul.mubr.bf16.gmra.mrb[0].mxu0 %v2631
        %v3655 = vpop.f32.mrb[0].mxu0
        %v3656 = vadd.f32 %v2667, %v3655
        %v3657 = vpop.f32.mrb[0].mxu0
        %v3658 = vpop.f32.mrb[0].mxu0
        %v3659 = vadd.f32 %v2667, %v3658
        %v3660 = vpop.f32.mrb[0].mxu0
        %3661 = vmatprep.mubr.bf16.mxu0 0
        %3662 = vmatmul.mubr.bf16.gmra.mrb[0].mxu0 %v2632
        %v3663 = vpop.f32.mrb[0].mxu0
        %v3664 = vadd.f32 %v2667, %v3663
        %v3665 = vpop.f32.mrb[0].mxu0
        %v3666 = vpop.f32.mrb[0].mxu0
        %v3667 = vadd.f32 %v2667, %v3666
        %v3668 = vpop.f32.mrb[0].mxu0
        %3669 = vmatprep.mubr.bf16.mxu0 0
        %3670 = vmatmul.mubr.bf16.gmra.mrb[0].mxu0 %v2633
        %v3671 = vpop.f32.mrb[0].mxu0
        %v3672 = vadd.f32 %v2667, %v3671
        %v3673 = vpop.f32.mrb[0].mxu0
        %v3674 = vpop.f32.mrb[0].mxu0
        %v3675 = vadd.f32 %v2667, %v3674
        %v3676 = vpop.f32.mrb[0].mxu0
        %3677 = vmatprep.mubr.bf16.mxu0 0
        %3678 = vmatmul.mubr.bf16.gmra.mrb[0].mxu0 %v2634
        %v3679 = vpop.f32.mrb[0].mxu0
        %v3680 = vadd.f32 %v2667, %v3679
        %v3681 = vpop.f32.mrb[0].mxu0
        %v3682 = vpop.f32.mrb[0].mxu0
        %v3683 = vadd.f32 %v2667, %v3682
        %v3684 = vpop.f32.mrb[0].mxu0
        %3685 = vmatprep.mubr.bf16.mxu0 0
        %3686 = vmatmul.mubr.bf16.gmra.mrb[0].mxu0 %v2635
        %v3687 = vpop.f32.mrb[0].mxu0
        %v3688 = vadd.f32 %v2667, %v3687
        %v3689 = vpop.f32.mrb[0].mxu0
        %v3690 = vpop.f32.mrb[0].mxu0
        %v3691 = vadd.f32 %v2667, %v3690
        %v3692 = vpop.f32.mrb[0].mxu0
        %3693 = vmatprep.mubr.bf16.mxu0 0
        %3694 = vmatmul.mubr.bf16.gmra.mrb[0].mxu0 %v2636
        %v3695 = vpop.f32.mrb[0].mxu0
        %v3696 = vadd.f32 %v2667, %v3695
        %v3697 = vpop.f32.mrb[0].mxu0
        %v3698 = vpop.f32.mrb[0].mxu0
        %v3699 = vadd.f32 %v2667, %v3698
        %v3700 = vpop.f32.mrb[0].mxu0
        %3701 = vmatprep.mubr.bf16.mxu0 0
        %3702 = vmatmul.mubr.bf16.gmra.mrb[0].mxu0 %v2637
        %v3703 = vpop.f32.mrb[0].mxu0
        %v3704 = vadd.f32 %v2667, %v3703
        %v3705 = vpop.f32.mrb[0].mxu0
        %v3706 = vpop.f32.mrb[0].mxu0
        %v3707 = vadd.f32 %v2667, %v3706
        %v3708 = vpop.f32.mrb[0].mxu0
        %3709 = vmatprep.mubr.bf16.mxu0 0
        %3710 = vmatmul.mubr.bf16.gmra.mrb[0].mxu0 %v2638
        %v3711 = vpop.f32.mrb[0].mxu0
        %v3712 = vadd.f32 %v2667, %v3711
        %v3713 = vpop.f32.mrb[0].mxu0
        %v3714 = vpop.f32.mrb[0].mxu0
        %v3715 = vadd.f32 %v2667, %v3714
        %v3716 = vpop.f32.mrb[0].mxu0
        %3717 = vmatprep.mubr.bf16.mxu0 0
        %3718 = vmatmul.mubr.bf16.gmra.mrb[0].mxu0 %v2639
        %v3719 = vpop.f32.mrb[0].mxu0
        %v3720 = vadd.f32 %v2667, %v3719
        %v3721 = vpop.f32.mrb[0].mxu0
        %v3722 = vpop.f32.mrb[0].mxu0
        %v3723 = vadd.f32 %v2667, %v3722
        %v3724 = vpop.f32.mrb[0].mxu0
        %3725 = vmatprep.mubr.bf16.mxu0 0
        %3726 = vmatmul.mubr.bf16.gmra.mrb[0].mxu0 %v2640
        %v3727 = vpop.f32.mrb[0].mxu0
        %v3728 = vadd.f32 %v2667, %v3727
        %v3729 = vpop.f32.mrb[0].mxu0
        %v3730 = vpop.f32.mrb[0].mxu0
        %v3731 = vadd.f32 %v2667, %v3730
        %v3732 = vpop.f32.mrb[0].mxu0
        %3733 = vmatprep.mubr.bf16.mxu0 0
        %3734 = vmatmul.mubr.bf16.gmra.mrb[0].mxu0 %v2641
        %v3735 = vpop.f32.mrb[0].mxu0
        %v3736 = vadd.f32 %v2667, %v3735
        %v3737 = vpop.f32.mrb[0].mxu0
        %v3738 = vpop.f32.mrb[0].mxu0
        %v3739 = vadd.f32 %v2667, %v3738
        %v3740 = vpop.f32.mrb[0].mxu0
        %3741 = vmatprep.mubr.bf16.mxu0 0
        %3742 = vmatmul.mubr.bf16.gmra.mrb[0].mxu0 %v2642
        %v3743 = vpop.f32.mrb[0].mxu0
        %v3744 = vadd.f32 %v2667, %v3743
        %v3745 = vpop.f32.mrb[0].mxu0
        %v3746 = vpop.f32.mrb[0].mxu0
        %v3747 = vadd.f32 %v2667, %v3746
        %v3748 = vpop.f32.mrb[0].mxu0
        %3749 = vmatprep.mubr.bf16.mxu0 0
        %3750 = vmatmul.mubr.bf16.gmra.mrb[0].mxu0 %v2643
        %v3751 = vpop.f32.mrb[0].mxu0
        %v3752 = vadd.f32 %v2667, %v3751
        %v3753 = vpop.f32.mrb[0].mxu0
        %v3754 = vpop.f32.mrb[0].mxu0
        %v3755 = vadd.f32 %v2667, %v3754
        %v3756 = vpop.f32.mrb[0].mxu0
        %3757 = vmatprep.mubr.bf16.mxu0 0
        %3758 = vmatmul.mubr.bf16.gmra.mrb[0].mxu0 %v2644
        %v3759 = vpop.f32.mrb[0].mxu0
        %v3760 = vadd.f32 %v2667, %v3759
        %v3761 = vpop.f32.mrb[0].mxu0
        %v3762 = vpop.f32.mrb[0].mxu0
        %v3763 = vadd.f32 %v2667, %v3762
        %v3764 = vpop.f32.mrb[0].mxu0
        %3765 = vmatprep.mubr.bf16.mxu0 0
        %3766 = vmatmul.mubr.bf16.gmra.mrb[0].mxu0 %v2645
        %v3767 = vpop.f32.mrb[0].mxu0
        %v3768 = vadd.f32 %v2667, %v3767
        %v3769 = vpop.f32.mrb[0].mxu0
        %v3770 = vpop.f32.mrb[0].mxu0
        %v3771 = vadd.f32 %v2667, %v3770
        %v3772 = vpop.f32.mrb[0].mxu0
        %3773 = vdwg.mxu0
        %v3774 = vmax.f32 %v2752, 0.0
        %v3775 = vmax.f32 %v2755, 0.0
        %v3776 = vmax.f32 %v2760, 0.0
        %v3777 = vmax.f32 %v2763, 0.0
        %v3778 = vmax.f32 %v2768, 0.0
        %v3779 = vmax.f32 %v2771, 0.0
        %v3780 = vmax.f32 %v2776, 0.0
        %v3781 = vmax.f32 %v2779, 0.0
        %v3782 = vmax.f32 %v2784, 0.0
        %v3783 = vmax.f32 %v2787, 0.0
        %v3784 = vmax.f32 %v2792, 0.0
        %v3785 = vmax.f32 %v2795, 0.0
        %v3786 = vmax.f32 %v2800, 0.0
        %v3787 = vmax.f32 %v2803, 0.0
        %v3788 = vmax.f32 %v2808, 0.0
        %v3789 = vmax.f32 %v2811, 0.0
        %v3790 = vmax.f32 %v2816, 0.0
        %v3791 = vmax.f32 %v2819, 0.0
        %v3792 = vmax.f32 %v2824, 0.0
        %v3793 = vmax.f32 %v2827, 0.0
        %v3794 = vmax.f32 %v2832, 0.0
        %v3795 = vmax.f32 %v2835, 0.0
        %v3796 = vmax.f32 %v2840, 0.0
        %v3797 = vmax.f32 %v2843, 0.0
        %v3798 = vmax.f32 %v2848, 0.0
        %v3799 = vmax.f32 %v2851, 0.0
        %v3800 = vmax.f32 %v2856, 0.0
        %v3801 = vmax.f32 %v2859, 0.0
        %v3802 = vmax.f32 %v2864, 0.0
        %v3803 = vmax.f32 %v2867, 0.0
        %v3804 = vmax.f32 %v2872, 0.0
        %v3805 = vmax.f32 %v2875, 0.0
        %v3806 = vmax.f32 %v2880, 0.0
        %v3807 = vmax.f32 %v2883, 0.0
        %v3808 = vmax.f32 %v2888, 0.0
        %v3809 = vmax.f32 %v2891, 0.0
        %v3810 = vmax.f32 %v2896, 0.0
        %v3811 = vmax.f32 %v2899, 0.0
        %v3812 = vmax.f32 %v2904, 0.0
        %v3813 = vmax.f32 %v2907, 0.0
        %v3814 = vmax.f32 %v2912, 0.0
        %v3815 = vmax.f32 %v2915, 0.0
        %v3816 = vmax.f32 %v2920, 0.0
        %v3817 = vmax.f32 %v2923, 0.0
        %v3818 = vmax.f32 %v2928, 0.0
        %v3819 = vmax.f32 %v2931, 0.0
        %v3820 = vmax.f32 %v2936, 0.0
        %v3821 = vmax.f32 %v2939, 0.0
        %v3822 = vmax.f32 %v2944, 0.0
        %v3823 = vmax.f32 %v2947, 0.0
        %v3824 = vmax.f32 %v2952, 0.0
        %v3825 = vmax.f32 %v2955, 0.0
        %v3826 = vmax.f32 %v2960, 0.0
        %v3827 = vmax.f32 %v2963, 0.0
        %v3828 = vmax.f32 %v2968, 0.0
        %v3829 = vmax.f32 %v2971, 0.0
        %v3830 = vmax.f32 %v2976, 0.0
        %v3831 = vmax.f32 %v2979, 0.0
        %v3832 = vmax.f32 %v2984, 0.0
        %v3833 = vmax.f32 %v2987, 0.0
        %v3834 = vmax.f32 %v2992, 0.0
        %v3835 = vmax.f32 %v2995, 0.0
        %v3836 = vmax.f32 %v3000, 0.0
        %v3837 = vmax.f32 %v3003, 0.0
        %v3838 = vmax.f32 %v3008, 0.0
        %v3839 = vmax.f32 %v3011, 0.0
        %v3840 = vmax.f32 %v3016, 0.0
        %v3841 = vmax.f32 %v3019, 0.0
        %v3842 = vmax.f32 %v3024, 0.0
        %v3843 = vmax.f32 %v3027, 0.0
        %v3844 = vmax.f32 %v3032, 0.0
        %v3845 = vmax.f32 %v3035, 0.0
        %v3846 = vmax.f32 %v3040, 0.0
        %v3847 = vmax.f32 %v3043, 0.0
        %v3848 = vmax.f32 %v3048, 0.0
        %v3849 = vmax.f32 %v3051, 0.0
        %v3850 = vmax.f32 %v3056, 0.0
        %v3851 = vmax.f32 %v3059, 0.0
        %v3852 = vmax.f32 %v3064, 0.0
        %v3853 = vmax.f32 %v3067, 0.0
        %v3854 = vmax.f32 %v3072, 0.0
        %v3855 = vmax.f32 %v3075, 0.0
        %v3856 = vmax.f32 %v3080, 0.0
        %v3857 = vmax.f32 %v3083, 0.0
        %v3858 = vmax.f32 %v3088, 0.0
        %v3859 = vmax.f32 %v3091, 0.0
        %v3860 = vmax.f32 %v3096, 0.0
        %v3861 = vmax.f32 %v3099, 0.0
        %v3862 = vmax.f32 %v3104, 0.0
        %v3863 = vmax.f32 %v3107, 0.0
        %v3864 = vmax.f32 %v3112, 0.0
        %v3865 = vmax.f32 %v3115, 0.0
        %v3866 = vmax.f32 %v3120, 0.0
        %v3867 = vmax.f32 %v3123, 0.0
        %v3868 = vmax.f32 %v3128, 0.0
        %v3869 = vmax.f32 %v3131, 0.0
        %v3870 = vmax.f32 %v3136, 0.0
        %v3871 = vmax.f32 %v3139, 0.0
        %v3872 = vmax.f32 %v3144, 0.0
        %v3873 = vmax.f32 %v3147, 0.0
        %v3874 = vmax.f32 %v3152, 0.0
        %v3875 = vmax.f32 %v3155, 0.0
        %v3876 = vmax.f32 %v3160, 0.0
        %v3877 = vmax.f32 %v3163, 0.0
        %v3878 = vmax.f32 %v3168, 0.0
        %v3879 = vmax.f32 %v3171, 0.0
        %v3880 = vmax.f32 %v3176, 0.0
        %v3881 = vmax.f32 %v3179, 0.0
        %v3882 = vmax.f32 %v3184, 0.0
        %v3883 = vmax.f32 %v3187, 0.0
        %v3884 = vmax.f32 %v3192, 0.0
        %v3885 = vmax.f32 %v3195, 0.0
        %v3886 = vmax.f32 %v3200, 0.0
        %v3887 = vmax.f32 %v3203, 0.0
        %v3888 = vmax.f32 %v3208, 0.0
        %v3889 = vmax.f32 %v3211, 0.0
        %v3890 = vmax.f32 %v3216, 0.0
        %v3891 = vmax.f32 %v3219, 0.0
        %v3892 = vmax.f32 %v3224, 0.0
        %v3893 = vmax.f32 %v3227, 0.0
        %v3894 = vmax.f32 %v3232, 0.0
        %v3895 = vmax.f32 %v3235, 0.0
        %v3896 = vmax.f32 %v3240, 0.0
        %v3897 = vmax.f32 %v3243, 0.0
        %v3898 = vmax.f32 %v3248, 0.0
        %v3899 = vmax.f32 %v3251, 0.0
        %v3900 = vmax.f32 %v3256, 0.0
        %v3901 = vmax.f32 %v3259, 0.0
        %v3902 = vmax.f32 %v3264, 0.0
        %v3903 = vmax.f32 %v3267, 0.0
        %v3904 = vmax.f32 %v3272, 0.0
        %v3905 = vmax.f32 %v3275, 0.0
        %v3906 = vmax.f32 %v3280, 0.0
        %v3907 = vmax.f32 %v3283, 0.0
        %v3908 = vmax.f32 %v3288, 0.0
        %v3909 = vmax.f32 %v3291, 0.0
        %v3910 = vmax.f32 %v3296, 0.0
        %v3911 = vmax.f32 %v3299, 0.0
        %v3912 = vmax.f32 %v3304, 0.0
        %v3913 = vmax.f32 %v3307, 0.0
        %v3914 = vmax.f32 %v3312, 0.0
        %v3915 = vmax.f32 %v3315, 0.0
        %v3916 = vmax.f32 %v3320, 0.0
        %v3917 = vmax.f32 %v3323, 0.0
        %v3918 = vmax.f32 %v3328, 0.0
        %v3919 = vmax.f32 %v3331, 0.0
        %v3920 = vmax.f32 %v3336, 0.0
        %v3921 = vmax.f32 %v3339, 0.0
        %v3922 = vmax.f32 %v3344, 0.0
        %v3923 = vmax.f32 %v3347, 0.0
        %v3924 = vmax.f32 %v3352, 0.0
        %v3925 = vmax.f32 %v3355, 0.0
        %v3926 = vmax.f32 %v3360, 0.0
        %v3927 = vmax.f32 %v3363, 0.0
        %v3928 = vmax.f32 %v3368, 0.0
        %v3929 = vmax.f32 %v3371, 0.0
        %v3930 = vmax.f32 %v3376, 0.0
        %v3931 = vmax.f32 %v3379, 0.0
        %v3932 = vmax.f32 %v3384, 0.0
        %v3933 = vmax.f32 %v3387, 0.0
        %v3934 = vmax.f32 %v3392, 0.0
        %v3935 = vmax.f32 %v3395, 0.0
        %v3936 = vmax.f32 %v3400, 0.0
        %v3937 = vmax.f32 %v3403, 0.0
        %v3938 = vmax.f32 %v3408, 0.0
        %v3939 = vmax.f32 %v3411, 0.0
        %v3940 = vmax.f32 %v3416, 0.0
        %v3941 = vmax.f32 %v3419, 0.0
        %v3942 = vmax.f32 %v3424, 0.0
        %v3943 = vmax.f32 %v3427, 0.0
        %v3944 = vmax.f32 %v3432, 0.0
        %v3945 = vmax.f32 %v3435, 0.0
        %v3946 = vmax.f32 %v3440, 0.0
        %v3947 = vmax.f32 %v3443, 0.0
        %v3948 = vmax.f32 %v3448, 0.0
        %v3949 = vmax.f32 %v3451, 0.0
        %v3950 = vmax.f32 %v3456, 0.0
        %v3951 = vmax.f32 %v3459, 0.0
        %v3952 = vmax.f32 %v3464, 0.0
        %v3953 = vmax.f32 %v3467, 0.0
        %v3954 = vmax.f32 %v3472, 0.0
        %v3955 = vmax.f32 %v3475, 0.0
        %v3956 = vmax.f32 %v3480, 0.0
        %v3957 = vmax.f32 %v3483, 0.0
        %v3958 = vmax.f32 %v3488, 0.0
        %v3959 = vmax.f32 %v3491, 0.0
        %v3960 = vmax.f32 %v3496, 0.0
        %v3961 = vmax.f32 %v3499, 0.0
        %v3962 = vmax.f32 %v3504, 0.0
        %v3963 = vmax.f32 %v3507, 0.0
        %v3964 = vmax.f32 %v3512, 0.0
        %v3965 = vmax.f32 %v3515, 0.0
        %v3966 = vmax.f32 %v3520, 0.0
        %v3967 = vmax.f32 %v3523, 0.0
        %v3968 = vmax.f32 %v3528, 0.0
        %v3969 = vmax.f32 %v3531, 0.0
        %v3970 = vmax.f32 %v3536, 0.0
        %v3971 = vmax.f32 %v3539, 0.0
        %v3972 = vmax.f32 %v3544, 0.0
        %v3973 = vmax.f32 %v3547, 0.0
        %v3974 = vmax.f32 %v3552, 0.0
        %v3975 = vmax.f32 %v3555, 0.0
        %v3976 = vmax.f32 %v3560, 0.0
        %v3977 = vmax.f32 %v3563, 0.0
        %v3978 = vmax.f32 %v3568, 0.0
        %v3979 = vmax.f32 %v3571, 0.0
        %v3980 = vmax.f32 %v3576, 0.0
        %v3981 = vmax.f32 %v3579, 0.0
        %v3982 = vmax.f32 %v3584, 0.0
        %v3983 = vmax.f32 %v3587, 0.0
        %v3984 = vmax.f32 %v3592, 0.0
        %v3985 = vmax.f32 %v3595, 0.0
        %v3986 = vmax.f32 %v3600, 0.0
        %v3987 = vmax.f32 %v3603, 0.0
        %v3988 = vmax.f32 %v3608, 0.0
        %v3989 = vmax.f32 %v3611, 0.0
        %v3990 = vmax.f32 %v3616, 0.0
        %v3991 = vmax.f32 %v3619, 0.0
        %v3992 = vmax.f32 %v3624, 0.0
        %v3993 = vmax.f32 %v3627, 0.0
        %v3994 = vmax.f32 %v3632, 0.0
        %v3995 = vmax.f32 %v3635, 0.0
        %v3996 = vmax.f32 %v3640, 0.0
        %v3997 = vmax.f32 %v3643, 0.0
        %v3998 = vmax.f32 %v3648, 0.0
        %v3999 = vmax.f32 %v3651, 0.0
        %v4000 = vmax.f32 %v3656, 0.0
        %v4001 = vmax.f32 %v3659, 0.0
        %v4002 = vmax.f32 %v3664, 0.0
        %v4003 = vmax.f32 %v3667, 0.0
        %v4004 = vmax.f32 %v3672, 0.0
        %v4005 = vmax.f32 %v3675, 0.0
        %v4006 = vmax.f32 %v3680, 0.0
        %v4007 = vmax.f32 %v3683, 0.0
        %v4008 = vmax.f32 %v3688, 0.0
        %v4009 = vmax.f32 %v3691, 0.0
        %v4010 = vmax.f32 %v3696, 0.0
        %v4011 = vmax.f32 %v3699, 0.0
        %v4012 = vmax.f32 %v3704, 0.0
        %v4013 = vmax.f32 %v3707, 0.0
        %v4014 = vmax.f32 %v3712, 0.0
        %v4015 = vmax.f32 %v3715, 0.0
        %v4016 = vmax.f32 %v3720, 0.0
        %v4017 = vmax.f32 %v3723, 0.0
        %v4018 = vmax.f32 %v3728, 0.0
        %v4019 = vmax.f32 %v3731, 0.0
        %v4020 = vmax.f32 %v3736, 0.0
        %v4021 = vmax.f32 %v3739, 0.0
        %v4022 = vmax.f32 %v3744, 0.0
        %v4023 = vmax.f32 %v3747, 0.0
        %v4024 = vmax.f32 %v3752, 0.0
        %v4025 = vmax.f32 %v3755, 0.0
        %v4026 = vmax.f32 %v3760, 0.0
        %v4027 = vmax.f32 %v3763, 0.0
        %v4028 = vmax.f32 %v3768, 0.0
        %v4029 = vmax.f32 %v3771, 0.0
        %4030 = vxpose.xlu0.b32.start [1/16] %v3774, 128
        %4031 = vxpose.xlu0.b32.cont [2/16] %v3775, 128
        %4032 = vxpose.xlu0.b32.cont [3/16] %v3776, 128
        %4033 = vxpose.xlu0.b32.cont [4/16] %v3777, 128
        %4034 = vxpose.xlu0.b32.cont [5/16] %v3778, 128
        %4035 = vxpose.xlu0.b32.cont [6/16] %v3779, 128
        %4036 = vxpose.xlu0.b32.cont [7/16] %v3780, 128
        %4037 = vxpose.xlu0.b32.cont [8/16] %v3781, 128
        %4038 = vxpose.xlu0.b32.cont [9/16] %v3782, 128
        %4039 = vxpose.xlu0.b32.cont [10/16] %v3783, 128
        %4040 = vxpose.xlu0.b32.cont [11/16] %v3784, 128
        %4041 = vxpose.xlu0.b32.cont [12/16] %v3785, 128
        %4042 = vxpose.xlu0.b32.cont [13/16] %v3786, 128
        %4043 = vxpose.xlu0.b32.cont [14/16] %v3787, 128
        %4044 = vxpose.xlu0.b32.cont [15/16] %v3788, 128
        %4045 = vxpose.xlu0.b32.end [16/16] %v3789, 128
        %v4046 = vpop.trf.xlu0
        %v4047 = vpop.trf.xlu0
        %v4048 = vpop.trf.xlu0
        %v4049 = vpop.trf.xlu0
        %v4050 = vpop.trf.xlu0
        %v4051 = vpop.trf.xlu0
        %v4052 = vpop.trf.xlu0
        %v4053 = vpop.trf.xlu0
        %v4054 = vpop.trf.xlu0
        %v4055 = vpop.trf.xlu0
        %v4056 = vpop.trf.xlu0
        %v4057 = vpop.trf.xlu0
        %v4058 = vpop.trf.xlu0
        %v4059 = vpop.trf.xlu0
        %v4060 = vpop.trf.xlu0
        %v4061 = vpop.trf.xlu0
        %4062 = vxpose.xlu0.b32.start [1/16] %v3790, 128
        %4063 = vxpose.xlu0.b32.cont [2/16] %v3791, 128
        %4064 = vxpose.xlu0.b32.cont [3/16] %v3792, 128
        %4065 = vxpose.xlu0.b32.cont [4/16] %v3793, 128
        %4066 = vxpose.xlu0.b32.cont [5/16] %v3794, 128
        %4067 = vxpose.xlu0.b32.cont [6/16] %v3795, 128
        %4068 = vxpose.xlu0.b32.cont [7/16] %v3796, 128
        %4069 = vxpose.xlu0.b32.cont [8/16] %v3797, 128
        %4070 = vxpose.xlu0.b32.cont [9/16] %v3798, 128
        %4071 = vxpose.xlu0.b32.cont [10/16] %v3799, 128
        %4072 = vxpose.xlu0.b32.cont [11/16] %v3800, 128
        %4073 = vxpose.xlu0.b32.cont [12/16] %v3801, 128
        %4074 = vxpose.xlu0.b32.cont [13/16] %v3802, 128
        %4075 = vxpose.xlu0.b32.cont [14/16] %v3803, 128
        %4076 = vxpose.xlu0.b32.cont [15/16] %v3804, 128
        %4077 = vxpose.xlu0.b32.end [16/16] %v3805, 128
        %v4078 = vpop.trf.xlu0
        %v4079 = vpop.trf.xlu0
        %v4080 = vpop.trf.xlu0
        %v4081 = vpop.trf.xlu0
        %v4082 = vpop.trf.xlu0
        %v4083 = vpop.trf.xlu0
        %v4084 = vpop.trf.xlu0
        %v4085 = vpop.trf.xlu0
        %v4086 = vpop.trf.xlu0
        %v4087 = vpop.trf.xlu0
        %v4088 = vpop.trf.xlu0
        %v4089 = vpop.trf.xlu0
        %v4090 = vpop.trf.xlu0
        %v4091 = vpop.trf.xlu0
        %v4092 = vpop.trf.xlu0
        %v4093 = vpop.trf.xlu0
        %4094 = vxpose.xlu0.b32.start [1/16] %v3806, 128
        %4095 = vxpose.xlu0.b32.cont [2/16] %v3807, 128
        %4096 = vxpose.xlu0.b32.cont [3/16] %v3808, 128
        %4097 = vxpose.xlu0.b32.cont [4/16] %v3809, 128
        %4098 = vxpose.xlu0.b32.cont [5/16] %v3810, 128
        %4099 = vxpose.xlu0.b32.cont [6/16] %v3811, 128
        %4100 = vxpose.xlu0.b32.cont [7/16] %v3812, 128
        %4101 = vxpose.xlu0.b32.cont [8/16] %v3813, 128
        %4102 = vxpose.xlu0.b32.cont [9/16] %v3814, 128
        %4103 = vxpose.xlu0.b32.cont [10/16] %v3815, 128
        %4104 = vxpose.xlu0.b32.cont [11/16] %v3816, 128
        %4105 = vxpose.xlu0.b32.cont [12/16] %v3817, 128
        %4106 = vxpose.xlu0.b32.cont [13/16] %v3818, 128
        %4107 = vxpose.xlu0.b32.cont [14/16] %v3819, 128
        %4108 = vxpose.xlu0.b32.cont [15/16] %v3820, 128
        %4109 = vxpose.xlu0.b32.end [16/16] %v3821, 128
        %v4110 = vpop.trf.xlu0
        %v4111 = vpop.trf.xlu0
        %v4112 = vpop.trf.xlu0
        %v4113 = vpop.trf.xlu0
        %v4114 = vpop.trf.xlu0
        %v4115 = vpop.trf.xlu0
        %v4116 = vpop.trf.xlu0
        %v4117 = vpop.trf.xlu0
        %v4118 = vpop.trf.xlu0
        %v4119 = vpop.trf.xlu0
        %v4120 = vpop.trf.xlu0
        %v4121 = vpop.trf.xlu0
        %v4122 = vpop.trf.xlu0
        %v4123 = vpop.trf.xlu0
        %v4124 = vpop.trf.xlu0
        %v4125 = vpop.trf.xlu0
        %4126 = vxpose.xlu0.b32.start [1/16] %v3822, 128
        %4127 = vxpose.xlu0.b32.cont [2/16] %v3823, 128
        %4128 = vxpose.xlu0.b32.cont [3/16] %v3824, 128
        %4129 = vxpose.xlu0.b32.cont [4/16] %v3825, 128
        %4130 = vxpose.xlu0.b32.cont [5/16] %v3826, 128
        %4131 = vxpose.xlu0.b32.cont [6/16] %v3827, 128
        %4132 = vxpose.xlu0.b32.cont [7/16] %v3828, 128
        %4133 = vxpose.xlu0.b32.cont [8/16] %v3829, 128
        %4134 = vxpose.xlu0.b32.cont [9/16] %v3830, 128
        %4135 = vxpose.xlu0.b32.cont [10/16] %v3831, 128
        %4136 = vxpose.xlu0.b32.cont [11/16] %v3832, 128
        %4137 = vxpose.xlu0.b32.cont [12/16] %v3833, 128
        %4138 = vxpose.xlu0.b32.cont [13/16] %v3834, 128
        %4139 = vxpose.xlu0.b32.cont [14/16] %v3835, 128
        %4140 = vxpose.xlu0.b32.cont [15/16] %v3836, 128
        %4141 = vxpose.xlu0.b32.end [16/16] %v3837, 128
        %v4142 = vpop.trf.xlu0
        %v4143 = vpop.trf.xlu0
        %v4144 = vpop.trf.xlu0
        %v4145 = vpop.trf.xlu0
        %v4146 = vpop.trf.xlu0
        %v4147 = vpop.trf.xlu0
        %v4148 = vpop.trf.xlu0
        %v4149 = vpop.trf.xlu0
        %v4150 = vpop.trf.xlu0
        %v4151 = vpop.trf.xlu0
        %v4152 = vpop.trf.xlu0
        %v4153 = vpop.trf.xlu0
        %v4154 = vpop.trf.xlu0
        %v4155 = vpop.trf.xlu0
        %v4156 = vpop.trf.xlu0
        %v4157 = vpop.trf.xlu0
        %4158 = vxpose.xlu0.b32.start [1/16] %v3838, 128
        %4159 = vxpose.xlu0.b32.cont [2/16] %v3839, 128
        %4160 = vxpose.xlu0.b32.cont [3/16] %v3840, 128
        %4161 = vxpose.xlu0.b32.cont [4/16] %v3841, 128
        %4162 = vxpose.xlu0.b32.cont [5/16] %v3842, 128
        %4163 = vxpose.xlu0.b32.cont [6/16] %v3843, 128
        %4164 = vxpose.xlu0.b32.cont [7/16] %v3844, 128
        %4165 = vxpose.xlu0.b32.cont [8/16] %v3845, 128
        %4166 = vxpose.xlu0.b32.cont [9/16] %v3846, 128
        %4167 = vxpose.xlu0.b32.cont [10/16] %v3847, 128
        %4168 = vxpose.xlu0.b32.cont [11/16] %v3848, 128
        %4169 = vxpose.xlu0.b32.cont [12/16] %v3849, 128
        %4170 = vxpose.xlu0.b32.cont [13/16] %v3850, 128
        %4171 = vxpose.xlu0.b32.cont [14/16] %v3851, 128
        %4172 = vxpose.xlu0.b32.cont [15/16] %v3852, 128
        %4173 = vxpose.xlu0.b32.end [16/16] %v3853, 128
        %v4174 = vpop.trf.xlu0
        %v4175 = vpop.trf.xlu0
        %v4176 = vpop.trf.xlu0
        %v4177 = vpop.trf.xlu0
        %v4178 = vpop.trf.xlu0
        %v4179 = vpop.trf.xlu0
        %v4180 = vpop.trf.xlu0
        %v4181 = vpop.trf.xlu0
        %v4182 = vpop.trf.xlu0
        %v4183 = vpop.trf.xlu0
        %v4184 = vpop.trf.xlu0
        %v4185 = vpop.trf.xlu0
        %v4186 = vpop.trf.xlu0
        %v4187 = vpop.trf.xlu0
        %v4188 = vpop.trf.xlu0
        %v4189 = vpop.trf.xlu0
        %4190 = vxpose.xlu0.b32.start [1/16] %v3854, 128
        %4191 = vxpose.xlu0.b32.cont [2/16] %v3855, 128
        %4192 = vxpose.xlu0.b32.cont [3/16] %v3856, 128
        %4193 = vxpose.xlu0.b32.cont [4/16] %v3857, 128
        %4194 = vxpose.xlu0.b32.cont [5/16] %v3858, 128
        %4195 = vxpose.xlu0.b32.cont [6/16] %v3859, 128
        %4196 = vxpose.xlu0.b32.cont [7/16] %v3860, 128
        %4197 = vxpose.xlu0.b32.cont [8/16] %v3861, 128
        %4198 = vxpose.xlu0.b32.cont [9/16] %v3862, 128
        %4199 = vxpose.xlu0.b32.cont [10/16] %v3863, 128
        %4200 = vxpose.xlu0.b32.cont [11/16] %v3864, 128
        %4201 = vxpose.xlu0.b32.cont [12/16] %v3865, 128
        %4202 = vxpose.xlu0.b32.cont [13/16] %v3866, 128
        %4203 = vxpose.xlu0.b32.cont [14/16] %v3867, 128
        %4204 = vxpose.xlu0.b32.cont [15/16] %v3868, 128
        %4205 = vxpose.xlu0.b32.end [16/16] %v3869, 128
        %v4206 = vpop.trf.xlu0
        %v4207 = vpop.trf.xlu0
        %v4208 = vpop.trf.xlu0
        %v4209 = vpop.trf.xlu0
        %v4210 = vpop.trf.xlu0
        %v4211 = vpop.trf.xlu0
        %v4212 = vpop.trf.xlu0
        %v4213 = vpop.trf.xlu0
        %v4214 = vpop.trf.xlu0
        %v4215 = vpop.trf.xlu0
        %v4216 = vpop.trf.xlu0
        %v4217 = vpop.trf.xlu0
        %v4218 = vpop.trf.xlu0
        %v4219 = vpop.trf.xlu0
        %v4220 = vpop.trf.xlu0
        %v4221 = vpop.trf.xlu0
        %4222 = vxpose.xlu0.b32.start [1/16] %v3870, 128
        %4223 = vxpose.xlu0.b32.cont [2/16] %v3871, 128
        %4224 = vxpose.xlu0.b32.cont [3/16] %v3872, 128
        %4225 = vxpose.xlu0.b32.cont [4/16] %v3873, 128
        %4226 = vxpose.xlu0.b32.cont [5/16] %v3874, 128
        %4227 = vxpose.xlu0.b32.cont [6/16] %v3875, 128
        %4228 = vxpose.xlu0.b32.cont [7/16] %v3876, 128
        %4229 = vxpose.xlu0.b32.cont [8/16] %v3877, 128
        %4230 = vxpose.xlu0.b32.cont [9/16] %v3878, 128
        %4231 = vxpose.xlu0.b32.cont [10/16] %v3879, 128
        %4232 = vxpose.xlu0.b32.cont [11/16] %v3880, 128
        %4233 = vxpose.xlu0.b32.cont [12/16] %v3881, 128
        %4234 = vxpose.xlu0.b32.cont [13/16] %v3882, 128
        %4235 = vxpose.xlu0.b32.cont [14/16] %v3883, 128
        %4236 = vxpose.xlu0.b32.cont [15/16] %v3884, 128
        %4237 = vxpose.xlu0.b32.end [16/16] %v3885, 128
        %v4238 = vpop.trf.xlu0
        %v4239 = vpop.trf.xlu0
        %v4240 = vpop.trf.xlu0
        %v4241 = vpop.trf.xlu0
        %v4242 = vpop.trf.xlu0
        %v4243 = vpop.trf.xlu0
        %v4244 = vpop.trf.xlu0
        %v4245 = vpop.trf.xlu0
        %v4246 = vpop.trf.xlu0
        %v4247 = vpop.trf.xlu0
        %v4248 = vpop.trf.xlu0
        %v4249 = vpop.trf.xlu0
        %v4250 = vpop.trf.xlu0
        %v4251 = vpop.trf.xlu0
        %v4252 = vpop.trf.xlu0
        %v4253 = vpop.trf.xlu0
        %4254 = vxpose.xlu0.b32.start [1/16] %v3886, 128
        %4255 = vxpose.xlu0.b32.cont [2/16] %v3887, 128
        %4256 = vxpose.xlu0.b32.cont [3/16] %v3888, 128
        %4257 = vxpose.xlu0.b32.cont [4/16] %v3889, 128
        %4258 = vxpose.xlu0.b32.cont [5/16] %v3890, 128
        %4259 = vxpose.xlu0.b32.cont [6/16] %v3891, 128
        %4260 = vxpose.xlu0.b32.cont [7/16] %v3892, 128
        %4261 = vxpose.xlu0.b32.cont [8/16] %v3893, 128
        %4262 = vxpose.xlu0.b32.cont [9/16] %v3894, 128
        %4263 = vxpose.xlu0.b32.cont [10/16] %v3895, 128
        %4264 = vxpose.xlu0.b32.cont [11/16] %v3896, 128
        %4265 = vxpose.xlu0.b32.cont [12/16] %v3897, 128
        %4266 = vxpose.xlu0.b32.cont [13/16] %v3898, 128
        %4267 = vxpose.xlu0.b32.cont [14/16] %v3899, 128
        %4268 = vxpose.xlu0.b32.cont [15/16] %v3900, 128
        %4269 = vxpose.xlu0.b32.end [16/16] %v3901, 128
        %v4270 = vpop.trf.xlu0
        %v4271 = vpop.trf.xlu0
        %v4272 = vpop.trf.xlu0
        %v4273 = vpop.trf.xlu0
        %v4274 = vpop.trf.xlu0
        %v4275 = vpop.trf.xlu0
        %v4276 = vpop.trf.xlu0
        %v4277 = vpop.trf.xlu0
        %v4278 = vpop.trf.xlu0
        %v4279 = vpop.trf.xlu0
        %v4280 = vpop.trf.xlu0
        %v4281 = vpop.trf.xlu0
        %v4282 = vpop.trf.xlu0
        %v4283 = vpop.trf.xlu0
        %v4284 = vpop.trf.xlu0
        %v4285 = vpop.trf.xlu0
        %4286 = vxpose.xlu0.b32.start [1/16] %v3902, 128
        %4287 = vxpose.xlu0.b32.cont [2/16] %v3903, 128
        %4288 = vxpose.xlu0.b32.cont [3/16] %v3904, 128
        %4289 = vxpose.xlu0.b32.cont [4/16] %v3905, 128
        %4290 = vxpose.xlu0.b32.cont [5/16] %v3906, 128
        %4291 = vxpose.xlu0.b32.cont [6/16] %v3907, 128
        %4292 = vxpose.xlu0.b32.cont [7/16] %v3908, 128
        %4293 = vxpose.xlu0.b32.cont [8/16] %v3909, 128
        %4294 = vxpose.xlu0.b32.cont [9/16] %v3910, 128
        %4295 = vxpose.xlu0.b32.cont [10/16] %v3911, 128
        %4296 = vxpose.xlu0.b32.cont [11/16] %v3912, 128
        %4297 = vxpose.xlu0.b32.cont [12/16] %v3913, 128
        %4298 = vxpose.xlu0.b32.cont [13/16] %v3914, 128
        %4299 = vxpose.xlu0.b32.cont [14/16] %v3915, 128
        %4300 = vxpose.xlu0.b32.cont [15/16] %v3916, 128
        %4301 = vxpose.xlu0.b32.end [16/16] %v3917, 128
        %v4302 = vpop.trf.xlu0
        %v4303 = vpop.trf.xlu0
        %v4304 = vpop.trf.xlu0
        %v4305 = vpop.trf.xlu0
        %v4306 = vpop.trf.xlu0
        %v4307 = vpop.trf.xlu0
        %v4308 = vpop.trf.xlu0
        %v4309 = vpop.trf.xlu0
        %v4310 = vpop.trf.xlu0
        %v4311 = vpop.trf.xlu0
        %v4312 = vpop.trf.xlu0
        %v4313 = vpop.trf.xlu0
        %v4314 = vpop.trf.xlu0
        %v4315 = vpop.trf.xlu0
        %v4316 = vpop.trf.xlu0
        %v4317 = vpop.trf.xlu0
        %4318 = vxpose.xlu0.b32.start [1/16] %v3918, 128
        %4319 = vxpose.xlu0.b32.cont [2/16] %v3919, 128
        %4320 = vxpose.xlu0.b32.cont [3/16] %v3920, 128
        %4321 = vxpose.xlu0.b32.cont [4/16] %v3921, 128
        %4322 = vxpose.xlu0.b32.cont [5/16] %v3922, 128
        %4323 = vxpose.xlu0.b32.cont [6/16] %v3923, 128
        %4324 = vxpose.xlu0.b32.cont [7/16] %v3924, 128
        %4325 = vxpose.xlu0.b32.cont [8/16] %v3925, 128
        %4326 = vxpose.xlu0.b32.cont [9/16] %v3926, 128
        %4327 = vxpose.xlu0.b32.cont [10/16] %v3927, 128
        %4328 = vxpose.xlu0.b32.cont [11/16] %v3928, 128
        %4329 = vxpose.xlu0.b32.cont [12/16] %v3929, 128
        %4330 = vxpose.xlu0.b32.cont [13/16] %v3930, 128
        %4331 = vxpose.xlu0.b32.cont [14/16] %v3931, 128
        %4332 = vxpose.xlu0.b32.cont [15/16] %v3932, 128
        %4333 = vxpose.xlu0.b32.end [16/16] %v3933, 128
        %v4334 = vpop.trf.xlu0
        %v4335 = vpop.trf.xlu0
        %v4336 = vpop.trf.xlu0
        %v4337 = vpop.trf.xlu0
        %v4338 = vpop.trf.xlu0
        %v4339 = vpop.trf.xlu0
        %v4340 = vpop.trf.xlu0
        %v4341 = vpop.trf.xlu0
        %v4342 = vpop.trf.xlu0
        %v4343 = vpop.trf.xlu0
        %v4344 = vpop.trf.xlu0
        %v4345 = vpop.trf.xlu0
        %v4346 = vpop.trf.xlu0
        %v4347 = vpop.trf.xlu0
        %v4348 = vpop.trf.xlu0
        %v4349 = vpop.trf.xlu0
        %4350 = vxpose.xlu0.b32.start [1/16] %v3934, 128
        %4351 = vxpose.xlu0.b32.cont [2/16] %v3935, 128
        %4352 = vxpose.xlu0.b32.cont [3/16] %v3936, 128
        %4353 = vxpose.xlu0.b32.cont [4/16] %v3937, 128
        %4354 = vxpose.xlu0.b32.cont [5/16] %v3938, 128
        %4355 = vxpose.xlu0.b32.cont [6/16] %v3939, 128
        %4356 = vxpose.xlu0.b32.cont [7/16] %v3940, 128
        %4357 = vxpose.xlu0.b32.cont [8/16] %v3941, 128
        %4358 = vxpose.xlu0.b32.cont [9/16] %v3942, 128
        %4359 = vxpose.xlu0.b32.cont [10/16] %v3943, 128
        %4360 = vxpose.xlu0.b32.cont [11/16] %v3944, 128
        %4361 = vxpose.xlu0.b32.cont [12/16] %v3945, 128
        %4362 = vxpose.xlu0.b32.cont [13/16] %v3946, 128
        %4363 = vxpose.xlu0.b32.cont [14/16] %v3947, 128
        %4364 = vxpose.xlu0.b32.cont [15/16] %v3948, 128
        %4365 = vxpose.xlu0.b32.end [16/16] %v3949, 128
        %v4366 = vpop.trf.xlu0
        %v4367 = vpop.trf.xlu0
        %v4368 = vpop.trf.xlu0
        %v4369 = vpop.trf.xlu0
        %v4370 = vpop.trf.xlu0
        %v4371 = vpop.trf.xlu0
        %v4372 = vpop.trf.xlu0
        %v4373 = vpop.trf.xlu0
        %v4374 = vpop.trf.xlu0
        %v4375 = vpop.trf.xlu0
        %v4376 = vpop.trf.xlu0
        %v4377 = vpop.trf.xlu0
        %v4378 = vpop.trf.xlu0
        %v4379 = vpop.trf.xlu0
        %v4380 = vpop.trf.xlu0
        %v4381 = vpop.trf.xlu0
        %4382 = vxpose.xlu0.b32.start [1/16] %v3950, 128
        %4383 = vxpose.xlu0.b32.cont [2/16] %v3951, 128
        %4384 = vxpose.xlu0.b32.cont [3/16] %v3952, 128
        %4385 = vxpose.xlu0.b32.cont [4/16] %v3953, 128
        %4386 = vxpose.xlu0.b32.cont [5/16] %v3954, 128
        %4387 = vxpose.xlu0.b32.cont [6/16] %v3955, 128
        %4388 = vxpose.xlu0.b32.cont [7/16] %v3956, 128
        %4389 = vxpose.xlu0.b32.cont [8/16] %v3957, 128
        %4390 = vxpose.xlu0.b32.cont [9/16] %v3958, 128
        %4391 = vxpose.xlu0.b32.cont [10/16] %v3959, 128
        %4392 = vxpose.xlu0.b32.cont [11/16] %v3960, 128
        %4393 = vxpose.xlu0.b32.cont [12/16] %v3961, 128
        %4394 = vxpose.xlu0.b32.cont [13/16] %v3962, 128
        %4395 = vxpose.xlu0.b32.cont [14/16] %v3963, 128
        %4396 = vxpose.xlu0.b32.cont [15/16] %v3964, 128
        %4397 = vxpose.xlu0.b32.end [16/16] %v3965, 128
        %v4398 = vpop.trf.xlu0
        %v4399 = vpop.trf.xlu0
        %v4400 = vpop.trf.xlu0
        %v4401 = vpop.trf.xlu0
        %v4402 = vpop.trf.xlu0
        %v4403 = vpop.trf.xlu0
        %v4404 = vpop.trf.xlu0
        %v4405 = vpop.trf.xlu0
        %v4406 = vpop.trf.xlu0
        %v4407 = vpop.trf.xlu0
        %v4408 = vpop.trf.xlu0
        %v4409 = vpop.trf.xlu0
        %v4410 = vpop.trf.xlu0
        %v4411 = vpop.trf.xlu0
        %v4412 = vpop.trf.xlu0
        %v4413 = vpop.trf.xlu0
        %4414 = vxpose.xlu0.b32.start [1/16] %v3966, 128
        %4415 = vxpose.xlu0.b32.cont [2/16] %v3967, 128
        %4416 = vxpose.xlu0.b32.cont [3/16] %v3968, 128
        %4417 = vxpose.xlu0.b32.cont [4/16] %v3969, 128
        %4418 = vxpose.xlu0.b32.cont [5/16] %v3970, 128
        %4419 = vxpose.xlu0.b32.cont [6/16] %v3971, 128
        %4420 = vxpose.xlu0.b32.cont [7/16] %v3972, 128
        %4421 = vxpose.xlu0.b32.cont [8/16] %v3973, 128
        %4422 = vxpose.xlu0.b32.cont [9/16] %v3974, 128
        %4423 = vxpose.xlu0.b32.cont [10/16] %v3975, 128
        %4424 = vxpose.xlu0.b32.cont [11/16] %v3976, 128
        %4425 = vxpose.xlu0.b32.cont [12/16] %v3977, 128
        %4426 = vxpose.xlu0.b32.cont [13/16] %v3978, 128
        %4427 = vxpose.xlu0.b32.cont [14/16] %v3979, 128
        %4428 = vxpose.xlu0.b32.cont [15/16] %v3980, 128
        %4429 = vxpose.xlu0.b32.end [16/16] %v3981, 128
        %v4430 = vpop.trf.xlu0
        %v4431 = vpop.trf.xlu0
        %v4432 = vpop.trf.xlu0
        %v4433 = vpop.trf.xlu0
        %v4434 = vpop.trf.xlu0
        %v4435 = vpop.trf.xlu0
        %v4436 = vpop.trf.xlu0
        %v4437 = vpop.trf.xlu0
        %v4438 = vpop.trf.xlu0
        %v4439 = vpop.trf.xlu0
        %v4440 = vpop.trf.xlu0
        %v4441 = vpop.trf.xlu0
        %v4442 = vpop.trf.xlu0
        %v4443 = vpop.trf.xlu0
        %v4444 = vpop.trf.xlu0
        %v4445 = vpop.trf.xlu0
        %4446 = vxpose.xlu0.b32.start [1/16] %v3982, 128
        %4447 = vxpose.xlu0.b32.cont [2/16] %v3983, 128
        %4448 = vxpose.xlu0.b32.cont [3/16] %v3984, 128
        %4449 = vxpose.xlu0.b32.cont [4/16] %v3985, 128
        %4450 = vxpose.xlu0.b32.cont [5/16] %v3986, 128
        %4451 = vxpose.xlu0.b32.cont [6/16] %v3987, 128
        %4452 = vxpose.xlu0.b32.cont [7/16] %v3988, 128
        %4453 = vxpose.xlu0.b32.cont [8/16] %v3989, 128
        %4454 = vxpose.xlu0.b32.cont [9/16] %v3990, 128
        %4455 = vxpose.xlu0.b32.cont [10/16] %v3991, 128
        %4456 = vxpose.xlu0.b32.cont [11/16] %v3992, 128
        %4457 = vxpose.xlu0.b32.cont [12/16] %v3993, 128
        %4458 = vxpose.xlu0.b32.cont [13/16] %v3994, 128
        %4459 = vxpose.xlu0.b32.cont [14/16] %v3995, 128
        %4460 = vxpose.xlu0.b32.cont [15/16] %v3996, 128
        %4461 = vxpose.xlu0.b32.end [16/16] %v3997, 128
        %v4462 = vpop.trf.xlu0
        %v4463 = vpop.trf.xlu0
        %v4464 = vpop.trf.xlu0
        %v4465 = vpop.trf.xlu0
        %v4466 = vpop.trf.xlu0
        %v4467 = vpop.trf.xlu0
        %v4468 = vpop.trf.xlu0
        %v4469 = vpop.trf.xlu0
        %v4470 = vpop.trf.xlu0
        %v4471 = vpop.trf.xlu0
        %v4472 = vpop.trf.xlu0
        %v4473 = vpop.trf.xlu0
        %v4474 = vpop.trf.xlu0
        %v4475 = vpop.trf.xlu0
        %v4476 = vpop.trf.xlu0
        %v4477 = vpop.trf.xlu0
        %4478 = vxpose.xlu0.b32.start [1/16] %v3998, 128
        %4479 = vxpose.xlu0.b32.cont [2/16] %v3999, 128
        %4480 = vxpose.xlu0.b32.cont [3/16] %v4000, 128
        %4481 = vxpose.xlu0.b32.cont [4/16] %v4001, 128
        %4482 = vxpose.xlu0.b32.cont [5/16] %v4002, 128
        %4483 = vxpose.xlu0.b32.cont [6/16] %v4003, 128
        %4484 = vxpose.xlu0.b32.cont [7/16] %v4004, 128
        %4485 = vxpose.xlu0.b32.cont [8/16] %v4005, 128
        %4486 = vxpose.xlu0.b32.cont [9/16] %v4006, 128
        %4487 = vxpose.xlu0.b32.cont [10/16] %v4007, 128
        %4488 = vxpose.xlu0.b32.cont [11/16] %v4008, 128
        %4489 = vxpose.xlu0.b32.cont [12/16] %v4009, 128
        %4490 = vxpose.xlu0.b32.cont [13/16] %v4010, 128
        %4491 = vxpose.xlu0.b32.cont [14/16] %v4011, 128
        %4492 = vxpose.xlu0.b32.cont [15/16] %v4012, 128
        %4493 = vxpose.xlu0.b32.end [16/16] %v4013, 128
        %v4494 = vpop.trf.xlu0
        %v4495 = vpop.trf.xlu0
        %v4496 = vpop.trf.xlu0
        %v4497 = vpop.trf.xlu0
        %v4498 = vpop.trf.xlu0
        %v4499 = vpop.trf.xlu0
        %v4500 = vpop.trf.xlu0
        %v4501 = vpop.trf.xlu0
        %v4502 = vpop.trf.xlu0
        %v4503 = vpop.trf.xlu0
        %v4504 = vpop.trf.xlu0
        %v4505 = vpop.trf.xlu0
        %v4506 = vpop.trf.xlu0
        %v4507 = vpop.trf.xlu0
        %v4508 = vpop.trf.xlu0
        %v4509 = vpop.trf.xlu0
        %4510 = vxpose.xlu0.b32.start [1/16] %v4014, 128
        %4511 = vxpose.xlu0.b32.cont [2/16] %v4015, 128
        %4512 = vxpose.xlu0.b32.cont [3/16] %v4016, 128
        %4513 = vxpose.xlu0.b32.cont [4/16] %v4017, 128
        %4514 = vxpose.xlu0.b32.cont [5/16] %v4018, 128
        %4515 = vxpose.xlu0.b32.cont [6/16] %v4019, 128
        %4516 = vxpose.xlu0.b32.cont [7/16] %v4020, 128
        %4517 = vxpose.xlu0.b32.cont [8/16] %v4021, 128
        %4518 = vxpose.xlu0.b32.cont [9/16] %v4022, 128
        %4519 = vxpose.xlu0.b32.cont [10/16] %v4023, 128
        %4520 = vxpose.xlu0.b32.cont [11/16] %v4024, 128
        %4521 = vxpose.xlu0.b32.cont [12/16] %v4025, 128
        %4522 = vxpose.xlu0.b32.cont [13/16] %v4026, 128
        %4523 = vxpose.xlu0.b32.cont [14/16] %v4027, 128
        %4524 = vxpose.xlu0.b32.cont [15/16] %v4028, 128
        %4525 = vxpose.xlu0.b32.end [16/16] %v4029, 128
        %v4526 = vpop.trf.xlu0
        %v4527 = vpop.trf.xlu0
        %v4528 = vpop.trf.xlu0
        %v4529 = vpop.trf.xlu0
        %v4530 = vpop.trf.xlu0
        %v4531 = vpop.trf.xlu0
        %v4532 = vpop.trf.xlu0
        %v4533 = vpop.trf.xlu0
        %v4534 = vpop.trf.xlu0
        %v4535 = vpop.trf.xlu0
        %v4536 = vpop.trf.xlu0
        %v4537 = vpop.trf.xlu0
        %v4538 = vpop.trf.xlu0
        %v4539 = vpop.trf.xlu0
        %v4540 = vpop.trf.xlu0
        %v4541 = vpop.trf.xlu0
        %v4542 = vpack.c.bf16 %v4047, %v4046
        %v4543 = vpack.c.bf16 %v4079, %v4078
        %v4544 = vpack.c.bf16 %v4111, %v4110
        %v4545 = vpack.c.bf16 %v4143, %v4142
        %v4546 = vpack.c.bf16 %v4175, %v4174
        %v4547 = vpack.c.bf16 %v4207, %v4206
        %v4548 = vpack.c.bf16 %v4239, %v4238
        %v4549 = vpack.c.bf16 %v4271, %v4270
        %v4550 = vpack.c.bf16 %v4303, %v4302
        %v4551 = vpack.c.bf16 %v4335, %v4334
        %v4552 = vpack.c.bf16 %v4367, %v4366
        %v4553 = vpack.c.bf16 %v4399, %v4398
        %v4554 = vpack.c.bf16 %v4431, %v4430
        %v4555 = vpack.c.bf16 %v4463, %v4462
        %v4556 = vpack.c.bf16 %v4495, %v4494
        %v4557 = vpack.c.bf16 %v4527, %v4526
        %v4558 = vpack.c.bf16 %v4049, %v4048
        %v4559 = vpack.c.bf16 %v4081, %v4080
        %v4560 = vpack.c.bf16 %v4113, %v4112
        %v4561 = vpack.c.bf16 %v4145, %v4144
        %v4562 = vpack.c.bf16 %v4177, %v4176
        %v4563 = vpack.c.bf16 %v4209, %v4208
        %v4564 = vpack.c.bf16 %v4241, %v4240
        %v4565 = vpack.c.bf16 %v4273, %v4272
        %v4566 = vpack.c.bf16 %v4305, %v4304
        %v4567 = vpack.c.bf16 %v4337, %v4336
        %v4568 = vpack.c.bf16 %v4369, %v4368
        %v4569 = vpack.c.bf16 %v4401, %v4400
        %v4570 = vpack.c.bf16 %v4433, %v4432
        %v4571 = vpack.c.bf16 %v4465, %v4464
        %v4572 = vpack.c.bf16 %v4497, %v4496
        %v4573 = vpack.c.bf16 %v4529, %v4528
        %v4574 = vld [vmem:[%s5] sm:$0xf]
        %v4575 = vld [vmem:[%s5 + $0x4] sm:$0xf]
        %v4576 = vld [vmem:[%s6] sm:$0xff]
        %v4577 = vld [vmem:[%s6 + $0x8] sm:$0xff]
        %4579 = vset.pattern.permute.xlu0 0
        %4580 = vperm.xlu0 %4579, %v4576
        %v4581 = vpop.permute.xlu0 %4580
        %4584 = vset.pattern.permute.xlu0 0
        %4585 = vperm.xlu0 %4584, %v4577
        %v4586 = vpop.permute.xlu0 %4585
        %v4590 = vunpack.c.l.b16 %v4574
        %v4591 = vunpack.c.l.b16 %v4575
        %v4592 = vpack.c.b16 %v4591, %v4590
        %vm4593 = vcmask 261120
        %v4595 = vsel %vm4593, %v4592, 0
        %4597 = vmatprep.subr.bf16.mxu0 %v4543
        %4598 = vmatpush1.bf16.msra.mxu0 %v4542
        %4599 = vmatprep.subr.bf16.mxu0 %v4559
        %4600 = vmatpush1.bf16.msra.mxu0 %v4558
        %4601 = vmatprep.subr.bf16.mxu0 0
        %4602 = vmatpush1.bf16.msra.mxu0 0
        %4603 = vmatprep.subr.bf16.mxu0 0
        %4604 = vmatpush1.bf16.msra.mxu0 0
        %4605 = vmatprep.subr.bf16.mxu0 0
        %4606 = vmatpush1.bf16.msra.mxu0 0
        %4607 = vmatprep.subr.bf16.mxu0 0
        %4608 = vmatpush1.bf16.msra.mxu0 0
        %4609 = vmatprep.subr.bf16.mxu0 0
        %4610 = vmatpush1.bf16.msra.mxu0 0
        %4611 = vmatprep.subr.bf16.mxu0 0
        %4612 = vmatpush1.bf16.msra.mxu0 0
        %4613 = vmatprep.subr.bf16.mxu0 0
        %4614 = vmatpush1.bf16.msra.mxu0 0
        %4615 = vmatprep.subr.bf16.mxu0 0
        %4616 = vmatpush1.bf16.msra.mxu0 0
        %4617 = vmatprep.subr.bf16.mxu0 0
        %4618 = vmatpush1.bf16.msra.mxu0 0
        %4619 = vmatprep.subr.bf16.mxu0 0
        %4620 = vmatpush1.bf16.msra.mxu0 0
        %4621 = vmatprep.subr.bf16.mxu0 0
        %4622 = vmatpush1.bf16.msra.mxu0 0
        %4623 = vmatprep.subr.bf16.mxu0 0
        %4624 = vmatpush1.bf16.msra.mxu0 0
        %4625 = vmatprep.subr.bf16.mxu0 0
        %4626 = vmatpush1.bf16.msra.mxu0 0
        %4627 = vmatprep.subr.bf16.mxu0 0
        %4628 = vmatpush1.bf16.msra.mxu0 0
        %4629 = vmatprep.mubr.bf16.mxu0 0
        %4630 = vmatmul.mubr.bf16.gmra.mrb[0].mxu0 %v4595
        %v4631 = vpop.f32.mrb[0].mxu0
        %v4632 = vadd.f32 %v4581, %v4631
        %v4633 = vpop.f32.mrb[0].mxu0
        %v4634 = vadd.f32 %v4581, %v4633
        %v4635 = vpop.f32.mrb[0].mxu0
        %v4636 = vadd.f32 %v4586, %v4635
        %v4637 = vpop.f32.mrb[0].mxu0
        %v4638 = vadd.f32 %v4586, %v4637
        %4639 = vdwg.mxu0
        %4640 = vmatprep.subr.bf16.mxu0 %v4545
        %4641 = vmatpush1.bf16.msra.mxu0 %v4544
        %4642 = vmatprep.subr.bf16.mxu0 %v4561
        %4643 = vmatpush1.bf16.msra.mxu0 %v4560
        %4644 = vmatprep.subr.bf16.mxu0 0
        %4645 = vmatpush1.bf16.msra.mxu0 0
        %4646 = vmatprep.subr.bf16.mxu0 0
        %4647 = vmatpush1.bf16.msra.mxu0 0
        %4648 = vmatprep.subr.bf16.mxu0 0
        %4649 = vmatpush1.bf16.msra.mxu0 0
        %4650 = vmatprep.subr.bf16.mxu0 0
        %4651 = vmatpush1.bf16.msra.mxu0 0
        %4652 = vmatprep.subr.bf16.mxu0 0
        %4653 = vmatpush1.bf16.msra.mxu0 0
        %4654 = vmatprep.subr.bf16.mxu0 0
        %4655 = vmatpush1.bf16.msra.mxu0 0
        %4656 = vmatprep.subr.bf16.mxu0 0
        %4657 = vmatpush1.bf16.msra.mxu0 0
        %4658 = vmatprep.subr.bf16.mxu0 0
        %4659 = vmatpush1.bf16.msra.mxu0 0
        %4660 = vmatprep.subr.bf16.mxu0 0
        %4661 = vmatpush1.bf16.msra.mxu0 0
        %4662 = vmatprep.subr.bf16.mxu0 0
        %4663 = vmatpush1.bf16.msra.mxu0 0
        %4664 = vmatprep.subr.bf16.mxu0 0
        %4665 = vmatpush1.bf16.msra.mxu0 0
        %4666 = vmatprep.subr.bf16.mxu0 0
        %4667 = vmatpush1.bf16.msra.mxu0 0
        %4668 = vmatprep.subr.bf16.mxu0 0
        %4669 = vmatpush1.bf16.msra.mxu0 0
        %4670 = vmatprep.subr.bf16.mxu0 0
        %4671 = vmatpush1.bf16.msra.mxu0 0
        %4672 = vmatprep.mubr.bf16.mxu0 0
        %4673 = vmatmul.mubr.bf16.gmra.mrb[0].mxu0 %v4595
        %v4674 = vpop.f32.mrb[0].mxu0
        %v4675 = vadd.f32 %v4581, %v4674
        %v4676 = vpop.f32.mrb[0].mxu0
        %v4677 = vadd.f32 %v4581, %v4676
        %v4678 = vpop.f32.mrb[0].mxu0
        %v4679 = vadd.f32 %v4586, %v4678
        %v4680 = vpop.f32.mrb[0].mxu0
        %v4681 = vadd.f32 %v4586, %v4680
        %4682 = vdwg.mxu0
        %4683 = vmatprep.subr.bf16.mxu0 %v4547
        %4684 = vmatpush1.bf16.msra.mxu0 %v4546
        %4685 = vmatprep.subr.bf16.mxu0 %v4563
        %4686 = vmatpush1.bf16.msra.mxu0 %v4562
        %4687 = vmatprep.subr.bf16.mxu0 0
        %4688 = vmatpush1.bf16.msra.mxu0 0
        %4689 = vmatprep.subr.bf16.mxu0 0
        %4690 = vmatpush1.bf16.msra.mxu0 0
        %4691 = vmatprep.subr.bf16.mxu0 0
        %4692 = vmatpush1.bf16.msra.mxu0 0
        %4693 = vmatprep.subr.bf16.mxu0 0
        %4694 = vmatpush1.bf16.msra.mxu0 0
        %4695 = vmatprep.subr.bf16.mxu0 0
        %4696 = vmatpush1.bf16.msra.mxu0 0
        %4697 = vmatprep.subr.bf16.mxu0 0
        %4698 = vmatpush1.bf16.msra.mxu0 0
        %4699 = vmatprep.subr.bf16.mxu0 0
        %4700 = vmatpush1.bf16.msra.mxu0 0
        %4701 = vmatprep.subr.bf16.mxu0 0
        %4702 = vmatpush1.bf16.msra.mxu0 0
        %4703 = vmatprep.subr.bf16.mxu0 0
        %4704 = vmatpush1.bf16.msra.mxu0 0
        %4705 = vmatprep.subr.bf16.mxu0 0
        %4706 = vmatpush1.bf16.msra.mxu0 0
        %4707 = vmatprep.subr.bf16.mxu0 0
        %4708 = vmatpush1.bf16.msra.mxu0 0
        %4709 = vmatprep.subr.bf16.mxu0 0
        %4710 = vmatpush1.bf16.msra.mxu0 0
        %4711 = vmatprep.subr.bf16.mxu0 0
        %4712 = vmatpush1.bf16.msra.mxu0 0
        %4713 = vmatprep.subr.bf16.mxu0 0
        %4714 = vmatpush1.bf16.msra.mxu0 0
        %4715 = vmatprep.mubr.bf16.mxu0 0
        %4716 = vmatmul.mubr.bf16.gmra.mrb[0].mxu0 %v4595
        %v4717 = vpop.f32.mrb[0].mxu0
        %v4718 = vadd.f32 %v4581, %v4717
        %v4719 = vpop.f32.mrb[0].mxu0
        %v4720 = vadd.f32 %v4581, %v4719
        %v4721 = vpop.f32.mrb[0].mxu0
        %v4722 = vadd.f32 %v4586, %v4721
        %v4723 = vpop.f32.mrb[0].mxu0
        %v4724 = vadd.f32 %v4586, %v4723
        %4725 = vdwg.mxu0
        %4726 = vmatprep.subr.bf16.mxu0 %v4549
        %4727 = vmatpush1.bf16.msra.mxu0 %v4548
        %4728 = vmatprep.subr.bf16.mxu0 %v4565
        %4729 = vmatpush1.bf16.msra.mxu0 %v4564
        %4730 = vmatprep.subr.bf16.mxu0 0
        %4731 = vmatpush1.bf16.msra.mxu0 0
        %4732 = vmatprep.subr.bf16.mxu0 0
        %4733 = vmatpush1.bf16.msra.mxu0 0
        %4734 = vmatprep.subr.bf16.mxu0 0
        %4735 = vmatpush1.bf16.msra.mxu0 0
        %4736 = vmatprep.subr.bf16.mxu0 0
        %4737 = vmatpush1.bf16.msra.mxu0 0
        %4738 = vmatprep.subr.bf16.mxu0 0
        %4739 = vmatpush1.bf16.msra.mxu0 0
        %4740 = vmatprep.subr.bf16.mxu0 0
        %4741 = vmatpush1.bf16.msra.mxu0 0
        %4742 = vmatprep.subr.bf16.mxu0 0
        %4743 = vmatpush1.bf16.msra.mxu0 0
        %4744 = vmatprep.subr.bf16.mxu0 0
        %4745 = vmatpush1.bf16.msra.mxu0 0
        %4746 = vmatprep.subr.bf16.mxu0 0
        %4747 = vmatpush1.bf16.msra.mxu0 0
        %4748 = vmatprep.subr.bf16.mxu0 0
        %4749 = vmatpush1.bf16.msra.mxu0 0
        %4750 = vmatprep.subr.bf16.mxu0 0
        %4751 = vmatpush1.bf16.msra.mxu0 0
        %4752 = vmatprep.subr.bf16.mxu0 0
        %4753 = vmatpush1.bf16.msra.mxu0 0
        %4754 = vmatprep.subr.bf16.mxu0 0
        %4755 = vmatpush1.bf16.msra.mxu0 0
        %4756 = vmatprep.subr.bf16.mxu0 0
        %4757 = vmatpush1.bf16.msra.mxu0 0
        %4758 = vmatprep.mubr.bf16.mxu0 0
        %4759 = vmatmul.mubr.bf16.gmra.mrb[0].mxu0 %v4595
        %v4760 = vpop.f32.mrb[0].mxu0
        %v4761 = vadd.f32 %v4581, %v4760
        %v4762 = vpop.f32.mrb[0].mxu0
        %v4763 = vadd.f32 %v4581, %v4762
        %v4764 = vpop.f32.mrb[0].mxu0
        %v4765 = vadd.f32 %v4586, %v4764
        %v4766 = vpop.f32.mrb[0].mxu0
        %v4767 = vadd.f32 %v4586, %v4766
        %4768 = vdwg.mxu0
        %4769 = vmatprep.subr.bf16.mxu0 %v4551
        %4770 = vmatpush1.bf16.msra.mxu0 %v4550
        %4771 = vmatprep.subr.bf16.mxu0 %v4567
        %4772 = vmatpush1.bf16.msra.mxu0 %v4566
        %4773 = vmatprep.subr.bf16.mxu0 0
        %4774 = vmatpush1.bf16.msra.mxu0 0
        %4775 = vmatprep.subr.bf16.mxu0 0
        %4776 = vmatpush1.bf16.msra.mxu0 0
        %4777 = vmatprep.subr.bf16.mxu0 0
        %4778 = vmatpush1.bf16.msra.mxu0 0
        %4779 = vmatprep.subr.bf16.mxu0 0
        %4780 = vmatpush1.bf16.msra.mxu0 0
        %4781 = vmatprep.subr.bf16.mxu0 0
        %4782 = vmatpush1.bf16.msra.mxu0 0
        %4783 = vmatprep.subr.bf16.mxu0 0
        %4784 = vmatpush1.bf16.msra.mxu0 0
        %4785 = vmatprep.subr.bf16.mxu0 0
        %4786 = vmatpush1.bf16.msra.mxu0 0
        %4787 = vmatprep.subr.bf16.mxu0 0
        %4788 = vmatpush1.bf16.msra.mxu0 0
        %4789 = vmatprep.subr.bf16.mxu0 0
        %4790 = vmatpush1.bf16.msra.mxu0 0
        %4791 = vmatprep.subr.bf16.mxu0 0
        %4792 = vmatpush1.bf16.msra.mxu0 0
        %4793 = vmatprep.subr.bf16.mxu0 0
        %4794 = vmatpush1.bf16.msra.mxu0 0
        %4795 = vmatprep.subr.bf16.mxu0 0
        %4796 = vmatpush1.bf16.msra.mxu0 0
        %4797 = vmatprep.subr.bf16.mxu0 0
        %4798 = vmatpush1.bf16.msra.mxu0 0
        %4799 = vmatprep.subr.bf16.mxu0 0
        %4800 = vmatpush1.bf16.msra.mxu0 0
        %4801 = vmatprep.mubr.bf16.mxu0 0
        %4802 = vmatmul.mubr.bf16.gmra.mrb[0].mxu0 %v4595
        %v4803 = vpop.f32.mrb[0].mxu0
        %v4804 = vadd.f32 %v4581, %v4803
        %v4805 = vpop.f32.mrb[0].mxu0
        %v4806 = vadd.f32 %v4581, %v4805
        %v4807 = vpop.f32.mrb[0].mxu0
        %v4808 = vadd.f32 %v4586, %v4807
        %v4809 = vpop.f32.mrb[0].mxu0
        %v4810 = vadd.f32 %v4586, %v4809
        %4811 = vdwg.mxu0
        %4812 = vmatprep.subr.bf16.mxu0 %v4553
        %4813 = vmatpush1.bf16.msra.mxu0 %v4552
        %4814 = vmatprep.subr.bf16.mxu0 %v4569
        %4815 = vmatpush1.bf16.msra.mxu0 %v4568
        %4816 = vmatprep.subr.bf16.mxu0 0
        %4817 = vmatpush1.bf16.msra.mxu0 0
        %4818 = vmatprep.subr.bf16.mxu0 0
        %4819 = vmatpush1.bf16.msra.mxu0 0
        %4820 = vmatprep.subr.bf16.mxu0 0
        %4821 = vmatpush1.bf16.msra.mxu0 0
        %4822 = vmatprep.subr.bf16.mxu0 0
        %4823 = vmatpush1.bf16.msra.mxu0 0
        %4824 = vmatprep.subr.bf16.mxu0 0
        %4825 = vmatpush1.bf16.msra.mxu0 0
        %4826 = vmatprep.subr.bf16.mxu0 0
        %4827 = vmatpush1.bf16.msra.mxu0 0
        %4828 = vmatprep.subr.bf16.mxu0 0
        %4829 = vmatpush1.bf16.msra.mxu0 0
        %4830 = vmatprep.subr.bf16.mxu0 0
        %4831 = vmatpush1.bf16.msra.mxu0 0
        %4832 = vmatprep.subr.bf16.mxu0 0
        %4833 = vmatpush1.bf16.msra.mxu0 0
        %4834 = vmatprep.subr.bf16.mxu0 0
        %4835 = vmatpush1.bf16.msra.mxu0 0
        %4836 = vmatprep.subr.bf16.mxu0 0
        %4837 = vmatpush1.bf16.msra.mxu0 0
        %4838 = vmatprep.subr.bf16.mxu0 0
        %4839 = vmatpush1.bf16.msra.mxu0 0
        %4840 = vmatprep.subr.bf16.mxu0 0
        %4841 = vmatpush1.bf16.msra.mxu0 0
        %4842 = vmatprep.subr.bf16.mxu0 0
        %4843 = vmatpush1.bf16.msra.mxu0 0
        %4844 = vmatprep.mubr.bf16.mxu0 0
        %4845 = vmatmul.mubr.bf16.gmra.mrb[0].mxu0 %v4595
        %v4846 = vpop.f32.mrb[0].mxu0
        %v4847 = vadd.f32 %v4581, %v4846
        %v4848 = vpop.f32.mrb[0].mxu0
        %v4849 = vadd.f32 %v4581, %v4848
        %v4850 = vpop.f32.mrb[0].mxu0
        %v4851 = vadd.f32 %v4586, %v4850
        %v4852 = vpop.f32.mrb[0].mxu0
        %v4853 = vadd.f32 %v4586, %v4852
        %4854 = vdwg.mxu0
        %4855 = vmatprep.subr.bf16.mxu0 %v4555
        %4856 = vmatpush1.bf16.msra.mxu0 %v4554
        %4857 = vmatprep.subr.bf16.mxu0 %v4571
        %4858 = vmatpush1.bf16.msra.mxu0 %v4570
        %4859 = vmatprep.subr.bf16.mxu0 0
        %4860 = vmatpush1.bf16.msra.mxu0 0
        %4861 = vmatprep.subr.bf16.mxu0 0
        %4862 = vmatpush1.bf16.msra.mxu0 0
        %4863 = vmatprep.subr.bf16.mxu0 0
        %4864 = vmatpush1.bf16.msra.mxu0 0
        %4865 = vmatprep.subr.bf16.mxu0 0
        %4866 = vmatpush1.bf16.msra.mxu0 0
        %4867 = vmatprep.subr.bf16.mxu0 0
        %4868 = vmatpush1.bf16.msra.mxu0 0
        %4869 = vmatprep.subr.bf16.mxu0 0
        %4870 = vmatpush1.bf16.msra.mxu0 0
        %4871 = vmatprep.subr.bf16.mxu0 0
        %4872 = vmatpush1.bf16.msra.mxu0 0
        %4873 = vmatprep.subr.bf16.mxu0 0
        %4874 = vmatpush1.bf16.msra.mxu0 0
        %4875 = vmatprep.subr.bf16.mxu0 0
        %4876 = vmatpush1.bf16.msra.mxu0 0
        %4877 = vmatprep.subr.bf16.mxu0 0
        %4878 = vmatpush1.bf16.msra.mxu0 0
        %4879 = vmatprep.subr.bf16.mxu0 0
        %4880 = vmatpush1.bf16.msra.mxu0 0
        %4881 = vmatprep.subr.bf16.mxu0 0
        %4882 = vmatpush1.bf16.msra.mxu0 0
        %4883 = vmatprep.subr.bf16.mxu0 0
        %4884 = vmatpush1.bf16.msra.mxu0 0
        %4885 = vmatprep.subr.bf16.mxu0 0
        %4886 = vmatpush1.bf16.msra.mxu0 0
        %4887 = vmatprep.mubr.bf16.mxu0 0
        %4888 = vmatmul.mubr.bf16.gmra.mrb[0].mxu0 %v4595
        %v4889 = vpop.f32.mrb[0].mxu0
        %v4890 = vadd.f32 %v4581, %v4889
        %v4891 = vpop.f32.mrb[0].mxu0
        %v4892 = vadd.f32 %v4581, %v4891
        %v4893 = vpop.f32.mrb[0].mxu0
        %v4894 = vadd.f32 %v4586, %v4893
        %v4895 = vpop.f32.mrb[0].mxu0
        %v4896 = vadd.f32 %v4586, %v4895
        %4897 = vdwg.mxu0
        %4898 = vmatprep.subr.bf16.mxu0 %v4557
        %4899 = vmatpush1.bf16.msra.mxu0 %v4556
        %4900 = vmatprep.subr.bf16.mxu0 %v4573
        %4901 = vmatpush1.bf16.msra.mxu0 %v4572
        %4902 = vmatprep.subr.bf16.mxu0 0
        %4903 = vmatpush1.bf16.msra.mxu0 0
        %4904 = vmatprep.subr.bf16.mxu0 0
        %4905 = vmatpush1.bf16.msra.mxu0 0
        %4906 = vmatprep.subr.bf16.mxu0 0
        %4907 = vmatpush1.bf16.msra.mxu0 0
        %4908 = vmatprep.subr.bf16.mxu0 0
        %4909 = vmatpush1.bf16.msra.mxu0 0
        %4910 = vmatprep.subr.bf16.mxu0 0
        %4911 = vmatpush1.bf16.msra.mxu0 0
        %4912 = vmatprep.subr.bf16.mxu0 0
        %4913 = vmatpush1.bf16.msra.mxu0 0
        %4914 = vmatprep.subr.bf16.mxu0 0
        %4915 = vmatpush1.bf16.msra.mxu0 0
        %4916 = vmatprep.subr.bf16.mxu0 0
        %4917 = vmatpush1.bf16.msra.mxu0 0
        %4918 = vmatprep.subr.bf16.mxu0 0
        %4919 = vmatpush1.bf16.msra.mxu0 0
        %4920 = vmatprep.subr.bf16.mxu0 0
        %4921 = vmatpush1.bf16.msra.mxu0 0
        %4922 = vmatprep.subr.bf16.mxu0 0
        %4923 = vmatpush1.bf16.msra.mxu0 0
        %4924 = vmatprep.subr.bf16.mxu0 0
        %4925 = vmatpush1.bf16.msra.mxu0 0
        %4926 = vmatprep.subr.bf16.mxu0 0
        %4927 = vmatpush1.bf16.msra.mxu0 0
        %4928 = vmatprep.subr.bf16.mxu0 0
        %4929 = vmatpush1.bf16.msra.mxu0 0
        %4930 = vmatprep.mubr.bf16.mxu0 0
        %4931 = vmatmul.mubr.bf16.gmra.mrb[0].mxu0 %v4595
        %v4932 = vpop.f32.mrb[0].mxu0
        %v4933 = vadd.f32 %v4581, %v4932
        %v4934 = vpop.f32.mrb[0].mxu0
        %v4935 = vadd.f32 %v4581, %v4934
        %v4936 = vpop.f32.mrb[0].mxu0
        %v4937 = vadd.f32 %v4586, %v4936
        %v4938 = vpop.f32.mrb[0].mxu0
        %v4939 = vadd.f32 %v4586, %v4938
        %4940 = vdwg.mxu0
        %v4941 = vmax.f32 %v4632, 0.0
        %v4942 = vmax.f32 %v4634, 0.0
        %v4943 = vmax.f32 %v4675, 0.0
        %v4944 = vmax.f32 %v4677, 0.0
        %v4945 = vmax.f32 %v4718, 0.0
        %v4946 = vmax.f32 %v4720, 0.0
        %v4947 = vmax.f32 %v4761, 0.0
        %v4948 = vmax.f32 %v4763, 0.0
        %v4949 = vmax.f32 %v4804, 0.0
        %v4950 = vmax.f32 %v4806, 0.0
        %v4951 = vmax.f32 %v4847, 0.0
        %v4952 = vmax.f32 %v4849, 0.0
        %v4953 = vmax.f32 %v4890, 0.0
        %v4954 = vmax.f32 %v4892, 0.0
        %v4955 = vmax.f32 %v4933, 0.0
        %v4956 = vmax.f32 %v4935, 0.0
        %v4957 = vmax.f32 %v4636, 0.0
        %v4958 = vmax.f32 %v4638, 0.0
        %v4959 = vmax.f32 %v4679, 0.0
        %v4960 = vmax.f32 %v4681, 0.0
        %v4961 = vmax.f32 %v4722, 0.0
        %v4962 = vmax.f32 %v4724, 0.0
        %v4963 = vmax.f32 %v4765, 0.0
        %v4964 = vmax.f32 %v4767, 0.0
        %v4965 = vmax.f32 %v4808, 0.0
        %v4966 = vmax.f32 %v4810, 0.0
        %v4967 = vmax.f32 %v4851, 0.0
        %v4968 = vmax.f32 %v4853, 0.0
        %v4969 = vmax.f32 %v4894, 0.0
        %v4970 = vmax.f32 %v4896, 0.0
        %v4971 = vmax.f32 %v4937, 0.0
        %v4972 = vmax.f32 %v4939, 0.0
        %v4973 = vld [vmem:[%s7] sm:$0x3]
        %v4974 = vpack.c.bf16 %v4957, %v4941
        %v4975 = vpack.c.bf16 %v4958, %v4942
        %v4976 = vpack.c.bf16 %v4959, %v4943
        %v4977 = vpack.c.bf16 %v4960, %v4944
        %v4978 = vpack.c.bf16 %v4961, %v4945
        %v4979 = vpack.c.bf16 %v4962, %v4946
        %v4980 = vpack.c.bf16 %v4963, %v4947
        %v4981 = vpack.c.bf16 %v4964, %v4948
        %v4982 = vpack.c.bf16 %v4965, %v4949
        %v4983 = vpack.c.bf16 %v4966, %v4950
        %v4984 = vpack.c.bf16 %v4967, %v4951
        %v4985 = vpack.c.bf16 %v4968, %v4952
        %v4986 = vpack.c.bf16 %v4969, %v4953
        %v4987 = vpack.c.bf16 %v4970, %v4954
        %v4988 = vpack.c.bf16 %v4971, %v4955
        %v4989 = vpack.c.bf16 %v4972, %v4956
        %v4990 = vld [vmem:[%s8] sm:$0xf]
        %4992 = vset.pattern.permute.xlu0 0
        %4993 = vperm.xlu0 %4992, %v4990
        %v4994 = vpop.permute.xlu0 %4993
        %vm4996 = vcmask 130048
        %v4998 = vsel %vm4996, %v4973, 0
        %5000 = vmatprep.subr.bf16.mxu0 %v4975
        %5001 = vmatpush1.bf16.msra.mxu0 %v4974
        %5002 = vmatprep.subr.bf16.mxu0 0
        %5003 = vmatpush1.bf16.msra.mxu0 0
        %5004 = vmatprep.subr.bf16.mxu0 0
        %5005 = vmatpush1.bf16.msra.mxu0 0
        %5006 = vmatprep.subr.bf16.mxu0 0
        %5007 = vmatpush1.bf16.msra.mxu0 0
        %5008 = vmatprep.subr.bf16.mxu0 0
        %5009 = vmatpush1.bf16.msra.mxu0 0
        %5010 = vmatprep.subr.bf16.mxu0 0
        %5011 = vmatpush1.bf16.msra.mxu0 0
        %5012 = vmatprep.subr.bf16.mxu0 0
        %5013 = vmatpush1.bf16.msra.mxu0 0
        %5014 = vmatprep.subr.bf16.mxu0 0
        %5015 = vmatpush1.bf16.msra.mxu0 0
        %5016 = vmatprep.subr.bf16.mxu0 0
        %5017 = vmatpush1.bf16.msra.mxu0 0
        %5018 = vmatprep.subr.bf16.mxu0 0
        %5019 = vmatpush1.bf16.msra.mxu0 0
        %5020 = vmatprep.subr.bf16.mxu0 0
        %5021 = vmatpush1.bf16.msra.mxu0 0
        %5022 = vmatprep.subr.bf16.mxu0 0
        %5023 = vmatpush1.bf16.msra.mxu0 0
        %5024 = vmatprep.subr.bf16.mxu0 0
        %5025 = vmatpush1.bf16.msra.mxu0 0
        %5026 = vmatprep.subr.bf16.mxu0 0
        %5027 = vmatpush1.bf16.msra.mxu0 0
        %5028 = vmatprep.subr.bf16.mxu0 0
        %5029 = vmatpush1.bf16.msra.mxu0 0
        %5030 = vmatprep.subr.bf16.mxu0 0
        %5031 = vmatpush1.bf16.msra.mxu0 0
        %5032 = vmatprep.mubr.bf16.mxu0 0
        %5033 = vmatmul.mubr.bf16.gmra.mrb[0].mxu0 %v4998
        %v5034 = vpop.f32.mrb[0].mxu0
        %v5035 = vadd.f32 %v4994, %v5034
        %v5036 = vpop.f32.mrb[0].mxu0
        %v5037 = vadd.f32 %v4994, %v5036
        %v5038 = vpop.f32.mrb[0].mxu0
        %v5039 = vpop.f32.mrb[0].mxu0
        %5040 = vdwg.mxu0
        %5041 = vmatprep.subr.bf16.mxu0 %v4977
        %5042 = vmatpush1.bf16.msra.mxu0 %v4976
        %5043 = vmatprep.subr.bf16.mxu0 0
        %5044 = vmatpush1.bf16.msra.mxu0 0
        %5045 = vmatprep.subr.bf16.mxu0 0
        %5046 = vmatpush1.bf16.msra.mxu0 0
        %5047 = vmatprep.subr.bf16.mxu0 0
        %5048 = vmatpush1.bf16.msra.mxu0 0
        %5049 = vmatprep.subr.bf16.mxu0 0
        %5050 = vmatpush1.bf16.msra.mxu0 0
        %5051 = vmatprep.subr.bf16.mxu0 0
        %5052 = vmatpush1.bf16.msra.mxu0 0
        %5053 = vmatprep.subr.bf16.mxu0 0
        %5054 = vmatpush1.bf16.msra.mxu0 0
        %5055 = vmatprep.subr.bf16.mxu0 0
        %5056 = vmatpush1.bf16.msra.mxu0 0
        %5057 = vmatprep.subr.bf16.mxu0 0
        %5058 = vmatpush1.bf16.msra.mxu0 0
        %5059 = vmatprep.subr.bf16.mxu0 0
        %5060 = vmatpush1.bf16.msra.mxu0 0
        %5061 = vmatprep.subr.bf16.mxu0 0
        %5062 = vmatpush1.bf16.msra.mxu0 0
        %5063 = vmatprep.subr.bf16.mxu0 0
        %5064 = vmatpush1.bf16.msra.mxu0 0
        %5065 = vmatprep.subr.bf16.mxu0 0
        %5066 = vmatpush1.bf16.msra.mxu0 0
        %5067 = vmatprep.subr.bf16.mxu0 0
        %5068 = vmatpush1.bf16.msra.mxu0 0
        %5069 = vmatprep.subr.bf16.mxu0 0
        %5070 = vmatpush1.bf16.msra.mxu0 0
        %5071 = vmatprep.subr.bf16.mxu0 0
        %5072 = vmatpush1.bf16.msra.mxu0 0
        %5073 = vmatprep.mubr.bf16.mxu0 0
        %5074 = vmatmul.mubr.bf16.gmra.mrb[0].mxu0 %v4998
        %v5075 = vpop.f32.mrb[0].mxu0
        %v5076 = vadd.f32 %v4994, %v5075
        %v5077 = vpop.f32.mrb[0].mxu0
        %v5078 = vadd.f32 %v4994, %v5077
        %v5079 = vpop.f32.mrb[0].mxu0
        %v5080 = vpop.f32.mrb[0].mxu0
        %5081 = vdwg.mxu0
        %5082 = vmatprep.subr.bf16.mxu0 %v4979
        %5083 = vmatpush1.bf16.msra.mxu0 %v4978
        %5084 = vmatprep.subr.bf16.mxu0 0
        %5085 = vmatpush1.bf16.msra.mxu0 0
        %5086 = vmatprep.subr.bf16.mxu0 0
        %5087 = vmatpush1.bf16.msra.mxu0 0
        %5088 = vmatprep.subr.bf16.mxu0 0
        %5089 = vmatpush1.bf16.msra.mxu0 0
        %5090 = vmatprep.subr.bf16.mxu0 0
        %5091 = vmatpush1.bf16.msra.mxu0 0
        %5092 = vmatprep.subr.bf16.mxu0 0
        %5093 = vmatpush1.bf16.msra.mxu0 0
        %5094 = vmatprep.subr.bf16.mxu0 0
        %5095 = vmatpush1.bf16.msra.mxu0 0
        %5096 = vmatprep.subr.bf16.mxu0 0
        %5097 = vmatpush1.bf16.msra.mxu0 0
        %5098 = vmatprep.subr.bf16.mxu0 0
        %5099 = vmatpush1.bf16.msra.mxu0 0
        %5100 = vmatprep.subr.bf16.mxu0 0
        %5101 = vmatpush1.bf16.msra.mxu0 0
        %5102 = vmatprep.subr.bf16.mxu0 0
        %5103 = vmatpush1.bf16.msra.mxu0 0
        %5104 = vmatprep.subr.bf16.mxu0 0
        %5105 = vmatpush1.bf16.msra.mxu0 0
        %5106 = vmatprep.subr.bf16.mxu0 0
        %5107 = vmatpush1.bf16.msra.mxu0 0
        %5108 = vmatprep.subr.bf16.mxu0 0
        %5109 = vmatpush1.bf16.msra.mxu0 0
        %5110 = vmatprep.subr.bf16.mxu0 0
        %5111 = vmatpush1.bf16.msra.mxu0 0
        %5112 = vmatprep.subr.bf16.mxu0 0
        %5113 = vmatpush1.bf16.msra.mxu0 0
        %5114 = vmatprep.mubr.bf16.mxu0 0
        %5115 = vmatmul.mubr.bf16.gmra.mrb[0].mxu0 %v4998
        %v5116 = vpop.f32.mrb[0].mxu0
        %v5117 = vadd.f32 %v4994, %v5116
        %v5118 = vpop.f32.mrb[0].mxu0
        %v5119 = vadd.f32 %v4994, %v5118
        %v5120 = vpop.f32.mrb[0].mxu0
        %v5121 = vpop.f32.mrb[0].mxu0
        %5122 = vdwg.mxu0
        %5123 = vmatprep.subr.bf16.mxu0 %v4981
        %5124 = vmatpush1.bf16.msra.mxu0 %v4980
        %5125 = vmatprep.subr.bf16.mxu0 0
        %5126 = vmatpush1.bf16.msra.mxu0 0
        %5127 = vmatprep.subr.bf16.mxu0 0
        %5128 = vmatpush1.bf16.msra.mxu0 0
        %5129 = vmatprep.subr.bf16.mxu0 0
        %5130 = vmatpush1.bf16.msra.mxu0 0
        %5131 = vmatprep.subr.bf16.mxu0 0
        %5132 = vmatpush1.bf16.msra.mxu0 0
        %5133 = vmatprep.subr.bf16.mxu0 0
        %5134 = vmatpush1.bf16.msra.mxu0 0
        %5135 = vmatprep.subr.bf16.mxu0 0
        %5136 = vmatpush1.bf16.msra.mxu0 0
        %5137 = vmatprep.subr.bf16.mxu0 0
        %5138 = vmatpush1.bf16.msra.mxu0 0
        %5139 = vmatprep.subr.bf16.mxu0 0
        %5140 = vmatpush1.bf16.msra.mxu0 0
        %5141 = vmatprep.subr.bf16.mxu0 0
        %5142 = vmatpush1.bf16.msra.mxu0 0
        %5143 = vmatprep.subr.bf16.mxu0 0
        %5144 = vmatpush1.bf16.msra.mxu0 0
        %5145 = vmatprep.subr.bf16.mxu0 0
        %5146 = vmatpush1.bf16.msra.mxu0 0
        %5147 = vmatprep.subr.bf16.mxu0 0
        %5148 = vmatpush1.bf16.msra.mxu0 0
        %5149 = vmatprep.subr.bf16.mxu0 0
        %5150 = vmatpush1.bf16.msra.mxu0 0
        %5151 = vmatprep.subr.bf16.mxu0 0
        %5152 = vmatpush1.bf16.msra.mxu0 0
        %5153 = vmatprep.subr.bf16.mxu0 0
        %5154 = vmatpush1.bf16.msra.mxu0 0
        %5155 = vmatprep.mubr.bf16.mxu0 0
        %5156 = vmatmul.mubr.bf16.gmra.mrb[0].mxu0 %v4998
        %v5157 = vpop.f32.mrb[0].mxu0
        %v5158 = vadd.f32 %v4994, %v5157
        %v5159 = vpop.f32.mrb[0].mxu0
        %v5160 = vadd.f32 %v4994, %v5159
        %v5161 = vpop.f32.mrb[0].mxu0
        %v5162 = vpop.f32.mrb[0].mxu0
        %5163 = vdwg.mxu0
        %5164 = vmatprep.subr.bf16.mxu0 %v4983
        %5165 = vmatpush1.bf16.msra.mxu0 %v4982
        %5166 = vmatprep.subr.bf16.mxu0 0
        %5167 = vmatpush1.bf16.msra.mxu0 0
        %5168 = vmatprep.subr.bf16.mxu0 0
        %5169 = vmatpush1.bf16.msra.mxu0 0
        %5170 = vmatprep.subr.bf16.mxu0 0
        %5171 = vmatpush1.bf16.msra.mxu0 0
        %5172 = vmatprep.subr.bf16.mxu0 0
        %5173 = vmatpush1.bf16.msra.mxu0 0
        %5174 = vmatprep.subr.bf16.mxu0 0
        %5175 = vmatpush1.bf16.msra.mxu0 0
        %5176 = vmatprep.subr.bf16.mxu0 0
        %5177 = vmatpush1.bf16.msra.mxu0 0
        %5178 = vmatprep.subr.bf16.mxu0 0
        %5179 = vmatpush1.bf16.msra.mxu0 0
        %5180 = vmatprep.subr.bf16.mxu0 0
        %5181 = vmatpush1.bf16.msra.mxu0 0
        %5182 = vmatprep.subr.bf16.mxu0 0
        %5183 = vmatpush1.bf16.msra.mxu0 0
        %5184 = vmatprep.subr.bf16.mxu0 0
        %5185 = vmatpush1.bf16.msra.mxu0 0
        %5186 = vmatprep.subr.bf16.mxu0 0
        %5187 = vmatpush1.bf16.msra.mxu0 0
        %5188 = vmatprep.subr.bf16.mxu0 0
        %5189 = vmatpush1.bf16.msra.mxu0 0
        %5190 = vmatprep.subr.bf16.mxu0 0
        %5191 = vmatpush1.bf16.msra.mxu0 0
        %5192 = vmatprep.subr.bf16.mxu0 0
        %5193 = vmatpush1.bf16.msra.mxu0 0
        %5194 = vmatprep.subr.bf16.mxu0 0
        %5195 = vmatpush1.bf16.msra.mxu0 0
        %5196 = vmatprep.mubr.bf16.mxu0 0
        %5197 = vmatmul.mubr.bf16.gmra.mrb[0].mxu0 %v4998
        %v5198 = vpop.f32.mrb[0].mxu0
        %v5199 = vadd.f32 %v4994, %v5198
        %v5200 = vpop.f32.mrb[0].mxu0
        %v5201 = vadd.f32 %v4994, %v5200
        %v5202 = vpop.f32.mrb[0].mxu0
        %v5203 = vpop.f32.mrb[0].mxu0
        %5204 = vdwg.mxu0
        %5205 = vmatprep.subr.bf16.mxu0 %v4985
        %5206 = vmatpush1.bf16.msra.mxu0 %v4984
        %5207 = vmatprep.subr.bf16.mxu0 0
        %5208 = vmatpush1.bf16.msra.mxu0 0
        %5209 = vmatprep.subr.bf16.mxu0 0
        %5210 = vmatpush1.bf16.msra.mxu0 0
        %5211 = vmatprep.subr.bf16.mxu0 0
        %5212 = vmatpush1.bf16.msra.mxu0 0
        %5213 = vmatprep.subr.bf16.mxu0 0
        %5214 = vmatpush1.bf16.msra.mxu0 0
        %5215 = vmatprep.subr.bf16.mxu0 0
        %5216 = vmatpush1.bf16.msra.mxu0 0
        %5217 = vmatprep.subr.bf16.mxu0 0
        %5218 = vmatpush1.bf16.msra.mxu0 0
        %5219 = vmatprep.subr.bf16.mxu0 0
        %5220 = vmatpush1.bf16.msra.mxu0 0
        %5221 = vmatprep.subr.bf16.mxu0 0
        %5222 = vmatpush1.bf16.msra.mxu0 0
        %5223 = vmatprep.subr.bf16.mxu0 0
        %5224 = vmatpush1.bf16.msra.mxu0 0
        %5225 = vmatprep.subr.bf16.mxu0 0
        %5226 = vmatpush1.bf16.msra.mxu0 0
        %5227 = vmatprep.subr.bf16.mxu0 0
        %5228 = vmatpush1.bf16.msra.mxu0 0
        %5229 = vmatprep.subr.bf16.mxu0 0
        %5230 = vmatpush1.bf16.msra.mxu0 0
        %5231 = vmatprep.subr.bf16.mxu0 0
        %5232 = vmatpush1.bf16.msra.mxu0 0
        %5233 = vmatprep.subr.bf16.mxu0 0
        %5234 = vmatpush1.bf16.msra.mxu0 0
        %5235 = vmatprep.subr.bf16.mxu0 0
        %5236 = vmatpush1.bf16.msra.mxu0 0
        %5237 = vmatprep.mubr.bf16.mxu0 0
        %5238 = vmatmul.mubr.bf16.gmra.mrb[0].mxu0 %v4998
        %v5239 = vpop.f32.mrb[0].mxu0
        %v5240 = vadd.f32 %v4994, %v5239
        %v5241 = vpop.f32.mrb[0].mxu0
        %v5242 = vadd.f32 %v4994, %v5241
        %v5243 = vpop.f32.mrb[0].mxu0
        %v5244 = vpop.f32.mrb[0].mxu0
        %5245 = vdwg.mxu0
        %5246 = vmatprep.subr.bf16.mxu0 %v4987
        %5247 = vmatpush1.bf16.msra.mxu0 %v4986
        %5248 = vmatprep.subr.bf16.mxu0 0
        %5249 = vmatpush1.bf16.msra.mxu0 0
        %5250 = vmatprep.subr.bf16.mxu0 0
        %5251 = vmatpush1.bf16.msra.mxu0 0
        %5252 = vmatprep.subr.bf16.mxu0 0
        %5253 = vmatpush1.bf16.msra.mxu0 0
        %5254 = vmatprep.subr.bf16.mxu0 0
        %5255 = vmatpush1.bf16.msra.mxu0 0
        %5256 = vmatprep.subr.bf16.mxu0 0
        %5257 = vmatpush1.bf16.msra.mxu0 0
        %5258 = vmatprep.subr.bf16.mxu0 0
        %5259 = vmatpush1.bf16.msra.mxu0 0
        %5260 = vmatprep.subr.bf16.mxu0 0
        %5261 = vmatpush1.bf16.msra.mxu0 0
        %5262 = vmatprep.subr.bf16.mxu0 0
        %5263 = vmatpush1.bf16.msra.mxu0 0
        %5264 = vmatprep.subr.bf16.mxu0 0
        %5265 = vmatpush1.bf16.msra.mxu0 0
        %5266 = vmatprep.subr.bf16.mxu0 0
        %5267 = vmatpush1.bf16.msra.mxu0 0
        %5268 = vmatprep.subr.bf16.mxu0 0
        %5269 = vmatpush1.bf16.msra.mxu0 0
        %5270 = vmatprep.subr.bf16.mxu0 0
        %5271 = vmatpush1.bf16.msra.mxu0 0
        %5272 = vmatprep.subr.bf16.mxu0 0
        %5273 = vmatpush1.bf16.msra.mxu0 0
        %5274 = vmatprep.subr.bf16.mxu0 0
        %5275 = vmatpush1.bf16.msra.mxu0 0
        %5276 = vmatprep.subr.bf16.mxu0 0
        %5277 = vmatpush1.bf16.msra.mxu0 0
        %5278 = vmatprep.mubr.bf16.mxu0 0
        %5279 = vmatmul.mubr.bf16.gmra.mrb[0].mxu0 %v4998
        %v5280 = vpop.f32.mrb[0].mxu0
        %v5281 = vadd.f32 %v4994, %v5280
        %v5282 = vpop.f32.mrb[0].mxu0
        %v5283 = vadd.f32 %v4994, %v5282
        %v5284 = vpop.f32.mrb[0].mxu0
        %v5285 = vpop.f32.mrb[0].mxu0
        %5286 = vdwg.mxu0
        %5287 = vmatprep.subr.bf16.mxu0 %v4989
        %5288 = vmatpush1.bf16.msra.mxu0 %v4988
        %5289 = vmatprep.subr.bf16.mxu0 0
        %5290 = vmatpush1.bf16.msra.mxu0 0
        %5291 = vmatprep.subr.bf16.mxu0 0
        %5292 = vmatpush1.bf16.msra.mxu0 0
        %5293 = vmatprep.subr.bf16.mxu0 0
        %5294 = vmatpush1.bf16.msra.mxu0 0
        %5295 = vmatprep.subr.bf16.mxu0 0
        %5296 = vmatpush1.bf16.msra.mxu0 0
        %5297 = vmatprep.subr.bf16.mxu0 0
        %5298 = vmatpush1.bf16.msra.mxu0 0
        %5299 = vmatprep.subr.bf16.mxu0 0
        %5300 = vmatpush1.bf16.msra.mxu0 0
        %5301 = vmatprep.subr.bf16.mxu0 0
        %5302 = vmatpush1.bf16.msra.mxu0 0
        %5303 = vmatprep.subr.bf16.mxu0 0
        %5304 = vmatpush1.bf16.msra.mxu0 0
        %5305 = vmatprep.subr.bf16.mxu0 0
        %5306 = vmatpush1.bf16.msra.mxu0 0
        %5307 = vmatprep.subr.bf16.mxu0 0
        %5308 = vmatpush1.bf16.msra.mxu0 0
        %5309 = vmatprep.subr.bf16.mxu0 0
        %5310 = vmatpush1.bf16.msra.mxu0 0
        %5311 = vmatprep.subr.bf16.mxu0 0
        %5312 = vmatpush1.bf16.msra.mxu0 0
        %5313 = vmatprep.subr.bf16.mxu0 0
        %5314 = vmatpush1.bf16.msra.mxu0 0
        %5315 = vmatprep.subr.bf16.mxu0 0
        %5316 = vmatpush1.bf16.msra.mxu0 0
        %5317 = vmatprep.subr.bf16.mxu0 0
        %5318 = vmatpush1.bf16.msra.mxu0 0
        %5319 = vmatprep.mubr.bf16.mxu0 0
        %5320 = vmatmul.mubr.bf16.gmra.mrb[0].mxu0 %v4998
        %v5321 = vpop.f32.mrb[0].mxu0
        %v5322 = vadd.f32 %v4994, %v5321
        %v5323 = vpop.f32.mrb[0].mxu0
        %v5324 = vadd.f32 %v4994, %v5323
        %v5325 = vpop.f32.mrb[0].mxu0
        %v5326 = vpop.f32.mrb[0].mxu0
        %5327 = vdwg.mxu0
        %v5328 = vmax.f32 %v5035, 0.0
        %v5329 = vmax.f32 %v5037, 0.0
        %v5330 = vmax.f32 %v5076, 0.0
        %v5331 = vmax.f32 %v5078, 0.0
        %v5332 = vmax.f32 %v5117, 0.0
        %v5333 = vmax.f32 %v5119, 0.0
        %v5334 = vmax.f32 %v5158, 0.0
        %v5335 = vmax.f32 %v5160, 0.0
        %v5336 = vmax.f32 %v5199, 0.0
        %v5337 = vmax.f32 %v5201, 0.0
        %v5338 = vmax.f32 %v5240, 0.0
        %v5339 = vmax.f32 %v5242, 0.0
        %v5340 = vmax.f32 %v5281, 0.0
        %v5341 = vmax.f32 %v5283, 0.0
        %v5342 = vmax.f32 %v5322, 0.0
        %v5343 = vmax.f32 %v5324, 0.0
        %v5344 = vld [vmem:[%s9] sm:$0x1]
        %v5345 = vpack.c.bf16 %v5328, %v5328
        %v5346 = vpack.c.bf16 %v5329, %v5329
        %v5347 = vpack.c.bf16 %v5330, %v5330
        %v5348 = vpack.c.bf16 %v5331, %v5331
        %v5349 = vpack.c.bf16 %v5332, %v5332
        %v5350 = vpack.c.bf16 %v5333, %v5333
        %v5351 = vpack.c.bf16 %v5334, %v5334
        %v5352 = vpack.c.bf16 %v5335, %v5335
        %v5353 = vpack.c.bf16 %v5336, %v5336
        %v5354 = vpack.c.bf16 %v5337, %v5337
        %v5355 = vpack.c.bf16 %v5338, %v5338
        %v5356 = vpack.c.bf16 %v5339, %v5339
        %v5357 = vpack.c.bf16 %v5340, %v5340
        %v5358 = vpack.c.bf16 %v5341, %v5341
        %v5359 = vpack.c.bf16 %v5342, %v5342
        %v5360 = vpack.c.bf16 %v5343, %v5343
        %v5361 = vld [vmem:[#allocation2] sm:$0x1]
        %5363 = vset.pattern.permute.xlu0 0
        %5364 = vperm.xlu0 %5363, %v5361
        %v5365 = vpop.permute.xlu0 %5364
        %v5367 = vlaneseq
        %v5368 = vshrl.u32 %v5367, 7
        %v5369 = vsub.s32 0, %v5368
        %v5370 = vrot.slane %v5365, %v5369
        %vm5371 = vcmask 31744
        %v5373 = vsel %vm5371, %v5344, 0
        %vm5375 = vcmask 1041408
        %v5377 = vsel %vm5375, %v5345, 0
        %v5380 = vsel %vm5375, %v5346, 0
        %v5383 = vsel %vm5375, %v5347, 0
        %v5386 = vsel %vm5375, %v5348, 0
        %v5389 = vsel %vm5375, %v5349, 0
        %v5392 = vsel %vm5375, %v5350, 0
        %v5395 = vsel %vm5375, %v5351, 0
        %v5398 = vsel %vm5375, %v5352, 0
        %v5401 = vsel %vm5375, %v5353, 0
        %v5404 = vsel %vm5375, %v5354, 0
        %v5407 = vsel %vm5375, %v5355, 0
        %v5410 = vsel %vm5375, %v5356, 0
        %v5413 = vsel %vm5375, %v5357, 0
        %v5416 = vsel %vm5375, %v5358, 0
        %v5419 = vsel %vm5375, %v5359, 0
        %v5422 = vsel %vm5375, %v5360, 0
        %5424 = vmatprep.subr.bf16.mxu0 %v5380
        %5425 = vmatpush1.bf16.msra.mxu0 %v5377
        %5426 = vmatprep.subr.bf16.mxu0 0
        %5427 = vmatpush1.bf16.msra.mxu0 0
        %5428 = vmatprep.subr.bf16.mxu0 0
        %5429 = vmatpush1.bf16.msra.mxu0 0
        %5430 = vmatprep.subr.bf16.mxu0 0
        %5431 = vmatpush1.bf16.msra.mxu0 0
        %5432 = vmatprep.subr.bf16.mxu0 0
        %5433 = vmatpush1.bf16.msra.mxu0 0
        %5434 = vmatprep.subr.bf16.mxu0 0
        %5435 = vmatpush1.bf16.msra.mxu0 0
        %5436 = vmatprep.subr.bf16.mxu0 0
        %5437 = vmatpush1.bf16.msra.mxu0 0
        %5438 = vmatprep.subr.bf16.mxu0 0
        %5439 = vmatpush1.bf16.msra.mxu0 0
        %5440 = vmatprep.subr.bf16.mxu0 0
        %5441 = vmatpush1.bf16.msra.mxu0 0
        %5442 = vmatprep.subr.bf16.mxu0 0
        %5443 = vmatpush1.bf16.msra.mxu0 0
        %5444 = vmatprep.subr.bf16.mxu0 0
        %5445 = vmatpush1.bf16.msra.mxu0 0
        %5446 = vmatprep.subr.bf16.mxu0 0
        %5447 = vmatpush1.bf16.msra.mxu0 0
        %5448 = vmatprep.subr.bf16.mxu0 0
        %5449 = vmatpush1.bf16.msra.mxu0 0
        %5450 = vmatprep.subr.bf16.mxu0 0
        %5451 = vmatpush1.bf16.msra.mxu0 0
        %5452 = vmatprep.subr.bf16.mxu0 0
        %5453 = vmatpush1.bf16.msra.mxu0 0
        %5454 = vmatprep.subr.bf16.mxu0 0
        %5455 = vmatpush1.bf16.msra.mxu0 0
        %5456 = vmatprep.mubr.bf16.mxu0 0
        %5457 = vmatmul.mubr.bf16.gmra.mrb[0].mxu0 %v5373
        %v5458 = vpop.f32.mrb[0].mxu0
        %v5459 = vadd.f32 %v5370, %v5458
        %v5460 = vpop.f32.mrb[0].mxu0
        %v5461 = vadd.f32 %v5370, %v5460
        %v5462 = vpop.f32.mrb[0].mxu0
        %v5463 = vpop.f32.mrb[0].mxu0
        %5464 = vdwg.mxu0
        %5465 = vmatprep.subr.bf16.mxu0 %v5386
        %5466 = vmatpush1.bf16.msra.mxu0 %v5383
        %5467 = vmatprep.subr.bf16.mxu0 0
        %5468 = vmatpush1.bf16.msra.mxu0 0
        %5469 = vmatprep.subr.bf16.mxu0 0
        %5470 = vmatpush1.bf16.msra.mxu0 0
        %5471 = vmatprep.subr.bf16.mxu0 0
        %5472 = vmatpush1.bf16.msra.mxu0 0
        %5473 = vmatprep.subr.bf16.mxu0 0
        %5474 = vmatpush1.bf16.msra.mxu0 0
        %5475 = vmatprep.subr.bf16.mxu0 0
        %5476 = vmatpush1.bf16.msra.mxu0 0
        %5477 = vmatprep.subr.bf16.mxu0 0
        %5478 = vmatpush1.bf16.msra.mxu0 0
        %5479 = vmatprep.subr.bf16.mxu0 0
        %5480 = vmatpush1.bf16.msra.mxu0 0
        %5481 = vmatprep.subr.bf16.mxu0 0
        %5482 = vmatpush1.bf16.msra.mxu0 0
        %5483 = vmatprep.subr.bf16.mxu0 0
        %5484 = vmatpush1.bf16.msra.mxu0 0
        %5485 = vmatprep.subr.bf16.mxu0 0
        %5486 = vmatpush1.bf16.msra.mxu0 0
        %5487 = vmatprep.subr.bf16.mxu0 0
        %5488 = vmatpush1.bf16.msra.mxu0 0
        %5489 = vmatprep.subr.bf16.mxu0 0
        %5490 = vmatpush1.bf16.msra.mxu0 0
        %5491 = vmatprep.subr.bf16.mxu0 0
        %5492 = vmatpush1.bf16.msra.mxu0 0
        %5493 = vmatprep.subr.bf16.mxu0 0
        %5494 = vmatpush1.bf16.msra.mxu0 0
        %5495 = vmatprep.subr.bf16.mxu0 0
        %5496 = vmatpush1.bf16.msra.mxu0 0
        %5497 = vmatprep.mubr.bf16.mxu0 0
        %5498 = vmatmul.mubr.bf16.gmra.mrb[0].mxu0 %v5373
        %v5499 = vpop.f32.mrb[0].mxu0
        %v5500 = vadd.f32 %v5370, %v5499
        %v5501 = vpop.f32.mrb[0].mxu0
        %v5502 = vadd.f32 %v5370, %v5501
        %v5503 = vpop.f32.mrb[0].mxu0
        %v5504 = vpop.f32.mrb[0].mxu0
        %5505 = vdwg.mxu0
        %5506 = vmatprep.subr.bf16.mxu0 %v5392
        %5507 = vmatpush1.bf16.msra.mxu0 %v5389
        %5508 = vmatprep.subr.bf16.mxu0 0
        %5509 = vmatpush1.bf16.msra.mxu0 0
        %5510 = vmatprep.subr.bf16.mxu0 0
        %5511 = vmatpush1.bf16.msra.mxu0 0
        %5512 = vmatprep.subr.bf16.mxu0 0
        %5513 = vmatpush1.bf16.msra.mxu0 0
        %5514 = vmatprep.subr.bf16.mxu0 0
        %5515 = vmatpush1.bf16.msra.mxu0 0
        %5516 = vmatprep.subr.bf16.mxu0 0
        %5517 = vmatpush1.bf16.msra.mxu0 0
        %5518 = vmatprep.subr.bf16.mxu0 0
        %5519 = vmatpush1.bf16.msra.mxu0 0
        %5520 = vmatprep.subr.bf16.mxu0 0
        %5521 = vmatpush1.bf16.msra.mxu0 0
        %5522 = vmatprep.subr.bf16.mxu0 0
        %5523 = vmatpush1.bf16.msra.mxu0 0
        %5524 = vmatprep.subr.bf16.mxu0 0
        %5525 = vmatpush1.bf16.msra.mxu0 0
        %5526 = vmatprep.subr.bf16.mxu0 0
        %5527 = vmatpush1.bf16.msra.mxu0 0
        %5528 = vmatprep.subr.bf16.mxu0 0
        %5529 = vmatpush1.bf16.msra.mxu0 0
        %5530 = vmatprep.subr.bf16.mxu0 0
        %5531 = vmatpush1.bf16.msra.mxu0 0
        %5532 = vmatprep.subr.bf16.mxu0 0
        %5533 = vmatpush1.bf16.msra.mxu0 0
        %5534 = vmatprep.subr.bf16.mxu0 0
        %5535 = vmatpush1.bf16.msra.mxu0 0
        %5536 = vmatprep.subr.bf16.mxu0 0
        %5537 = vmatpush1.bf16.msra.mxu0 0
        %5538 = vmatprep.mubr.bf16.mxu0 0
        %5539 = vmatmul.mubr.bf16.gmra.mrb[0].mxu0 %v5373
        %v5540 = vpop.f32.mrb[0].mxu0
        %v5541 = vadd.f32 %v5370, %v5540
        %v5542 = vpop.f32.mrb[0].mxu0
        %v5543 = vadd.f32 %v5370, %v5542
        %v5544 = vpop.f32.mrb[0].mxu0
        %v5545 = vpop.f32.mrb[0].mxu0
        %5546 = vdwg.mxu0
        %5547 = vmatprep.subr.bf16.mxu0 %v5398
        %5548 = vmatpush1.bf16.msra.mxu0 %v5395
        %5549 = vmatprep.subr.bf16.mxu0 0
        %5550 = vmatpush1.bf16.msra.mxu0 0
        %5551 = vmatprep.subr.bf16.mxu0 0
        %5552 = vmatpush1.bf16.msra.mxu0 0
        %5553 = vmatprep.subr.bf16.mxu0 0
        %5554 = vmatpush1.bf16.msra.mxu0 0
        %5555 = vmatprep.subr.bf16.mxu0 0
        %5556 = vmatpush1.bf16.msra.mxu0 0
        %5557 = vmatprep.subr.bf16.mxu0 0
        %5558 = vmatpush1.bf16.msra.mxu0 0
        %5559 = vmatprep.subr.bf16.mxu0 0
        %5560 = vmatpush1.bf16.msra.mxu0 0
        %5561 = vmatprep.subr.bf16.mxu0 0
        %5562 = vmatpush1.bf16.msra.mxu0 0
        %5563 = vmatprep.subr.bf16.mxu0 0
        %5564 = vmatpush1.bf16.msra.mxu0 0
        %5565 = vmatprep.subr.bf16.mxu0 0
        %5566 = vmatpush1.bf16.msra.mxu0 0
        %5567 = vmatprep.subr.bf16.mxu0 0
        %5568 = vmatpush1.bf16.msra.mxu0 0
        %5569 = vmatprep.subr.bf16.mxu0 0
        %5570 = vmatpush1.bf16.msra.mxu0 0
        %5571 = vmatprep.subr.bf16.mxu0 0
        %5572 = vmatpush1.bf16.msra.mxu0 0
        %5573 = vmatprep.subr.bf16.mxu0 0
        %5574 = vmatpush1.bf16.msra.mxu0 0
        %5575 = vmatprep.subr.bf16.mxu0 0
        %5576 = vmatpush1.bf16.msra.mxu0 0
        %5577 = vmatprep.subr.bf16.mxu0 0
        %5578 = vmatpush1.bf16.msra.mxu0 0
        %5579 = vmatprep.mubr.bf16.mxu0 0
        %5580 = vmatmul.mubr.bf16.gmra.mrb[0].mxu0 %v5373
        %v5581 = vpop.f32.mrb[0].mxu0
        %v5582 = vadd.f32 %v5370, %v5581
        %v5583 = vpop.f32.mrb[0].mxu0
        %v5584 = vadd.f32 %v5370, %v5583
        %v5585 = vpop.f32.mrb[0].mxu0
        %v5586 = vpop.f32.mrb[0].mxu0
        %5587 = vdwg.mxu0
        %5588 = vmatprep.subr.bf16.mxu0 %v5404
        %5589 = vmatpush1.bf16.msra.mxu0 %v5401
        %5590 = vmatprep.subr.bf16.mxu0 0
        %5591 = vmatpush1.bf16.msra.mxu0 0
        %5592 = vmatprep.subr.bf16.mxu0 0
        %5593 = vmatpush1.bf16.msra.mxu0 0
        %5594 = vmatprep.subr.bf16.mxu0 0
        %5595 = vmatpush1.bf16.msra.mxu0 0
        %5596 = vmatprep.subr.bf16.mxu0 0
        %5597 = vmatpush1.bf16.msra.mxu0 0
        %5598 = vmatprep.subr.bf16.mxu0 0
        %5599 = vmatpush1.bf16.msra.mxu0 0
        %5600 = vmatprep.subr.bf16.mxu0 0
        %5601 = vmatpush1.bf16.msra.mxu0 0
        %5602 = vmatprep.subr.bf16.mxu0 0
        %5603 = vmatpush1.bf16.msra.mxu0 0
        %5604 = vmatprep.subr.bf16.mxu0 0
        %5605 = vmatpush1.bf16.msra.mxu0 0
        %5606 = vmatprep.subr.bf16.mxu0 0
        %5607 = vmatpush1.bf16.msra.mxu0 0
        %5608 = vmatprep.subr.bf16.mxu0 0
        %5609 = vmatpush1.bf16.msra.mxu0 0
        %5610 = vmatprep.subr.bf16.mxu0 0
        %5611 = vmatpush1.bf16.msra.mxu0 0
        %5612 = vmatprep.subr.bf16.mxu0 0
        %5613 = vmatpush1.bf16.msra.mxu0 0
        %5614 = vmatprep.subr.bf16.mxu0 0
        %5615 = vmatpush1.bf16.msra.mxu0 0
        %5616 = vmatprep.subr.bf16.mxu0 0
        %5617 = vmatpush1.bf16.msra.mxu0 0
        %5618 = vmatprep.subr.bf16.mxu0 0
        %5619 = vmatpush1.bf16.msra.mxu0 0
        %5620 = vmatprep.mubr.bf16.mxu0 0
        %5621 = vmatmul.mubr.bf16.gmra.mrb[0].mxu0 %v5373
        %v5622 = vpop.f32.mrb[0].mxu0
        %v5623 = vadd.f32 %v5370, %v5622
        %v5624 = vpop.f32.mrb[0].mxu0
        %v5625 = vadd.f32 %v5370, %v5624
        %v5626 = vpop.f32.mrb[0].mxu0
        %v5627 = vpop.f32.mrb[0].mxu0
        %5628 = vdwg.mxu0
        %5629 = vmatprep.subr.bf16.mxu0 %v5410
        %5630 = vmatpush1.bf16.msra.mxu0 %v5407
        %5631 = vmatprep.subr.bf16.mxu0 0
        %5632 = vmatpush1.bf16.msra.mxu0 0
        %5633 = vmatprep.subr.bf16.mxu0 0
        %5634 = vmatpush1.bf16.msra.mxu0 0
        %5635 = vmatprep.subr.bf16.mxu0 0
        %5636 = vmatpush1.bf16.msra.mxu0 0
        %5637 = vmatprep.subr.bf16.mxu0 0
        %5638 = vmatpush1.bf16.msra.mxu0 0
        %5639 = vmatprep.subr.bf16.mxu0 0
        %5640 = vmatpush1.bf16.msra.mxu0 0
        %5641 = vmatprep.subr.bf16.mxu0 0
        %5642 = vmatpush1.bf16.msra.mxu0 0
        %5643 = vmatprep.subr.bf16.mxu0 0
        %5644 = vmatpush1.bf16.msra.mxu0 0
        %5645 = vmatprep.subr.bf16.mxu0 0
        %5646 = vmatpush1.bf16.msra.mxu0 0
        %5647 = vmatprep.subr.bf16.mxu0 0
        %5648 = vmatpush1.bf16.msra.mxu0 0
        %5649 = vmatprep.subr.bf16.mxu0 0
        %5650 = vmatpush1.bf16.msra.mxu0 0
        %5651 = vmatprep.subr.bf16.mxu0 0
        %5652 = vmatpush1.bf16.msra.mxu0 0
        %5653 = vmatprep.subr.bf16.mxu0 0
        %5654 = vmatpush1.bf16.msra.mxu0 0
        %5655 = vmatprep.subr.bf16.mxu0 0
        %5656 = vmatpush1.bf16.msra.mxu0 0
        %5657 = vmatprep.subr.bf16.mxu0 0
        %5658 = vmatpush1.bf16.msra.mxu0 0
        %5659 = vmatprep.subr.bf16.mxu0 0
        %5660 = vmatpush1.bf16.msra.mxu0 0
        %5661 = vmatprep.mubr.bf16.mxu0 0
        %5662 = vmatmul.mubr.bf16.gmra.mrb[0].mxu0 %v5373
        %v5663 = vpop.f32.mrb[0].mxu0
        %v5664 = vadd.f32 %v5370, %v5663
        %v5665 = vpop.f32.mrb[0].mxu0
        %v5666 = vadd.f32 %v5370, %v5665
        %v5667 = vpop.f32.mrb[0].mxu0
        %v5668 = vpop.f32.mrb[0].mxu0
        %5669 = vdwg.mxu0
        %5670 = vmatprep.subr.bf16.mxu0 %v5416
        %5671 = vmatpush1.bf16.msra.mxu0 %v5413
        %5672 = vmatprep.subr.bf16.mxu0 0
        %5673 = vmatpush1.bf16.msra.mxu0 0
        %5674 = vmatprep.subr.bf16.mxu0 0
        %5675 = vmatpush1.bf16.msra.mxu0 0
        %5676 = vmatprep.subr.bf16.mxu0 0
        %5677 = vmatpush1.bf16.msra.mxu0 0
        %5678 = vmatprep.subr.bf16.mxu0 0
        %5679 = vmatpush1.bf16.msra.mxu0 0
        %5680 = vmatprep.subr.bf16.mxu0 0
        %5681 = vmatpush1.bf16.msra.mxu0 0
        %5682 = vmatprep.subr.bf16.mxu0 0
        %5683 = vmatpush1.bf16.msra.mxu0 0
        %5684 = vmatprep.subr.bf16.mxu0 0
        %5685 = vmatpush1.bf16.msra.mxu0 0
        %5686 = vmatprep.subr.bf16.mxu0 0
        %5687 = vmatpush1.bf16.msra.mxu0 0
        %5688 = vmatprep.subr.bf16.mxu0 0
        %5689 = vmatpush1.bf16.msra.mxu0 0
        %5690 = vmatprep.subr.bf16.mxu0 0
        %5691 = vmatpush1.bf16.msra.mxu0 0
        %5692 = vmatprep.subr.bf16.mxu0 0
        %5693 = vmatpush1.bf16.msra.mxu0 0
        %5694 = vmatprep.subr.bf16.mxu0 0
        %5695 = vmatpush1.bf16.msra.mxu0 0
        %5696 = vmatprep.subr.bf16.mxu0 0
        %5697 = vmatpush1.bf16.msra.mxu0 0
        %5698 = vmatprep.subr.bf16.mxu0 0
        %5699 = vmatpush1.bf16.msra.mxu0 0
        %5700 = vmatprep.subr.bf16.mxu0 0
        %5701 = vmatpush1.bf16.msra.mxu0 0
        %5702 = vmatprep.mubr.bf16.mxu0 0
        %5703 = vmatmul.mubr.bf16.gmra.mrb[0].mxu0 %v5373
        %v5704 = vpop.f32.mrb[0].mxu0
        %v5705 = vadd.f32 %v5370, %v5704
        %v5706 = vpop.f32.mrb[0].mxu0
        %v5707 = vadd.f32 %v5370, %v5706
        %v5708 = vpop.f32.mrb[0].mxu0
        %v5709 = vpop.f32.mrb[0].mxu0
        %5710 = vdwg.mxu0
        %5711 = vmatprep.subr.bf16.mxu0 %v5422
        %5712 = vmatpush1.bf16.msra.mxu0 %v5419
        %5713 = vmatprep.subr.bf16.mxu0 0
        %5714 = vmatpush1.bf16.msra.mxu0 0
        %5715 = vmatprep.subr.bf16.mxu0 0
        %5716 = vmatpush1.bf16.msra.mxu0 0
        %5717 = vmatprep.subr.bf16.mxu0 0
        %5718 = vmatpush1.bf16.msra.mxu0 0
        %5719 = vmatprep.subr.bf16.mxu0 0
        %5720 = vmatpush1.bf16.msra.mxu0 0
        %5721 = vmatprep.subr.bf16.mxu0 0
        %5722 = vmatpush1.bf16.msra.mxu0 0
        %5723 = vmatprep.subr.bf16.mxu0 0
        %5724 = vmatpush1.bf16.msra.mxu0 0
        %5725 = vmatprep.subr.bf16.mxu0 0
        %5726 = vmatpush1.bf16.msra.mxu0 0
        %5727 = vmatprep.subr.bf16.mxu0 0
        %5728 = vmatpush1.bf16.msra.mxu0 0
        %5729 = vmatprep.subr.bf16.mxu0 0
        %5730 = vmatpush1.bf16.msra.mxu0 0
        %5731 = vmatprep.subr.bf16.mxu0 0
        %5732 = vmatpush1.bf16.msra.mxu0 0
        %5733 = vmatprep.subr.bf16.mxu0 0
        %5734 = vmatpush1.bf16.msra.mxu0 0
        %5735 = vmatprep.subr.bf16.mxu0 0
        %5736 = vmatpush1.bf16.msra.mxu0 0
        %5737 = vmatprep.subr.bf16.mxu0 0
        %5738 = vmatpush1.bf16.msra.mxu0 0
        %5739 = vmatprep.subr.bf16.mxu0 0
        %5740 = vmatpush1.bf16.msra.mxu0 0
        %5741 = vmatprep.subr.bf16.mxu0 0
        %5742 = vmatpush1.bf16.msra.mxu0 0
        %5743 = vmatprep.mubr.bf16.mxu0 0
        %5744 = vmatmul.mubr.bf16.gmra.mrb[0].mxu0 %v5373
        %v5745 = vpop.f32.mrb[0].mxu0
        %v5746 = vadd.f32 %v5370, %v5745
        %v5747 = vpop.f32.mrb[0].mxu0
        %v5748 = vadd.f32 %v5370, %v5747
        %v5749 = vpop.f32.mrb[0].mxu0
        %v5750 = vpop.f32.mrb[0].mxu0
        %5751 = vdwg.mxu0
        %v5768 = vcombine.low %v5459, %v5461
        %v5769 = vcombine.low %v5500, %v5502
        %v5770 = vcombine.low %v5541, %v5543
        %v5771 = vcombine.low %v5582, %v5584
        %v5773 = vunpack.c.l.s4 1966171168
        %v5774 = vunpack.c.0.s8 %v5773
        %v5775 = vlaneseq
        %v5776 = vshrl.u32 %v5775, 7
        %v5777 = vsub.s32 %v5774, %v5776
        %v5778 = vrot.slane %v5768, %v5777
        %v5780 = vunpack.c.l.s4 1966171168
        %v5781 = vunpack.c.0.s8 %v5780
        %v5782 = vlaneseq
        %v5783 = vshrl.u32 %v5782, 7
        %v5784 = vsub.s32 %v5781, %v5783
        %v5785 = vrot.slane %v5769, %v5784
        %v5787 = vunpack.c.l.s4 1966171168
        %v5788 = vunpack.c.0.s8 %v5787
        %v5789 = vlaneseq
        %v5790 = vshrl.u32 %v5789, 7
        %v5791 = vsub.s32 %v5788, %v5790
        %v5792 = vrot.slane %v5770, %v5791
        %v5794 = vunpack.c.l.s4 1966171168
        %v5795 = vunpack.c.0.s8 %v5794
        %v5796 = vlaneseq
        %v5797 = vshrl.u32 %v5796, 7
        %v5798 = vsub.s32 %v5795, %v5797
        %v5799 = vrot.slane %v5771, %v5798
        %v5800 = vcombine.low %v5778, %v5785
        %v5801 = vcombine.low %v5792, %v5799
        %v5803 = vunpack.c.l.s4 1966171168
        %v5804 = vunpack.c.0.s8 %v5803
        %v5805 = vlaneseq
        %v5806 = vshrl.u32 %v5805, 7
        %v5807 = vsub.s32 %v5804, %v5806
        %v5808 = vrot.slane %v5800, %v5807
        %v5810 = vunpack.c.l.s4 1966171168
        %v5811 = vunpack.c.0.s8 %v5810
        %v5812 = vlaneseq
        %v5813 = vshrl.u32 %v5812, 7
        %v5814 = vsub.s32 %v5811, %v5813
        %v5815 = vrot.slane %v5801, %v5814
        %v5816 = vcombine.low %v5808, %v5815
        %v5817 = vcombine.low %v5623, %v5625
        %v5818 = vcombine.low %v5664, %v5666
        %v5819 = vcombine.low %v5705, %v5707
        %v5820 = vcombine.low %v5746, %v5748
        %v5822 = vunpack.c.l.s4 1966171168
        %v5823 = vunpack.c.0.s8 %v5822
        %v5824 = vlaneseq
        %v5825 = vshrl.u32 %v5824, 7
        %v5826 = vsub.s32 %v5823, %v5825
        %v5827 = vrot.slane %v5817, %v5826
        %v5829 = vunpack.c.l.s4 1966171168
        %v5830 = vunpack.c.0.s8 %v5829
        %v5831 = vlaneseq
        %v5832 = vshrl.u32 %v5831, 7
        %v5833 = vsub.s32 %v5830, %v5832
        %v5834 = vrot.slane %v5818, %v5833
        %v5836 = vunpack.c.l.s4 1966171168
        %v5837 = vunpack.c.0.s8 %v5836
        %v5838 = vlaneseq
        %v5839 = vshrl.u32 %v5838, 7
        %v5840 = vsub.s32 %v5837, %v5839
        %v5841 = vrot.slane %v5819, %v5840
        %v5843 = vunpack.c.l.s4 1966171168
        %v5844 = vunpack.c.0.s8 %v5843
        %v5845 = vlaneseq
        %v5846 = vshrl.u32 %v5845, 7
        %v5847 = vsub.s32 %v5844, %v5846
        %v5848 = vrot.slane %v5820, %v5847
        %v5849 = vcombine.low %v5827, %v5834
        %v5850 = vcombine.low %v5841, %v5848
        %v5852 = vunpack.c.l.s4 1966171168
        %v5853 = vunpack.c.0.s8 %v5852
        %v5854 = vlaneseq
        %v5855 = vshrl.u32 %v5854, 7
        %v5856 = vsub.s32 %v5853, %v5855
        %v5857 = vrot.slane %v5849, %v5856
        %v5859 = vunpack.c.l.s4 1966171168
        %v5860 = vunpack.c.0.s8 %v5859
        %v5861 = vlaneseq
        %v5862 = vshrl.u32 %v5861, 7
        %v5863 = vsub.s32 %v5860, %v5862
        %v5864 = vrot.slane %v5850, %v5863
        %v5865 = vcombine.low %v5857, %v5864
        %5868 = vst [vmem:[%s382] sm:$0xff] %v5816
        %5869 = vst [vmem:[%s382 + $0x8] sm:$0xff] %v5865
        %s5870 = sand.u32 %s271, 1
        %s5871 = scalar_lea.sflag [#allocation4], %s5870
        %s5872 = sand.u32 %s271, 1
        %s5873 = smul.addr %s5872, 16
        %s5874 = scalar_lea.vmem [#allocation3], %s5873
        // Predicated region
        $region65: #{tpu_custom_call.1} parent=63 // pred_check
          %p5875 = pneg %p281
        $region66: #{tpu_custom_call.1} parent=63 // pred_check_branch
          %5877 = sbr.rel (%p5875) target = $region68
        $region67: #{tpu_custom_call.1} parent=63 // pred_region
          %s5878 = smul.u32 16, %s27
          %s5880 = ssub.s32 256, 256
          %5881 = vsyncadd %s5871, %s5880
          %s5882 = smul.addr %s5878, 16
          %s5883 = scalar_lea.hbm %s11, %s5882
          %s5885 = sshll.u32 %s5874, 4
          %s5886 = int_to_ptr.vmem [resolvable:$true] %s5885
          %5888 = dma.vmem_to_hbm [thread:$0]  %s5886, 256, %s5883, %s5871
        $region68: #{tpu_custom_call.1} parent=63 // pred_fallthru
          _
      $region64: #{tpu_custom_call.1} parent=5 // pred_fallthru
        _
      %p5889 = scmp.le.s32.totalorder 2, %s22
      // Predicated region
      $region69: #{tpu_custom_call.1} parent=5 // pred_check
        %p5890 = pneg %p5889
      $region70: #{tpu_custom_call.1} parent=5 // pred_check_branch
        %5892 = sbr.rel (%p5890) target = $region72
      $region71: #{tpu_custom_call.1} parent=5 // pred_region
        %s5893 = ssub.s32 %s22, 2
        // Predicated region
        $region73: #{tpu_custom_call.1} parent=71 // pred_check
          %p5894 = pneg %p287
        $region74: #{tpu_custom_call.1} parent=71 // pred_check_branch
          %5896 = sbr.rel (%p5894) target = $region76
        $region75: #{tpu_custom_call.1} parent=71 // pred_region
          %s5897 = sand.u32 %s272, 1
          %s5898 = scalar_lea.sflag [#allocation4], %s5897
          %s5899 = sand.u32 %s272, 1
          %s5900 = smul.addr %s5899, 16
          %s5901 = scalar_lea.vmem [#allocation3], %s5900
          %5902 = dma.done %s5898, 256
        $region76: #{tpu_custom_call.1} parent=71 // pred_fallthru
          _
      $region72: #{tpu_custom_call.1} parent=5 // pred_fallthru
        _
    $region6: #{tpu_custom_call.1} parent=1 // loop_footer
      %s26 = sadd.s32 1, %s22
    $region7: #{tpu_custom_call.1} parent=1 // loop_footer_branch
      %21 = sbr.rel target = $region3
    $region8: #{tpu_custom_call.1} parent=1 // loop_exit
      _
    %5903 = vsyncpa [#allocation4], 1
    %s5904 = scalar_lea.sflag [#allocation4], 1
    %5905 = vsyncpa %s5904, 1

</llo_original>
